<compile_context>
chip_gen: v7x
topology: tpu7x:2x2x1
jax: 0.10.0
libtpu: 0.0.40
codegen_flags: <defaults>
</compile_context>

<pallas_src>
import functools

import jax
import jax.numpy as jnp
from jax.experimental import pallas as pl
from jax.experimental.pallas import tpu as pltpu


def _round_up(x, m):
    return (x + m - 1) // m * m


def _pick_unroll(T):
    for u in (8, 4, 2, 1):
        if T % u == 0:
            return u
    return 1


# ---------------------------------------------------------------------------
# Pallas kernel: one layer's full time recurrence, U timesteps per grid step.
# ---------------------------------------------------------------------------
def _lstm_recurrent_kernel(xg_ref, whh_ref, h0_ref, c0_ref,
                           hs_out_ref, c_last_ref,
                           h_scr, c_scr):
    """grid = (T // U,).  Per grid step (U timesteps, statically unrolled):

    xg_ref:     (U, Bp, 4*Hp)  precomputed x@W_ih^T + b for these timesteps
    whh_ref:    (Hp, 4*Hp)     recurrent weight (resident in VMEM, constant idx)
    h0_ref:     (Bp, Hp)       initial hidden (read at step 0)
    c0_ref:     (Bp, Hp)       initial cell   (read at step 0)
    hs_out_ref: (U, Bp, Hp)    h_t written per timestep (lane-dense, 128-wide)
    c_last_ref: (Bp, Hp)       final cell state (written at last grid step)
    h_scr/c_scr: f32 VMEM scratch carrying the recurrent state across steps.

    Gate order follows PyTorch nn.LSTMCell: i, f, g, o.  Each gate occupies its
    own Hp-wide (128-aligned) block of the 4*Hp gate axis.
    """
    s = pl.program_id(0)
    u_steps = xg_ref.shape[0]
    hp = h_scr.shape[-1]

    @pl.when(s == 0)
    def _():
        h_scr[...] = h0_ref[...].astype(jnp.float32)
        c_scr[...] = c0_ref[...].astype(jnp.float32)

    h = h_scr[...]
    c = c_scr[...]
    for u in range(u_steps):  # static unroll; carries stay in vregs
        gates = xg_ref[u].astype(jnp.float32) + jnp.dot(
            h.astype(whh_ref.dtype), whh_ref[...],
            preferred_element_type=jnp.float32)
        i_g = jax.nn.sigmoid(gates[:, 0 * hp:1 * hp])
        f_g = jax.nn.sigmoid(gates[:, 1 * hp:2 * hp])
        g_g = jnp.tanh(gates[:, 2 * hp:3 * hp])
        o_g = jax.nn.sigmoid(gates[:, 3 * hp:4 * hp])
        c = f_g * c + i_g * g_g
        h = o_g * jnp.tanh(c)
        hs_out_ref[u] = h.astype(hs_out_ref.dtype)

    h_scr[...] = h
    c_scr[...] = c

    @pl.when(s == pl.num_programs(0) - 1)
    def _():
        c_last_ref[...] = c.astype(c_last_ref.dtype)


def _lstm_layer_scan(xg, whh_p, h0_p, c0_p):
    """Run one layer's recurrence over all T steps in a single pallas_call."""
    T, Bp, G = xg.shape
    Hp = G // 4
    dtype = h0_p.dtype
    U = _pick_unroll(T)

    cost = pl.CostEstimate(
        flops=2 * T * Bp * Hp * G,
        transcendentals=5 * T * Bp * Hp,
        bytes_accessed=4 * (xg.size + whh_p.size + h0_p.size + c0_p.size
                            + T * Bp * Hp + Bp * Hp),
    )

    hs, c_last = pl.pallas_call(
        _lstm_recurrent_kernel,
        grid=(T // U,),
        in_specs=[
            pl.BlockSpec((U, Bp, G), lambda s: (s, 0, 0)),   # xg, streamed
            pl.BlockSpec((Hp, G), lambda s: (0, 0)),         # W_hh, resident
            pl.BlockSpec((Bp, Hp), lambda s: (0, 0)),        # h0, resident
            pl.BlockSpec((Bp, Hp), lambda s: (0, 0)),        # c0, resident
        ],
        out_specs=(
            pl.BlockSpec((U, Bp, Hp), lambda s: (s, 0, 0)),  # h_t per step
            pl.BlockSpec((Bp, Hp), lambda s: (0, 0)),        # final c
        ),
        out_shape=(
            jax.ShapeDtypeStruct((T, Bp, Hp), dtype),
            jax.ShapeDtypeStruct((Bp, Hp), dtype),
        ),
        scratch_shapes=[
            pltpu.VMEM((Bp, Hp), jnp.float32),   # h carry
            pltpu.VMEM((Bp, Hp), jnp.float32),   # c carry
        ],
        compiler_params=pltpu.CompilerParams(
            dimension_semantics=("arbitrary",)),
        cost_estimate=cost,
    )(xg, whh_p, h0_p, c0_p)
    return hs, c_last


# ---------------------------------------------------------------------------
# Parameters (PyTorch nn.LSTMCell layout -> padded kernel layout).
# ---------------------------------------------------------------------------
def _gate_pad_cols(w_t, H, Hp):
    """(K, 4H) -> (K, 4*Hp) with gate g placed at columns [g*Hp, g*Hp+H)."""
    out = jnp.zeros((w_t.shape[0], 4 * Hp), w_t.dtype)
    for g in range(4):
        out = out.at[:, g * Hp:g * Hp + H].set(w_t[:, g * H:(g + 1) * H])
    return out


def init_lstm_params(key, input_size, hidden_size, num_layers,
                     dtype=jnp.float32):
    """Uniform(-k, k), k=1/sqrt(H) init (matches nn.LSTMCell shapes).

    Returns (padded_params, raw_params): padded layouts for the kernel, raw
    PyTorch-style weights for the pure-JAX reference check.
    """
    H = hidden_size
    Hp = _round_up(H, 128)
    k = 1.0 / float(hidden_size) ** 0.5
    padded, raw = [], []
    for layer in range(num_layers):
        d_in = input_size if layer == 0 else hidden_size
        key, k1, k2, k3, k4 = jax.random.split(key, 5)
        w_ih = jax.random.uniform(k1, (4 * H, d_in), dtype, -k, k)
        w_hh = jax.random.uniform(k2, (4 * H, H), dtype, -k, k)
        b_ih = jax.random.uniform(k3, (4 * H,), dtype, -k, k)
        b_hh = jax.random.uniform(k4, (4 * H,), dtype, -k, k)
        raw.append({"w_ih": w_ih, "w_hh": w_hh, "b_ih": b_ih, "b_hh": b_hh})

        wih_t = w_ih.T                                        # (d_in, 4H)
        if layer > 0:
            # input of layers > 0 is the lane-padded h of the previous layer
            wih_t = jnp.zeros((Hp, 4 * H), dtype).at[:H, :].set(wih_t)
        wih_p = _gate_pad_cols(wih_t, H, Hp)                  # (K, 4Hp)
        whh_t = jnp.zeros((Hp, 4 * H), dtype).at[:H, :].set(w_hh.T)
        whh_p = _gate_pad_cols(whh_t, H, Hp)                  # (Hp, 4Hp)
        b_p = _gate_pad_cols((b_ih + b_hh).reshape(1, -1), H, Hp)  # (1, 4Hp)
        padded.append({"wih_p": wih_p, "whh_p": whh_p, "b_p": b_p})
    return padded, raw


# ---------------------------------------------------------------------------
# Forward pass (dense / non-packed path of the PyTorch module).
# ---------------------------------------------------------------------------
@functools.partial(jax.jit, static_argnames=("hidden_size", "num_layers"))
def lstm_forward(x, params, *, hidden_size, num_layers, hx=None):
    """x: (B, T, D_in) -> (output (B, T, H), (h_n (L, B, H), c_n (L, B, H)))."""
    B, T, _ = x.shape
    H = hidden_size
    Hp = _round_up(H, 128)
    Bp = _round_up(B, 8)
    dtype = x.dtype

    if hx is None:
        h0 = jnp.zeros((num_layers, B, H), dtype)
        c0 = jnp.zeros((num_layers, B, H), dtype)
    else:
        h0, c0 = hx

    # Time-major, batch-padded input for layer 0: (T, Bp, D_in).
    layer_in = jnp.pad(jnp.transpose(x, (1, 0, 2)),
                       ((0, 0), (0, Bp - B), (0, 0)))

    h_finals, c_finals = [], []
    for layer in range(num_layers):
        p = params[layer]

        # Hoisted input contribution for ALL timesteps (no serial dependence):
        # one (T*Bp, K) x (K, 4Hp) matmul + bias, done outside the recurrence.
        Tt, Bb, K = layer_in.shape
        xg = (jnp.dot(layer_in.reshape(Tt * Bb, K), p["wih_p"],
                      preferred_element_type=jnp.float32)
              + p["b_p"].astype(jnp.float32)).reshape(Tt, Bb, 4 * Hp)

        h0_p = jnp.zeros((Bp, Hp), dtype).at[:B, :H].set(h0[layer])
        c0_p = jnp.zeros((Bp, Hp), dtype).at[:B, :H].set(c0[layer])

        hs, c_last = _lstm_layer_scan(xg, p["whh_p"], h0_p, c0_p)

        h_finals.append(hs[-1, :B, :H])
        c_finals.append(c_last[:B, :H])
        layer_in = hs  # (T, Bp, Hp); padded lanes/rows feed next layer harmlessly

    output = jnp.transpose(layer_in[:, :B, :H], (1, 0, 2))    # (B, T, H)
    return output, (jnp.stack(h_finals, axis=0), jnp.stack(c_finals, axis=0))


# ---------------------------------------------------------------------------
# Pure-JAX reference (mirrors the PyTorch module's dense branch exactly).
# ---------------------------------------------------------------------------
def lstm_reference(x, raw_params, hidden_size, num_layers):
    B, T, _ = x.shape
    H = hidden_size
    h = [jnp.zeros((B, H), x.dtype) for _ in range(num_layers)]
    c = [jnp.zeros((B, H), x.dtype) for _ in range(num_layers)]
    outs = []
    for t in range(T):
        inp = x[:, t, :]
        for l in range(num_layers):
            p = raw_params[l]
            gates = (inp @ p["w_ih"].T + h[l] @ p["w_hh"].T
                     + p["b_ih"] + p["b_hh"])
            i_g = jax.nn.sigmoid(gates[:, 0 * H:1 * H])
            f_g = jax.nn.sigmoid(gates[:, 1 * H:2 * H])
            g_g = jnp.tanh(gates[:, 2 * H:3 * H])
            o_g = jax.nn.sigmoid(gates[:, 3 * H:4 * H])
            c[l] = f_g * c[l] + i_g * g_g
            h[l] = o_g * jnp.tanh(c[l])
            inp = h[l]
        outs.append(h[-1])
    return jnp.stack(outs, axis=1), (jnp.stack(h), jnp.stack(c))


if __name__ == "__main__":
    B, T = 2, 8
    INPUT_SIZE, HIDDEN_SIZE, NUM_LAYERS = 16, 32, 2

    key = jax.random.PRNGKey(0)
    key_x, key_p = jax.random.split(key)
    x = jax.random.normal(key_x, (B, T, INPUT_SIZE), jnp.float32)
    params, raw = init_lstm_params(key_p, INPUT_SIZE, HIDDEN_SIZE, NUM_LAYERS)

    output, (h_n, c_n) = lstm_forward(
        x, params, hidden_size=HIDDEN_SIZE, num_layers=NUM_LAYERS)
    jax.block_until_ready((output, h_n, c_n))

    assert output.shape == (B, T, HIDDEN_SIZE)
    assert h_n.shape == (NUM_LAYERS, B, HIDDEN_SIZE)
    assert c_n.shape == (NUM_LAYERS, B, HIDDEN_SIZE)

    ref_out, (ref_h, ref_c) = lstm_reference(x, raw, HIDDEN_SIZE, NUM_LAYERS)
    assert jnp.allclose(output, ref_out, atol=2e-2, rtol=2e-2)
    assert jnp.allclose(h_n, ref_h, atol=2e-2, rtol=2e-2)
    assert jnp.allclose(c_n, ref_c, atol=2e-2, rtol=2e-2)

    print("KERNEL_OK")
</pallas_src>

<mosaic_0001>
module attributes {stable_mosaic.version = 11 : i64} {
  func.func @_lstm_recurrent_kernel(%arg0: i32, %arg1: memref<8x8x512xf32, #tpu.memory_space<vmem>>, %arg2: memref<128x512xf32, #tpu.memory_space<vmem>>, %arg3: memref<8x128xf32, #tpu.memory_space<vmem>>, %arg4: memref<8x128xf32, #tpu.memory_space<vmem>>, %arg5: memref<8x8x128xf32, #tpu.memory_space<vmem>>, %arg6: memref<8x128xf32, #tpu.memory_space<vmem>>, %arg7: memref<8x128xf32, #tpu.memory_space<vmem>>, %arg8: memref<8x128xf32, #tpu.memory_space<vmem>>) attributes {dimension_semantics = [#tpu.dimension_semantics<arbitrary>], iteration_bounds = array<i64: 1>, scalar_prefetch = 0 : i64, scratch_operands = 2 : i64, tpu.core_type = #tpu.core_type<tc>, window_params = [{transform_indices = @transform_0, window_bounds = array<i64: 8, 8, 512>}, {pipeline_mode = #tpu.pipeline_mode<synchronous>, transform_indices = @transform_1, window_bounds = array<i64: 128, 512>}, {pipeline_mode = #tpu.pipeline_mode<synchronous>, transform_indices = @transform_2, window_bounds = array<i64: 8, 128>}, {pipeline_mode = #tpu.pipeline_mode<synchronous>, transform_indices = @transform_3, window_bounds = array<i64: 8, 128>}, {transform_indices = @transform_4, window_bounds = array<i64: 8, 8, 128>}, {pipeline_mode = #tpu.pipeline_mode<synchronous>, transform_indices = @transform_5, window_bounds = array<i64: 8, 128>}]} {
    %c0_i32 = arith.constant 0 : i32
    %0 = arith.cmpi eq, %arg0, %c0_i32 : i32
    %1 = arith.extui %0 : i1 to i32
    %c0_i32_0 = arith.constant 0 : i32
    %2 = arith.cmpi ne, %1, %c0_i32_0 : i32
    scf.if %2 {
      %c0_98 = arith.constant 0 : index
      %c0_99 = arith.constant 0 : index
      %274 = vector.load %arg3[%c0_98, %c0_99] : memref<8x128xf32, #tpu.memory_space<vmem>>, vector<8x128xf32>
      %c0_100 = arith.constant 0 : index
      %c0_101 = arith.constant 0 : index
      %275 = vector.load %arg7[%c0_100, %c0_101] : memref<8x128xf32, #tpu.memory_space<vmem>>, vector<8x128xf32>
      tpu.vector_store %arg7[%c0_100, %c0_101], %274 {strides = array<i32>} : memref<8x128xf32, #tpu.memory_space<vmem>>, vector<8x128xf32>,
      %c0_102 = arith.constant 0 : index
      %c0_103 = arith.constant 0 : index
      %276 = vector.load %arg4[%c0_102, %c0_103] : memref<8x128xf32, #tpu.memory_space<vmem>>, vector<8x128xf32>
      %c0_104 = arith.constant 0 : index
      %c0_105 = arith.constant 0 : index
      %277 = vector.load %arg8[%c0_104, %c0_105] : memref<8x128xf32, #tpu.memory_space<vmem>>, vector<8x128xf32>
      tpu.vector_store %arg8[%c0_104, %c0_105], %276 {strides = array<i32>} : memref<8x128xf32, #tpu.memory_space<vmem>>, vector<8x128xf32>,
    } else {
    }
    %c0 = arith.constant 0 : index
    %c0_1 = arith.constant 0 : index
    %3 = vector.load %arg7[%c0, %c0_1] : memref<8x128xf32, #tpu.memory_space<vmem>>, vector<8x128xf32>
    %c0_2 = arith.constant 0 : index
    %c0_3 = arith.constant 0 : index
    %4 = vector.load %arg8[%c0_2, %c0_3] : memref<8x128xf32, #tpu.memory_space<vmem>>, vector<8x128xf32>
    %c0_4 = arith.constant 0 : index
    %c0_5 = arith.constant 0 : index
    %c0_6 = arith.constant 0 : index
    %5 = vector.load %arg1[%c0_4, %c0_5, %c0_6] : memref<8x8x512xf32, #tpu.memory_space<vmem>>, vector<1x8x512xf32>
    %6 = vector.shape_cast %5 : vector<1x8x512xf32> to vector<8x512xf32>
    %c0_7 = arith.constant 0 : index
    %c0_8 = arith.constant 0 : index
    %7 = vector.load %arg2[%c0_7, %c0_8] : memref<128x512xf32, #tpu.memory_space<vmem>>, vector<128x512xf32>
    %cst = arith.constant dense<0.000000e+00> : vector<8x512xf32>
    %8 = tpu.matmul %3, %7, %cst {dimension_numbers = #tpu.dot_dimension_numbers<[1], [0], [0], [1], [0, 0, 1, 1], [], []>} : vector<8x128xf32>, vector<128x512xf32>, vector<8x512xf32> -> vector<8x512xf32>
    %9 = arith.addf %6, %8 : vector<8x512xf32>
    %10 = vector.extract_strided_slice %9 {offsets = [0, 0], sizes = [8, 128], strides = [1, 1]} : vector<8x512xf32> to vector<8x128xf32>
    %11 = arith.negf %10 : vector<8x128xf32>
    %12 = math.exp %11 : vector<8x128xf32>
    %cst_9 = arith.constant 1.000000e+00 : f32
    %13 = vector.broadcast %cst_9 : f32 to vector<8x128xf32>
    %14 = arith.addf %13, %12 : vector<8x128xf32>
    %15 = arith.divf %13, %14 : vector<8x128xf32>
    %16 = vector.extract_strided_slice %9 {offsets = [0, 128], sizes = [8, 128], strides = [1, 1]} : vector<8x512xf32> to vector<8x128xf32>
    %17 = arith.negf %16 : vector<8x128xf32>
    %18 = math.exp %17 : vector<8x128xf32>
    %cst_10 = arith.constant 1.000000e+00 : f32
    %19 = vector.broadcast %cst_10 : f32 to vector<8x128xf32>
    %20 = arith.addf %19, %18 : vector<8x128xf32>
    %21 = arith.divf %19, %20 : vector<8x128xf32>
    %22 = vector.extract_strided_slice %9 {offsets = [0, 256], sizes = [8, 128], strides = [1, 1]} : vector<8x512xf32> to vector<8x128xf32>
    %23 = math.tanh %22 : vector<8x128xf32>
    %24 = vector.extract_strided_slice %9 {offsets = [0, 384], sizes = [8, 128], strides = [1, 1]} : vector<8x512xf32> to vector<8x128xf32>
    %25 = arith.negf %24 : vector<8x128xf32>
    %26 = math.exp %25 : vector<8x128xf32>
    %cst_11 = arith.constant 1.000000e+00 : f32
    %27 = vector.broadcast %cst_11 : f32 to vector<8x128xf32>
    %28 = arith.addf %27, %26 : vector<8x128xf32>
    %29 = arith.divf %27, %28 : vector<8x128xf32>
    %30 = arith.mulf %21, %4 : vector<8x128xf32>
    %31 = arith.mulf %15, %23 : vector<8x128xf32>
    %32 = arith.addf %30, %31 : vector<8x128xf32>
    %33 = math.tanh %32 : vector<8x128xf32>
    %34 = arith.mulf %29, %33 : vector<8x128xf32>
    %c0_12 = arith.constant 0 : index
    %c0_13 = arith.constant 0 : index
    %c0_14 = arith.constant 0 : index
    %35 = vector.load %arg5[%c0_12, %c0_13, %c0_14] : memref<8x8x128xf32, #tpu.memory_space<vmem>>, vector<1x8x128xf32>
    %36 = vector.shape_cast %35 : vector<1x8x128xf32> to vector<8x128xf32>
    %37 = vector.shape_cast %34 : vector<8x128xf32> to vector<1x8x128xf32>
    tpu.vector_store %arg5[%c0_12, %c0_13, %c0_14], %37 {strides = array<i32>} : memref<8x8x128xf32, #tpu.memory_space<vmem>>, vector<1x8x128xf32>,
    %c1 = arith.constant 1 : index
    %c0_15 = arith.constant 0 : index
    %c0_16 = arith.constant 0 : index
    %38 = vector.load %arg1[%c1, %c0_15, %c0_16] : memref<8x8x512xf32, #tpu.memory_space<vmem>>, vector<1x8x512xf32>
    %39 = vector.shape_cast %38 : vector<1x8x512xf32> to vector<8x512xf32>
    %c0_17 = arith.constant 0 : index
    %c0_18 = arith.constant 0 : index
    %40 = vector.load %arg2[%c0_17, %c0_18] : memref<128x512xf32, #tpu.memory_space<vmem>>, vector<128x512xf32>
    %cst_19 = arith.constant dense<0.000000e+00> : vector<8x512xf32>
    %41 = tpu.matmul %34, %40, %cst_19 {dimension_numbers = #tpu.dot_dimension_numbers<[1], [0], [0], [1], [0, 0, 1, 1], [], []>} : vector<8x128xf32>, vector<128x512xf32>, vector<8x512xf32> -> vector<8x512xf32>
    %42 = arith.addf %39, %41 : vector<8x512xf32>
    %43 = vector.extract_strided_slice %42 {offsets = [0, 0], sizes = [8, 128], strides = [1, 1]} : vector<8x512xf32> to vector<8x128xf32>
    %44 = arith.negf %43 : vector<8x128xf32>
    %45 = math.exp %44 : vector<8x128xf32>
    %cst_20 = arith.constant 1.000000e+00 : f32
    %46 = vector.broadcast %cst_20 : f32 to vector<8x128xf32>
    %47 = arith.addf %46, %45 : vector<8x128xf32>
    %48 = arith.divf %46, %47 : vector<8x128xf32>
    %49 = vector.extract_strided_slice %42 {offsets = [0, 128], sizes = [8, 128], strides = [1, 1]} : vector<8x512xf32> to vector<8x128xf32>
    %50 = arith.negf %49 : vector<8x128xf32>
    %51 = math.exp %50 : vector<8x128xf32>
    %cst_21 = arith.constant 1.000000e+00 : f32
    %52 = vector.broadcast %cst_21 : f32 to vector<8x128xf32>
    %53 = arith.addf %52, %51 : vector<8x128xf32>
    %54 = arith.divf %52, %53 : vector<8x128xf32>
    %55 = vector.extract_strided_slice %42 {offsets = [0, 256], sizes = [8, 128], strides = [1, 1]} : vector<8x512xf32> to vector<8x128xf32>
    %56 = math.tanh %55 : vector<8x128xf32>
    %57 = vector.extract_strided_slice %42 {offsets = [0, 384], sizes = [8, 128], strides = [1, 1]} : vector<8x512xf32> to vector<8x128xf32>
    %58 = arith.negf %57 : vector<8x128xf32>
    %59 = math.exp %58 : vector<8x128xf32>
    %cst_22 = arith.constant 1.000000e+00 : f32
    %60 = vector.broadcast %cst_22 : f32 to vector<8x128xf32>
    %61 = arith.addf %60, %59 : vector<8x128xf32>
    %62 = arith.divf %60, %61 : vector<8x128xf32>
    %63 = arith.mulf %54, %32 : vector<8x128xf32>
    %64 = arith.mulf %48, %56 : vector<8x128xf32>
    %65 = arith.addf %63, %64 : vector<8x128xf32>
    %66 = math.tanh %65 : vector<8x128xf32>
    %67 = arith.mulf %62, %66 : vector<8x128xf32>
    %c1_23 = arith.constant 1 : index
    %c0_24 = arith.constant 0 : index
    %c0_25 = arith.constant 0 : index
    %68 = vector.load %arg5[%c1_23, %c0_24, %c0_25] : memref<8x8x128xf32, #tpu.memory_space<vmem>>, vector<1x8x128xf32>
    %69 = vector.shape_cast %68 : vector<1x8x128xf32> to vector<8x128xf32>
    %70 = vector.shape_cast %67 : vector<8x128xf32> to vector<1x8x128xf32>
    tpu.vector_store %arg5[%c1_23, %c0_24, %c0_25], %70 {strides = array<i32>} : memref<8x8x128xf32, #tpu.memory_space<vmem>>, vector<1x8x128xf32>,
    %c2 = arith.constant 2 : index
    %c0_26 = arith.constant 0 : index
    %c0_27 = arith.constant 0 : index
    %71 = vector.load %arg1[%c2, %c0_26, %c0_27] : memref<8x8x512xf32, #tpu.memory_space<vmem>>, vector<1x8x512xf32>
    %72 = vector.shape_cast %71 : vector<1x8x512xf32> to vector<8x512xf32>
    %c0_28 = arith.constant 0 : index
    %c0_29 = arith.constant 0 : index
    %73 = vector.load %arg2[%c0_28, %c0_29] : memref<128x512xf32, #tpu.memory_space<vmem>>, vector<128x512xf32>
    %cst_30 = arith.constant dense<0.000000e+00> : vector<8x512xf32>
    %74 = tpu.matmul %67, %73, %cst_30 {dimension_numbers = #tpu.dot_dimension_numbers<[1], [0], [0], [1], [0, 0, 1, 1], [], []>} : vector<8x128xf32>, vector<128x512xf32>, vector<8x512xf32> -> vector<8x512xf32>
    %75 = arith.addf %72, %74 : vector<8x512xf32>
    %76 = vector.extract_strided_slice %75 {offsets = [0, 0], sizes = [8, 128], strides = [1, 1]} : vector<8x512xf32> to vector<8x128xf32>
    %77 = arith.negf %76 : vector<8x128xf32>
    %78 = math.exp %77 : vector<8x128xf32>
    %cst_31 = arith.constant 1.000000e+00 : f32
    %79 = vector.broadcast %cst_31 : f32 to vector<8x128xf32>
    %80 = arith.addf %79, %78 : vector<8x128xf32>
    %81 = arith.divf %79, %80 : vector<8x128xf32>
    %82 = vector.extract_strided_slice %75 {offsets = [0, 128], sizes = [8, 128], strides = [1, 1]} : vector<8x512xf32> to vector<8x128xf32>
    %83 = arith.negf %82 : vector<8x128xf32>
    %84 = math.exp %83 : vector<8x128xf32>
    %cst_32 = arith.constant 1.000000e+00 : f32
    %85 = vector.broadcast %cst_32 : f32 to vector<8x128xf32>
    %86 = arith.addf %85, %84 : vector<8x128xf32>
    %87 = arith.divf %85, %86 : vector<8x128xf32>
    %88 = vector.extract_strided_slice %75 {offsets = [0, 256], sizes = [8, 128], strides = [1, 1]} : vector<8x512xf32> to vector<8x128xf32>
    %89 = math.tanh %88 : vector<8x128xf32>
    %90 = vector.extract_strided_slice %75 {offsets = [0, 384], sizes = [8, 128], strides = [1, 1]} : vector<8x512xf32> to vector<8x128xf32>
    %91 = arith.negf %90 : vector<8x128xf32>
    %92 = math.exp %91 : vector<8x128xf32>
    %cst_33 = arith.constant 1.000000e+00 : f32
    %93 = vector.broadcast %cst_33 : f32 to vector<8x128xf32>
    %94 = arith.addf %93, %92 : vector<8x128xf32>
    %95 = arith.divf %93, %94 : vector<8x128xf32>
    %96 = arith.mulf %87, %65 : vector<8x128xf32>
    %97 = arith.mulf %81, %89 : vector<8x128xf32>
    %98 = arith.addf %96, %97 : vector<8x128xf32>
    %99 = math.tanh %98 : vector<8x128xf32>
    %100 = arith.mulf %95, %99 : vector<8x128xf32>
    %c2_34 = arith.constant 2 : index
    %c0_35 = arith.constant 0 : index
    %c0_36 = arith.constant 0 : index
    %101 = vector.load %arg5[%c2_34, %c0_35, %c0_36] : memref<8x8x128xf32, #tpu.memory_space<vmem>>, vector<1x8x128xf32>
    %102 = vector.shape_cast %101 : vector<1x8x128xf32> to vector<8x128xf32>
    %103 = vector.shape_cast %100 : vector<8x128xf32> to vector<1x8x128xf32>
    tpu.vector_store %arg5[%c2_34, %c0_35, %c0_36], %103 {strides = array<i32>} : memref<8x8x128xf32, #tpu.memory_space<vmem>>, vector<1x8x128xf32>,
    %c3 = arith.constant 3 : index
    %c0_37 = arith.constant 0 : index
    %c0_38 = arith.constant 0 : index
    %104 = vector.load %arg1[%c3, %c0_37, %c0_38] : memref<8x8x512xf32, #tpu.memory_space<vmem>>, vector<1x8x512xf32>
    %105 = vector.shape_cast %104 : vector<1x8x512xf32> to vector<8x512xf32>
    %c0_39 = arith.constant 0 : index
    %c0_40 = arith.constant 0 : index
    %106 = vector.load %arg2[%c0_39, %c0_40] : memref<128x512xf32, #tpu.memory_space<vmem>>, vector<128x512xf32>
    %cst_41 = arith.constant dense<0.000000e+00> : vector<8x512xf32>
    %107 = tpu.matmul %100, %106, %cst_41 {dimension_numbers = #tpu.dot_dimension_numbers<[1], [0], [0], [1], [0, 0, 1, 1], [], []>} : vector<8x128xf32>, vector<128x512xf32>, vector<8x512xf32> -> vector<8x512xf32>
    %108 = arith.addf %105, %107 : vector<8x512xf32>
    %109 = vector.extract_strided_slice %108 {offsets = [0, 0], sizes = [8, 128], strides = [1, 1]} : vector<8x512xf32> to vector<8x128xf32>
    %110 = arith.negf %109 : vector<8x128xf32>
    %111 = math.exp %110 : vector<8x128xf32>
    %cst_42 = arith.constant 1.000000e+00 : f32
    %112 = vector.broadcast %cst_42 : f32 to vector<8x128xf32>
    %113 = arith.addf %112, %111 : vector<8x128xf32>
    %114 = arith.divf %112, %113 : vector<8x128xf32>
    %115 = vector.extract_strided_slice %108 {offsets = [0, 128], sizes = [8, 128], strides = [1, 1]} : vector<8x512xf32> to vector<8x128xf32>
    %116 = arith.negf %115 : vector<8x128xf32>
    %117 = math.exp %116 : vector<8x128xf32>
    %cst_43 = arith.constant 1.000000e+00 : f32
    %118 = vector.broadcast %cst_43 : f32 to vector<8x128xf32>
    %119 = arith.addf %118, %117 : vector<8x128xf32>
    %120 = arith.divf %118, %119 : vector<8x128xf32>
    %121 = vector.extract_strided_slice %108 {offsets = [0, 256], sizes = [8, 128], strides = [1, 1]} : vector<8x512xf32> to vector<8x128xf32>
    %122 = math.tanh %121 : vector<8x128xf32>
    %123 = vector.extract_strided_slice %108 {offsets = [0, 384], sizes = [8, 128], strides = [1, 1]} : vector<8x512xf32> to vector<8x128xf32>
    %124 = arith.negf %123 : vector<8x128xf32>
    %125 = math.exp %124 : vector<8x128xf32>
    %cst_44 = arith.constant 1.000000e+00 : f32
    %126 = vector.broadcast %cst_44 : f32 to vector<8x128xf32>
    %127 = arith.addf %126, %125 : vector<8x128xf32>
    %128 = arith.divf %126, %127 : vector<8x128xf32>
    %129 = arith.mulf %120, %98 : vector<8x128xf32>
    %130 = arith.mulf %114, %122 : vector<8x128xf32>
    %131 = arith.addf %129, %130 : vector<8x128xf32>
    %132 = math.tanh %131 : vector<8x128xf32>
    %133 = arith.mulf %128, %132 : vector<8x128xf32>
    %c3_45 = arith.constant 3 : index
    %c0_46 = arith.constant 0 : index
    %c0_47 = arith.constant 0 : index
    %134 = vector.load %arg5[%c3_45, %c0_46, %c0_47] : memref<8x8x128xf32, #tpu.memory_space<vmem>>, vector<1x8x128xf32>
    %135 = vector.shape_cast %134 : vector<1x8x128xf32> to vector<8x128xf32>
    %136 = vector.shape_cast %133 : vector<8x128xf32> to vector<1x8x128xf32>
    tpu.vector_store %arg5[%c3_45, %c0_46, %c0_47], %136 {strides = array<i32>} : memref<8x8x128xf32, #tpu.memory_space<vmem>>, vector<1x8x128xf32>,
    %c4 = arith.constant 4 : index
    %c0_48 = arith.constant 0 : index
    %c0_49 = arith.constant 0 : index
    %137 = vector.load %arg1[%c4, %c0_48, %c0_49] : memref<8x8x512xf32, #tpu.memory_space<vmem>>, vector<1x8x512xf32>
    %138 = vector.shape_cast %137 : vector<1x8x512xf32> to vector<8x512xf32>
    %c0_50 = arith.constant 0 : index
    %c0_51 = arith.constant 0 : index
    %139 = vector.load %arg2[%c0_50, %c0_51] : memref<128x512xf32, #tpu.memory_space<vmem>>, vector<128x512xf32>
    %cst_52 = arith.constant dense<0.000000e+00> : vector<8x512xf32>
    %140 = tpu.matmul %133, %139, %cst_52 {dimension_numbers = #tpu.dot_dimension_numbers<[1], [0], [0], [1], [0, 0, 1, 1], [], []>} : vector<8x128xf32>, vector<128x512xf32>, vector<8x512xf32> -> vector<8x512xf32>
    %141 = arith.addf %138, %140 : vector<8x512xf32>
    %142 = vector.extract_strided_slice %141 {offsets = [0, 0], sizes = [8, 128], strides = [1, 1]} : vector<8x512xf32> to vector<8x128xf32>
    %143 = arith.negf %142 : vector<8x128xf32>
    %144 = math.exp %143 : vector<8x128xf32>
    %cst_53 = arith.constant 1.000000e+00 : f32
    %145 = vector.broadcast %cst_53 : f32 to vector<8x128xf32>
    %146 = arith.addf %145, %144 : vector<8x128xf32>
    %147 = arith.divf %145, %146 : vector<8x128xf32>
    %148 = vector.extract_strided_slice %141 {offsets = [0, 128], sizes = [8, 128], strides = [1, 1]} : vector<8x512xf32> to vector<8x128xf32>
    %149 = arith.negf %148 : vector<8x128xf32>
    %150 = math.exp %149 : vector<8x128xf32>
    %cst_54 = arith.constant 1.000000e+00 : f32
    %151 = vector.broadcast %cst_54 : f32 to vector<8x128xf32>
    %152 = arith.addf %151, %150 : vector<8x128xf32>
    %153 = arith.divf %151, %152 : vector<8x128xf32>
    %154 = vector.extract_strided_slice %141 {offsets = [0, 256], sizes = [8, 128], strides = [1, 1]} : vector<8x512xf32> to vector<8x128xf32>
    %155 = math.tanh %154 : vector<8x128xf32>
    %156 = vector.extract_strided_slice %141 {offsets = [0, 384], sizes = [8, 128], strides = [1, 1]} : vector<8x512xf32> to vector<8x128xf32>
    %157 = arith.negf %156 : vector<8x128xf32>
    %158 = math.exp %157 : vector<8x128xf32>
    %cst_55 = arith.constant 1.000000e+00 : f32
    %159 = vector.broadcast %cst_55 : f32 to vector<8x128xf32>
    %160 = arith.addf %159, %158 : vector<8x128xf32>
    %161 = arith.divf %159, %160 : vector<8x128xf32>
    %162 = arith.mulf %153, %131 : vector<8x128xf32>
    %163 = arith.mulf %147, %155 : vector<8x128xf32>
    %164 = arith.addf %162, %163 : vector<8x128xf32>
    %165 = math.tanh %164 : vector<8x128xf32>
    %166 = arith.mulf %161, %165 : vector<8x128xf32>
    %c4_56 = arith.constant 4 : index
    %c0_57 = arith.constant 0 : index
    %c0_58 = arith.constant 0 : index
    %167 = vector.load %arg5[%c4_56, %c0_57, %c0_58] : memref<8x8x128xf32, #tpu.memory_space<vmem>>, vector<1x8x128xf32>
    %168 = vector.shape_cast %167 : vector<1x8x128xf32> to vector<8x128xf32>
    %169 = vector.shape_cast %166 : vector<8x128xf32> to vector<1x8x128xf32>
    tpu.vector_store %arg5[%c4_56, %c0_57, %c0_58], %169 {strides = array<i32>} : memref<8x8x128xf32, #tpu.memory_space<vmem>>, vector<1x8x128xf32>,
    %c5 = arith.constant 5 : index
    %c0_59 = arith.constant 0 : index
    %c0_60 = arith.constant 0 : index
    %170 = vector.load %arg1[%c5, %c0_59, %c0_60] : memref<8x8x512xf32, #tpu.memory_space<vmem>>, vector<1x8x512xf32>
    %171 = vector.shape_cast %170 : vector<1x8x512xf32> to vector<8x512xf32>
    %c0_61 = arith.constant 0 : index
    %c0_62 = arith.constant 0 : index
    %172 = vector.load %arg2[%c0_61, %c0_62] : memref<128x512xf32, #tpu.memory_space<vmem>>, vector<128x512xf32>
    %cst_63 = arith.constant dense<0.000000e+00> : vector<8x512xf32>
    %173 = tpu.matmul %166, %172, %cst_63 {dimension_numbers = #tpu.dot_dimension_numbers<[1], [0], [0], [1], [0, 0, 1, 1], [], []>} : vector<8x128xf32>, vector<128x512xf32>, vector<8x512xf32> -> vector<8x512xf32>
    %174 = arith.addf %171, %173 : vector<8x512xf32>
    %175 = vector.extract_strided_slice %174 {offsets = [0, 0], sizes = [8, 128], strides = [1, 1]} : vector<8x512xf32> to vector<8x128xf32>
    %176 = arith.negf %175 : vector<8x128xf32>
    %177 = math.exp %176 : vector<8x128xf32>
    %cst_64 = arith.constant 1.000000e+00 : f32
    %178 = vector.broadcast %cst_64 : f32 to vector<8x128xf32>
    %179 = arith.addf %178, %177 : vector<8x128xf32>
    %180 = arith.divf %178, %179 : vector<8x128xf32>
    %181 = vector.extract_strided_slice %174 {offsets = [0, 128], sizes = [8, 128], strides = [1, 1]} : vector<8x512xf32> to vector<8x128xf32>
    %182 = arith.negf %181 : vector<8x128xf32>
    %183 = math.exp %182 : vector<8x128xf32>
    %cst_65 = arith.constant 1.000000e+00 : f32
    %184 = vector.broadcast %cst_65 : f32 to vector<8x128xf32>
    %185 = arith.addf %184, %183 : vector<8x128xf32>
    %186 = arith.divf %184, %185 : vector<8x128xf32>
    %187 = vector.extract_strided_slice %174 {offsets = [0, 256], sizes = [8, 128], strides = [1, 1]} : vector<8x512xf32> to vector<8x128xf32>
    %188 = math.tanh %187 : vector<8x128xf32>
    %189 = vector.extract_strided_slice %174 {offsets = [0, 384], sizes = [8, 128], strides = [1, 1]} : vector<8x512xf32> to vector<8x128xf32>
    %190 = arith.negf %189 : vector<8x128xf32>
    %191 = math.exp %190 : vector<8x128xf32>
    %cst_66 = arith.constant 1.000000e+00 : f32
    %192 = vector.broadcast %cst_66 : f32 to vector<8x128xf32>
    %193 = arith.addf %192, %191 : vector<8x128xf32>
    %194 = arith.divf %192, %193 : vector<8x128xf32>
    %195 = arith.mulf %186, %164 : vector<8x128xf32>
    %196 = arith.mulf %180, %188 : vector<8x128xf32>
    %197 = arith.addf %195, %196 : vector<8x128xf32>
    %198 = math.tanh %197 : vector<8x128xf32>
    %199 = arith.mulf %194, %198 : vector<8x128xf32>
    %c5_67 = arith.constant 5 : index
    %c0_68 = arith.constant 0 : index
    %c0_69 = arith.constant 0 : index
    %200 = vector.load %arg5[%c5_67, %c0_68, %c0_69] : memref<8x8x128xf32, #tpu.memory_space<vmem>>, vector<1x8x128xf32>
    %201 = vector.shape_cast %200 : vector<1x8x128xf32> to vector<8x128xf32>
    %202 = vector.shape_cast %199 : vector<8x128xf32> to vector<1x8x128xf32>
    tpu.vector_store %arg5[%c5_67, %c0_68, %c0_69], %202 {strides = array<i32>} : memref<8x8x128xf32, #tpu.memory_space<vmem>>, vector<1x8x128xf32>,
    %c6 = arith.constant 6 : index
    %c0_70 = arith.constant 0 : index
    %c0_71 = arith.constant 0 : index
    %203 = vector.load %arg1[%c6, %c0_70, %c0_71] : memref<8x8x512xf32, #tpu.memory_space<vmem>>, vector<1x8x512xf32>
    %204 = vector.shape_cast %203 : vector<1x8x512xf32> to vector<8x512xf32>
    %c0_72 = arith.constant 0 : index
    %c0_73 = arith.constant 0 : index
    %205 = vector.load %arg2[%c0_72, %c0_73] : memref<128x512xf32, #tpu.memory_space<vmem>>, vector<128x512xf32>
    %cst_74 = arith.constant dense<0.000000e+00> : vector<8x512xf32>
    %206 = tpu.matmul %199, %205, %cst_74 {dimension_numbers = #tpu.dot_dimension_numbers<[1], [0], [0], [1], [0, 0, 1, 1], [], []>} : vector<8x128xf32>, vector<128x512xf32>, vector<8x512xf32> -> vector<8x512xf32>
    %207 = arith.addf %204, %206 : vector<8x512xf32>
    %208 = vector.extract_strided_slice %207 {offsets = [0, 0], sizes = [8, 128], strides = [1, 1]} : vector<8x512xf32> to vector<8x128xf32>
    %209 = arith.negf %208 : vector<8x128xf32>
    %210 = math.exp %209 : vector<8x128xf32>
    %cst_75 = arith.constant 1.000000e+00 : f32
    %211 = vector.broadcast %cst_75 : f32 to vector<8x128xf32>
    %212 = arith.addf %211, %210 : vector<8x128xf32>
    %213 = arith.divf %211, %212 : vector<8x128xf32>
    %214 = vector.extract_strided_slice %207 {offsets = [0, 128], sizes = [8, 128], strides = [1, 1]} : vector<8x512xf32> to vector<8x128xf32>
    %215 = arith.negf %214 : vector<8x128xf32>
    %216 = math.exp %215 : vector<8x128xf32>
    %cst_76 = arith.constant 1.000000e+00 : f32
    %217 = vector.broadcast %cst_76 : f32 to vector<8x128xf32>
    %218 = arith.addf %217, %216 : vector<8x128xf32>
    %219 = arith.divf %217, %218 : vector<8x128xf32>
    %220 = vector.extract_strided_slice %207 {offsets = [0, 256], sizes = [8, 128], strides = [1, 1]} : vector<8x512xf32> to vector<8x128xf32>
    %221 = math.tanh %220 : vector<8x128xf32>
    %222 = vector.extract_strided_slice %207 {offsets = [0, 384], sizes = [8, 128], strides = [1, 1]} : vector<8x512xf32> to vector<8x128xf32>
    %223 = arith.negf %222 : vector<8x128xf32>
    %224 = math.exp %223 : vector<8x128xf32>
    %cst_77 = arith.constant 1.000000e+00 : f32
    %225 = vector.broadcast %cst_77 : f32 to vector<8x128xf32>
    %226 = arith.addf %225, %224 : vector<8x128xf32>
    %227 = arith.divf %225, %226 : vector<8x128xf32>
    %228 = arith.mulf %219, %197 : vector<8x128xf32>
    %229 = arith.mulf %213, %221 : vector<8x128xf32>
    %230 = arith.addf %228, %229 : vector<8x128xf32>
    %231 = math.tanh %230 : vector<8x128xf32>
    %232 = arith.mulf %227, %231 : vector<8x128xf32>
    %c6_78 = arith.constant 6 : index
    %c0_79 = arith.constant 0 : index
    %c0_80 = arith.constant 0 : index
    %233 = vector.load %arg5[%c6_78, %c0_79, %c0_80] : memref<8x8x128xf32, #tpu.memory_space<vmem>>, vector<1x8x128xf32>
    %234 = vector.shape_cast %233 : vector<1x8x128xf32> to vector<8x128xf32>
    %235 = vector.shape_cast %232 : vector<8x128xf32> to vector<1x8x128xf32>
    tpu.vector_store %arg5[%c6_78, %c0_79, %c0_80], %235 {strides = array<i32>} : memref<8x8x128xf32, #tpu.memory_space<vmem>>, vector<1x8x128xf32>,
    %c7 = arith.constant 7 : index
    %c0_81 = arith.constant 0 : index
    %c0_82 = arith.constant 0 : index
    %236 = vector.load %arg1[%c7, %c0_81, %c0_82] : memref<8x8x512xf32, #tpu.memory_space<vmem>>, vector<1x8x512xf32>
    %237 = vector.shape_cast %236 : vector<1x8x512xf32> to vector<8x512xf32>
    %c0_83 = arith.constant 0 : index
    %c0_84 = arith.constant 0 : index
    %238 = vector.load %arg2[%c0_83, %c0_84] : memref<128x512xf32, #tpu.memory_space<vmem>>, vector<128x512xf32>
    %cst_85 = arith.constant dense<0.000000e+00> : vector<8x512xf32>
    %239 = tpu.matmul %232, %238, %cst_85 {dimension_numbers = #tpu.dot_dimension_numbers<[1], [0], [0], [1], [0, 0, 1, 1], [], []>} : vector<8x128xf32>, vector<128x512xf32>, vector<8x512xf32> -> vector<8x512xf32>
    %240 = arith.addf %237, %239 : vector<8x512xf32>
    %241 = vector.extract_strided_slice %240 {offsets = [0, 0], sizes = [8, 128], strides = [1, 1]} : vector<8x512xf32> to vector<8x128xf32>
    %242 = arith.negf %241 : vector<8x128xf32>
    %243 = math.exp %242 : vector<8x128xf32>
    %cst_86 = arith.constant 1.000000e+00 : f32
    %244 = vector.broadcast %cst_86 : f32 to vector<8x128xf32>
    %245 = arith.addf %244, %243 : vector<8x128xf32>
    %246 = arith.divf %244, %245 : vector<8x128xf32>
    %247 = vector.extract_strided_slice %240 {offsets = [0, 128], sizes = [8, 128], strides = [1, 1]} : vector<8x512xf32> to vector<8x128xf32>
    %248 = arith.negf %247 : vector<8x128xf32>
    %249 = math.exp %248 : vector<8x128xf32>
    %cst_87 = arith.constant 1.000000e+00 : f32
    %250 = vector.broadcast %cst_87 : f32 to vector<8x128xf32>
    %251 = arith.addf %250, %249 : vector<8x128xf32>
    %252 = arith.divf %250, %251 : vector<8x128xf32>
    %253 = vector.extract_strided_slice %240 {offsets = [0, 256], sizes = [8, 128], strides = [1, 1]} : vector<8x512xf32> to vector<8x128xf32>
    %254 = math.tanh %253 : vector<8x128xf32>
    %255 = vector.extract_strided_slice %240 {offsets = [0, 384], sizes = [8, 128], strides = [1, 1]} : vector<8x512xf32> to vector<8x128xf32>
    %256 = arith.negf %255 : vector<8x128xf32>
    %257 = math.exp %256 : vector<8x128xf32>
    %cst_88 = arith.constant 1.000000e+00 : f32
    %258 = vector.broadcast %cst_88 : f32 to vector<8x128xf32>
    %259 = arith.addf %258, %257 : vector<8x128xf32>
    %260 = arith.divf %258, %259 : vector<8x128xf32>
    %261 = arith.mulf %252, %230 : vector<8x128xf32>
    %262 = arith.mulf %246, %254 : vector<8x128xf32>
    %263 = arith.addf %261, %262 : vector<8x128xf32>
    %264 = math.tanh %263 : vector<8x128xf32>
    %265 = arith.mulf %260, %264 : vector<8x128xf32>
    %c7_89 = arith.constant 7 : index
    %c0_90 = arith.constant 0 : index
    %c0_91 = arith.constant 0 : index
    %266 = vector.load %arg5[%c7_89, %c0_90, %c0_91] : memref<8x8x128xf32, #tpu.memory_space<vmem>>, vector<1x8x128xf32>
    %267 = vector.shape_cast %266 : vector<1x8x128xf32> to vector<8x128xf32>
    %268 = vector.shape_cast %265 : vector<8x128xf32> to vector<1x8x128xf32>
    tpu.vector_store %arg5[%c7_89, %c0_90, %c0_91], %268 {strides = array<i32>} : memref<8x8x128xf32, #tpu.memory_space<vmem>>, vector<1x8x128xf32>,
    %c0_92 = arith.constant 0 : index
    %c0_93 = arith.constant 0 : index
    %269 = vector.load %arg7[%c0_92, %c0_93] : memref<8x128xf32, #tpu.memory_space<vmem>>, vector<8x128xf32>
    tpu.vector_store %arg7[%c0_92, %c0_93], %265 {strides = array<i32>} : memref<8x128xf32, #tpu.memory_space<vmem>>, vector<8x128xf32>,
    %c0_94 = arith.constant 0 : index
    %c0_95 = arith.constant 0 : index
    %270 = vector.load %arg8[%c0_94, %c0_95] : memref<8x128xf32, #tpu.memory_space<vmem>>, vector<8x128xf32>
    tpu.vector_store %arg8[%c0_94, %c0_95], %263 {strides = array<i32>} : memref<8x128xf32, #tpu.memory_space<vmem>>, vector<8x128xf32>,
    %c0_i32_96 = arith.constant 0 : i32
    %271 = arith.cmpi eq, %arg0, %c0_i32_96 : i32
    %272 = arith.extui %271 : i1 to i32
    %c0_i32_97 = arith.constant 0 : i32
    %273 = arith.cmpi ne, %272, %c0_i32_97 : i32
    scf.if %273 {
      %c0_98 = arith.constant 0 : index
      %c0_99 = arith.constant 0 : index
      %274 = vector.load %arg6[%c0_98, %c0_99] : memref<8x128xf32, #tpu.memory_space<vmem>>, vector<8x128xf32>
      tpu.vector_store %arg6[%c0_98, %c0_99], %263 {strides = array<i32>} : memref<8x128xf32, #tpu.memory_space<vmem>>, vector<8x128xf32>,
    } else {
    }
    return
  }
  func.func @transform_0(%arg0: i32) -> (i32, i32, i32) {
    %c0_i32 = arith.constant 0 : i32
    %c0_i32_0 = arith.constant 0 : i32
    %c0_i32_1 = arith.constant 0 : i32
    return %arg0, %c0_i32, %c0_i32_0 : i32, i32, i32
  }
  func.func @transform_1(%arg0: i32) -> (i32, i32) {
    %c0_i32 = arith.constant 0 : i32
    %c0_i32_0 = arith.constant 0 : i32
    %c0_i32_1 = arith.constant 0 : i32
    return %c0_i32, %c0_i32_0 : i32, i32
  }
  func.func @transform_2(%arg0: i32) -> (i32, i32) {
    %c0_i32 = arith.constant 0 : i32
    %c0_i32_0 = arith.constant 0 : i32
    %c0_i32_1 = arith.constant 0 : i32
    return %c0_i32, %c0_i32_0 : i32, i32
  }
  func.func @transform_3(%arg0: i32) -> (i32, i32) {
    %c0_i32 = arith.constant 0 : i32
    %c0_i32_0 = arith.constant 0 : i32
    %c0_i32_1 = arith.constant 0 : i32
    return %c0_i32, %c0_i32_0 : i32, i32
  }
  func.func @transform_4(%arg0: i32) -> (i32, i32, i32) {
    %c0_i32 = arith.constant 0 : i32
    %c0_i32_0 = arith.constant 0 : i32
    %c0_i32_1 = arith.constant 0 : i32
    return %arg0, %c0_i32, %c0_i32_0 : i32, i32, i32
  }
  func.func @transform_5(%arg0: i32) -> (i32, i32) {
    %c0_i32 = arith.constant 0 : i32
    %c0_i32_0 = arith.constant 0 : i32
    %c0_i32_1 = arith.constant 0 : i32
    return %c0_i32, %c0_i32_0 : i32, i32
  }
}

module attributes {stable_mosaic.version = 11 : i64} {
  func.func @_lstm_recurrent_kernel(%arg0: i32, %arg1: memref<8x8x512xf32, #tpu.memory_space<vmem>>, %arg2: memref<128x512xf32, #tpu.memory_space<vmem>>, %arg3: memref<8x128xf32, #tpu.memory_space<vmem>>, %arg4: memref<8x128xf32, #tpu.memory_space<vmem>>, %arg5: memref<8x8x128xf32, #tpu.memory_space<vmem>>, %arg6: memref<8x128xf32, #tpu.memory_space<vmem>>, %arg7: memref<8x128xf32, #tpu.memory_space<vmem>>, %arg8: memref<8x128xf32, #tpu.memory_space<vmem>>) attributes {dimension_semantics = [#tpu.dimension_semantics<arbitrary>], iteration_bounds = array<i64: 1>, scalar_prefetch = 0 : i64, scratch_operands = 2 : i64, tpu.core_type = #tpu.core_type<tc>, window_params = [{transform_indices = @transform_0, window_bounds = array<i64: 8, 8, 512>}, {pipeline_mode = #tpu.pipeline_mode<synchronous>, transform_indices = @transform_1, window_bounds = array<i64: 128, 512>}, {pipeline_mode = #tpu.pipeline_mode<synchronous>, transform_indices = @transform_2, window_bounds = array<i64: 8, 128>}, {pipeline_mode = #tpu.pipeline_mode<synchronous>, transform_indices = @transform_3, window_bounds = array<i64: 8, 128>}, {transform_indices = @transform_4, window_bounds = array<i64: 8, 8, 128>}, {pipeline_mode = #tpu.pipeline_mode<synchronous>, transform_indices = @transform_5, window_bounds = array<i64: 8, 128>}]} {
    %c0_i32 = arith.constant 0 : i32
    %0 = arith.cmpi eq, %arg0, %c0_i32 : i32
    %1 = arith.extui %0 : i1 to i32
    %c0_i32_0 = arith.constant 0 : i32
    %2 = arith.cmpi ne, %1, %c0_i32_0 : i32
    scf.if %2 {
      %c0_98 = arith.constant 0 : index
      %c0_99 = arith.constant 0 : index
      %274 = vector.load %arg3[%c0_98, %c0_99] : memref<8x128xf32, #tpu.memory_space<vmem>>, vector<8x128xf32>
      %c0_100 = arith.constant 0 : index
      %c0_101 = arith.constant 0 : index
      %275 = vector.load %arg7[%c0_100, %c0_101] : memref<8x128xf32, #tpu.memory_space<vmem>>, vector<8x128xf32>
      tpu.vector_store %arg7[%c0_100, %c0_101], %274 {strides = array<i32>} : memref<8x128xf32, #tpu.memory_space<vmem>>, vector<8x128xf32>,
      %c0_102 = arith.constant 0 : index
      %c0_103 = arith.constant 0 : index
      %276 = vector.load %arg4[%c0_102, %c0_103] : memref<8x128xf32, #tpu.memory_space<vmem>>, vector<8x128xf32>
      %c0_104 = arith.constant 0 : index
      %c0_105 = arith.constant 0 : index
      %277 = vector.load %arg8[%c0_104, %c0_105] : memref<8x128xf32, #tpu.memory_space<vmem>>, vector<8x128xf32>
      tpu.vector_store %arg8[%c0_104, %c0_105], %276 {strides = array<i32>} : memref<8x128xf32, #tpu.memory_space<vmem>>, vector<8x128xf32>,
    } else {
    }
    %c0 = arith.constant 0 : index
    %c0_1 = arith.constant 0 : index
    %3 = vector.load %arg7[%c0, %c0_1] : memref<8x128xf32, #tpu.memory_space<vmem>>, vector<8x128xf32>
    %c0_2 = arith.constant 0 : index
    %c0_3 = arith.constant 0 : index
    %4 = vector.load %arg8[%c0_2, %c0_3] : memref<8x128xf32, #tpu.memory_space<vmem>>, vector<8x128xf32>
    %c0_4 = arith.constant 0 : index
    %c0_5 = arith.constant 0 : index
    %c0_6 = arith.constant 0 : index
    %5 = vector.load %arg1[%c0_4, %c0_5, %c0_6] : memref<8x8x512xf32, #tpu.memory_space<vmem>>, vector<1x8x512xf32>
    %6 = vector.shape_cast %5 : vector<1x8x512xf32> to vector<8x512xf32>
    %c0_7 = arith.constant 0 : index
    %c0_8 = arith.constant 0 : index
    %7 = vector.load %arg2[%c0_7, %c0_8] : memref<128x512xf32, #tpu.memory_space<vmem>>, vector<128x512xf32>
    %cst = arith.constant dense<0.000000e+00> : vector<8x512xf32>
    %8 = tpu.matmul %3, %7, %cst {dimension_numbers = #tpu.dot_dimension_numbers<[1], [0], [0], [1], [0, 0, 1, 1], [], []>} : vector<8x128xf32>, vector<128x512xf32>, vector<8x512xf32> -> vector<8x512xf32>
    %9 = arith.addf %6, %8 : vector<8x512xf32>
    %10 = vector.extract_strided_slice %9 {offsets = [0, 0], sizes = [8, 128], strides = [1, 1]} : vector<8x512xf32> to vector<8x128xf32>
    %11 = arith.negf %10 : vector<8x128xf32>
    %12 = math.exp %11 : vector<8x128xf32>
    %cst_9 = arith.constant 1.000000e+00 : f32
    %13 = vector.broadcast %cst_9 : f32 to vector<8x128xf32>
    %14 = arith.addf %13, %12 : vector<8x128xf32>
    %15 = arith.divf %13, %14 : vector<8x128xf32>
    %16 = vector.extract_strided_slice %9 {offsets = [0, 128], sizes = [8, 128], strides = [1, 1]} : vector<8x512xf32> to vector<8x128xf32>
    %17 = arith.negf %16 : vector<8x128xf32>
    %18 = math.exp %17 : vector<8x128xf32>
    %cst_10 = arith.constant 1.000000e+00 : f32
    %19 = vector.broadcast %cst_10 : f32 to vector<8x128xf32>
    %20 = arith.addf %19, %18 : vector<8x128xf32>
    %21 = arith.divf %19, %20 : vector<8x128xf32>
    %22 = vector.extract_strided_slice %9 {offsets = [0, 256], sizes = [8, 128], strides = [1, 1]} : vector<8x512xf32> to vector<8x128xf32>
    %23 = math.tanh %22 : vector<8x128xf32>
    %24 = vector.extract_strided_slice %9 {offsets = [0, 384], sizes = [8, 128], strides = [1, 1]} : vector<8x512xf32> to vector<8x128xf32>
    %25 = arith.negf %24 : vector<8x128xf32>
    %26 = math.exp %25 : vector<8x128xf32>
    %cst_11 = arith.constant 1.000000e+00 : f32
    %27 = vector.broadcast %cst_11 : f32 to vector<8x128xf32>
    %28 = arith.addf %27, %26 : vector<8x128xf32>
    %29 = arith.divf %27, %28 : vector<8x128xf32>
    %30 = arith.mulf %21, %4 : vector<8x128xf32>
    %31 = arith.mulf %15, %23 : vector<8x128xf32>
    %32 = arith.addf %30, %31 : vector<8x128xf32>
    %33 = math.tanh %32 : vector<8x128xf32>
    %34 = arith.mulf %29, %33 : vector<8x128xf32>
    %c0_12 = arith.constant 0 : index
    %c0_13 = arith.constant 0 : index
    %c0_14 = arith.constant 0 : index
    %35 = vector.load %arg5[%c0_12, %c0_13, %c0_14] : memref<8x8x128xf32, #tpu.memory_space<vmem>>, vector<1x8x128xf32>
    %36 = vector.shape_cast %35 : vector<1x8x128xf32> to vector<8x128xf32>
    %37 = vector.shape_cast %34 : vector<8x128xf32> to vector<1x8x128xf32>
    tpu.vector_store %arg5[%c0_12, %c0_13, %c0_14], %37 {strides = array<i32>} : memref<8x8x128xf32, #tpu.memory_space<vmem>>, vector<1x8x128xf32>,
    %c1 = arith.constant 1 : index
    %c0_15 = arith.constant 0 : index
    %c0_16 = arith.constant 0 : index
    %38 = vector.load %arg1[%c1, %c0_15, %c0_16] : memref<8x8x512xf32, #tpu.memory_space<vmem>>, vector<1x8x512xf32>
    %39 = vector.shape_cast %38 : vector<1x8x512xf32> to vector<8x512xf32>
    %c0_17 = arith.constant 0 : index
    %c0_18 = arith.constant 0 : index
    %40 = vector.load %arg2[%c0_17, %c0_18] : memref<128x512xf32, #tpu.memory_space<vmem>>, vector<128x512xf32>
    %cst_19 = arith.constant dense<0.000000e+00> : vector<8x512xf32>
    %41 = tpu.matmul %34, %40, %cst_19 {dimension_numbers = #tpu.dot_dimension_numbers<[1], [0], [0], [1], [0, 0, 1, 1], [], []>} : vector<8x128xf32>, vector<128x512xf32>, vector<8x512xf32> -> vector<8x512xf32>
    %42 = arith.addf %39, %41 : vector<8x512xf32>
    %43 = vector.extract_strided_slice %42 {offsets = [0, 0], sizes = [8, 128], strides = [1, 1]} : vector<8x512xf32> to vector<8x128xf32>
    %44 = arith.negf %43 : vector<8x128xf32>
    %45 = math.exp %44 : vector<8x128xf32>
    %cst_20 = arith.constant 1.000000e+00 : f32
    %46 = vector.broadcast %cst_20 : f32 to vector<8x128xf32>
    %47 = arith.addf %46, %45 : vector<8x128xf32>
    %48 = arith.divf %46, %47 : vector<8x128xf32>
    %49 = vector.extract_strided_slice %42 {offsets = [0, 128], sizes = [8, 128], strides = [1, 1]} : vector<8x512xf32> to vector<8x128xf32>
    %50 = arith.negf %49 : vector<8x128xf32>
    %51 = math.exp %50 : vector<8x128xf32>
    %cst_21 = arith.constant 1.000000e+00 : f32
    %52 = vector.broadcast %cst_21 : f32 to vector<8x128xf32>
    %53 = arith.addf %52, %51 : vector<8x128xf32>
    %54 = arith.divf %52, %53 : vector<8x128xf32>
    %55 = vector.extract_strided_slice %42 {offsets = [0, 256], sizes = [8, 128], strides = [1, 1]} : vector<8x512xf32> to vector<8x128xf32>
    %56 = math.tanh %55 : vector<8x128xf32>
    %57 = vector.extract_strided_slice %42 {offsets = [0, 384], sizes = [8, 128], strides = [1, 1]} : vector<8x512xf32> to vector<8x128xf32>
    %58 = arith.negf %57 : vector<8x128xf32>
    %59 = math.exp %58 : vector<8x128xf32>
    %cst_22 = arith.constant 1.000000e+00 : f32
    %60 = vector.broadcast %cst_22 : f32 to vector<8x128xf32>
    %61 = arith.addf %60, %59 : vector<8x128xf32>
    %62 = arith.divf %60, %61 : vector<8x128xf32>
    %63 = arith.mulf %54, %32 : vector<8x128xf32>
    %64 = arith.mulf %48, %56 : vector<8x128xf32>
    %65 = arith.addf %63, %64 : vector<8x128xf32>
    %66 = math.tanh %65 : vector<8x128xf32>
    %67 = arith.mulf %62, %66 : vector<8x128xf32>
    %c1_23 = arith.constant 1 : index
    %c0_24 = arith.constant 0 : index
    %c0_25 = arith.constant 0 : index
    %68 = vector.load %arg5[%c1_23, %c0_24, %c0_25] : memref<8x8x128xf32, #tpu.memory_space<vmem>>, vector<1x8x128xf32>
    %69 = vector.shape_cast %68 : vector<1x8x128xf32> to vector<8x128xf32>
    %70 = vector.shape_cast %67 : vector<8x128xf32> to vector<1x8x128xf32>
    tpu.vector_store %arg5[%c1_23, %c0_24, %c0_25], %70 {strides = array<i32>} : memref<8x8x128xf32, #tpu.memory_space<vmem>>, vector<1x8x128xf32>,
    %c2 = arith.constant 2 : index
    %c0_26 = arith.constant 0 : index
    %c0_27 = arith.constant 0 : index
    %71 = vector.load %arg1[%c2, %c0_26, %c0_27] : memref<8x8x512xf32, #tpu.memory_space<vmem>>, vector<1x8x512xf32>
    %72 = vector.shape_cast %71 : vector<1x8x512xf32> to vector<8x512xf32>
    %c0_28 = arith.constant 0 : index
    %c0_29 = arith.constant 0 : index
    %73 = vector.load %arg2[%c0_28, %c0_29] : memref<128x512xf32, #tpu.memory_space<vmem>>, vector<128x512xf32>
    %cst_30 = arith.constant dense<0.000000e+00> : vector<8x512xf32>
    %74 = tpu.matmul %67, %73, %cst_30 {dimension_numbers = #tpu.dot_dimension_numbers<[1], [0], [0], [1], [0, 0, 1, 1], [], []>} : vector<8x128xf32>, vector<128x512xf32>, vector<8x512xf32> -> vector<8x512xf32>
    %75 = arith.addf %72, %74 : vector<8x512xf32>
    %76 = vector.extract_strided_slice %75 {offsets = [0, 0], sizes = [8, 128], strides = [1, 1]} : vector<8x512xf32> to vector<8x128xf32>
    %77 = arith.negf %76 : vector<8x128xf32>
    %78 = math.exp %77 : vector<8x128xf32>
    %cst_31 = arith.constant 1.000000e+00 : f32
    %79 = vector.broadcast %cst_31 : f32 to vector<8x128xf32>
    %80 = arith.addf %79, %78 : vector<8x128xf32>
    %81 = arith.divf %79, %80 : vector<8x128xf32>
    %82 = vector.extract_strided_slice %75 {offsets = [0, 128], sizes = [8, 128], strides = [1, 1]} : vector<8x512xf32> to vector<8x128xf32>
    %83 = arith.negf %82 : vector<8x128xf32>
    %84 = math.exp %83 : vector<8x128xf32>
    %cst_32 = arith.constant 1.000000e+00 : f32
    %85 = vector.broadcast %cst_32 : f32 to vector<8x128xf32>
    %86 = arith.addf %85, %84 : vector<8x128xf32>
    %87 = arith.divf %85, %86 : vector<8x128xf32>
    %88 = vector.extract_strided_slice %75 {offsets = [0, 256], sizes = [8, 128], strides = [1, 1]} : vector<8x512xf32> to vector<8x128xf32>
    %89 = math.tanh %88 : vector<8x128xf32>
    %90 = vector.extract_strided_slice %75 {offsets = [0, 384], sizes = [8, 128], strides = [1, 1]} : vector<8x512xf32> to vector<8x128xf32>
    %91 = arith.negf %90 : vector<8x128xf32>
    %92 = math.exp %91 : vector<8x128xf32>
    %cst_33 = arith.constant 1.000000e+00 : f32
    %93 = vector.broadcast %cst_33 : f32 to vector<8x128xf32>
    %94 = arith.addf %93, %92 : vector<8x128xf32>
    %95 = arith.divf %93, %94 : vector<8x128xf32>
    %96 = arith.mulf %87, %65 : vector<8x128xf32>
    %97 = arith.mulf %81, %89 : vector<8x128xf32>
    %98 = arith.addf %96, %97 : vector<8x128xf32>
    %99 = math.tanh %98 : vector<8x128xf32>
    %100 = arith.mulf %95, %99 : vector<8x128xf32>
    %c2_34 = arith.constant 2 : index
    %c0_35 = arith.constant 0 : index
    %c0_36 = arith.constant 0 : index
    %101 = vector.load %arg5[%c2_34, %c0_35, %c0_36] : memref<8x8x128xf32, #tpu.memory_space<vmem>>, vector<1x8x128xf32>
    %102 = vector.shape_cast %101 : vector<1x8x128xf32> to vector<8x128xf32>
    %103 = vector.shape_cast %100 : vector<8x128xf32> to vector<1x8x128xf32>
    tpu.vector_store %arg5[%c2_34, %c0_35, %c0_36], %103 {strides = array<i32>} : memref<8x8x128xf32, #tpu.memory_space<vmem>>, vector<1x8x128xf32>,
    %c3 = arith.constant 3 : index
    %c0_37 = arith.constant 0 : index
    %c0_38 = arith.constant 0 : index
    %104 = vector.load %arg1[%c3, %c0_37, %c0_38] : memref<8x8x512xf32, #tpu.memory_space<vmem>>, vector<1x8x512xf32>
    %105 = vector.shape_cast %104 : vector<1x8x512xf32> to vector<8x512xf32>
    %c0_39 = arith.constant 0 : index
    %c0_40 = arith.constant 0 : index
    %106 = vector.load %arg2[%c0_39, %c0_40] : memref<128x512xf32, #tpu.memory_space<vmem>>, vector<128x512xf32>
    %cst_41 = arith.constant dense<0.000000e+00> : vector<8x512xf32>
    %107 = tpu.matmul %100, %106, %cst_41 {dimension_numbers = #tpu.dot_dimension_numbers<[1], [0], [0], [1], [0, 0, 1, 1], [], []>} : vector<8x128xf32>, vector<128x512xf32>, vector<8x512xf32> -> vector<8x512xf32>
    %108 = arith.addf %105, %107 : vector<8x512xf32>
    %109 = vector.extract_strided_slice %108 {offsets = [0, 0], sizes = [8, 128], strides = [1, 1]} : vector<8x512xf32> to vector<8x128xf32>
    %110 = arith.negf %109 : vector<8x128xf32>
    %111 = math.exp %110 : vector<8x128xf32>
    %cst_42 = arith.constant 1.000000e+00 : f32
    %112 = vector.broadcast %cst_42 : f32 to vector<8x128xf32>
    %113 = arith.addf %112, %111 : vector<8x128xf32>
    %114 = arith.divf %112, %113 : vector<8x128xf32>
    %115 = vector.extract_strided_slice %108 {offsets = [0, 128], sizes = [8, 128], strides = [1, 1]} : vector<8x512xf32> to vector<8x128xf32>
    %116 = arith.negf %115 : vector<8x128xf32>
    %117 = math.exp %116 : vector<8x128xf32>
    %cst_43 = arith.constant 1.000000e+00 : f32
    %118 = vector.broadcast %cst_43 : f32 to vector<8x128xf32>
    %119 = arith.addf %118, %117 : vector<8x128xf32>
    %120 = arith.divf %118, %119 : vector<8x128xf32>
    %121 = vector.extract_strided_slice %108 {offsets = [0, 256], sizes = [8, 128], strides = [1, 1]} : vector<8x512xf32> to vector<8x128xf32>
    %122 = math.tanh %121 : vector<8x128xf32>
    %123 = vector.extract_strided_slice %108 {offsets = [0, 384], sizes = [8, 128], strides = [1, 1]} : vector<8x512xf32> to vector<8x128xf32>
    %124 = arith.negf %123 : vector<8x128xf32>
    %125 = math.exp %124 : vector<8x128xf32>
    %cst_44 = arith.constant 1.000000e+00 : f32
    %126 = vector.broadcast %cst_44 : f32 to vector<8x128xf32>
    %127 = arith.addf %126, %125 : vector<8x128xf32>
    %128 = arith.divf %126, %127 : vector<8x128xf32>
    %129 = arith.mulf %120, %98 : vector<8x128xf32>
    %130 = arith.mulf %114, %122 : vector<8x128xf32>
    %131 = arith.addf %129, %130 : vector<8x128xf32>
    %132 = math.tanh %131 : vector<8x128xf32>
    %133 = arith.mulf %128, %132 : vector<8x128xf32>
    %c3_45 = arith.constant 3 : index
    %c0_46 = arith.constant 0 : index
    %c0_47 = arith.constant 0 : index
    %134 = vector.load %arg5[%c3_45, %c0_46, %c0_47] : memref<8x8x128xf32, #tpu.memory_space<vmem>>, vector<1x8x128xf32>
    %135 = vector.shape_cast %134 : vector<1x8x128xf32> to vector<8x128xf32>
    %136 = vector.shape_cast %133 : vector<8x128xf32> to vector<1x8x128xf32>
    tpu.vector_store %arg5[%c3_45, %c0_46, %c0_47], %136 {strides = array<i32>} : memref<8x8x128xf32, #tpu.memory_space<vmem>>, vector<1x8x128xf32>,
    %c4 = arith.constant 4 : index
    %c0_48 = arith.constant 0 : index
    %c0_49 = arith.constant 0 : index
    %137 = vector.load %arg1[%c4, %c0_48, %c0_49] : memref<8x8x512xf32, #tpu.memory_space<vmem>>, vector<1x8x512xf32>
    %138 = vector.shape_cast %137 : vector<1x8x512xf32> to vector<8x512xf32>
    %c0_50 = arith.constant 0 : index
    %c0_51 = arith.constant 0 : index
    %139 = vector.load %arg2[%c0_50, %c0_51] : memref<128x512xf32, #tpu.memory_space<vmem>>, vector<128x512xf32>
    %cst_52 = arith.constant dense<0.000000e+00> : vector<8x512xf32>
    %140 = tpu.matmul %133, %139, %cst_52 {dimension_numbers = #tpu.dot_dimension_numbers<[1], [0], [0], [1], [0, 0, 1, 1], [], []>} : vector<8x128xf32>, vector<128x512xf32>, vector<8x512xf32> -> vector<8x512xf32>
    %141 = arith.addf %138, %140 : vector<8x512xf32>
    %142 = vector.extract_strided_slice %141 {offsets = [0, 0], sizes = [8, 128], strides = [1, 1]} : vector<8x512xf32> to vector<8x128xf32>
    %143 = arith.negf %142 : vector<8x128xf32>
    %144 = math.exp %143 : vector<8x128xf32>
    %cst_53 = arith.constant 1.000000e+00 : f32
    %145 = vector.broadcast %cst_53 : f32 to vector<8x128xf32>
    %146 = arith.addf %145, %144 : vector<8x128xf32>
    %147 = arith.divf %145, %146 : vector<8x128xf32>
    %148 = vector.extract_strided_slice %141 {offsets = [0, 128], sizes = [8, 128], strides = [1, 1]} : vector<8x512xf32> to vector<8x128xf32>
    %149 = arith.negf %148 : vector<8x128xf32>
    %150 = math.exp %149 : vector<8x128xf32>
    %cst_54 = arith.constant 1.000000e+00 : f32
    %151 = vector.broadcast %cst_54 : f32 to vector<8x128xf32>
    %152 = arith.addf %151, %150 : vector<8x128xf32>
    %153 = arith.divf %151, %152 : vector<8x128xf32>
    %154 = vector.extract_strided_slice %141 {offsets = [0, 256], sizes = [8, 128], strides = [1, 1]} : vector<8x512xf32> to vector<8x128xf32>
    %155 = math.tanh %154 : vector<8x128xf32>
    %156 = vector.extract_strided_slice %141 {offsets = [0, 384], sizes = [8, 128], strides = [1, 1]} : vector<8x512xf32> to vector<8x128xf32>
    %157 = arith.negf %156 : vector<8x128xf32>
    %158 = math.exp %157 : vector<8x128xf32>
    %cst_55 = arith.constant 1.000000e+00 : f32
    %159 = vector.broadcast %cst_55 : f32 to vector<8x128xf32>
    %160 = arith.addf %159, %158 : vector<8x128xf32>
    %161 = arith.divf %159, %160 : vector<8x128xf32>
    %162 = arith.mulf %153, %131 : vector<8x128xf32>
    %163 = arith.mulf %147, %155 : vector<8x128xf32>
    %164 = arith.addf %162, %163 : vector<8x128xf32>
    %165 = math.tanh %164 : vector<8x128xf32>
    %166 = arith.mulf %161, %165 : vector<8x128xf32>
    %c4_56 = arith.constant 4 : index
    %c0_57 = arith.constant 0 : index
    %c0_58 = arith.constant 0 : index
    %167 = vector.load %arg5[%c4_56, %c0_57, %c0_58] : memref<8x8x128xf32, #tpu.memory_space<vmem>>, vector<1x8x128xf32>
    %168 = vector.shape_cast %167 : vector<1x8x128xf32> to vector<8x128xf32>
    %169 = vector.shape_cast %166 : vector<8x128xf32> to vector<1x8x128xf32>
    tpu.vector_store %arg5[%c4_56, %c0_57, %c0_58], %169 {strides = array<i32>} : memref<8x8x128xf32, #tpu.memory_space<vmem>>, vector<1x8x128xf32>,
    %c5 = arith.constant 5 : index
    %c0_59 = arith.constant 0 : index
    %c0_60 = arith.constant 0 : index
    %170 = vector.load %arg1[%c5, %c0_59, %c0_60] : memref<8x8x512xf32, #tpu.memory_space<vmem>>, vector<1x8x512xf32>
    %171 = vector.shape_cast %170 : vector<1x8x512xf32> to vector<8x512xf32>
    %c0_61 = arith.constant 0 : index
    %c0_62 = arith.constant 0 : index
    %172 = vector.load %arg2[%c0_61, %c0_62] : memref<128x512xf32, #tpu.memory_space<vmem>>, vector<128x512xf32>
    %cst_63 = arith.constant dense<0.000000e+00> : vector<8x512xf32>
    %173 = tpu.matmul %166, %172, %cst_63 {dimension_numbers = #tpu.dot_dimension_numbers<[1], [0], [0], [1], [0, 0, 1, 1], [], []>} : vector<8x128xf32>, vector<128x512xf32>, vector<8x512xf32> -> vector<8x512xf32>
    %174 = arith.addf %171, %173 : vector<8x512xf32>
    %175 = vector.extract_strided_slice %174 {offsets = [0, 0], sizes = [8, 128], strides = [1, 1]} : vector<8x512xf32> to vector<8x128xf32>
    %176 = arith.negf %175 : vector<8x128xf32>
    %177 = math.exp %176 : vector<8x128xf32>
    %cst_64 = arith.constant 1.000000e+00 : f32
    %178 = vector.broadcast %cst_64 : f32 to vector<8x128xf32>
    %179 = arith.addf %178, %177 : vector<8x128xf32>
    %180 = arith.divf %178, %179 : vector<8x128xf32>
    %181 = vector.extract_strided_slice %174 {offsets = [0, 128], sizes = [8, 128], strides = [1, 1]} : vector<8x512xf32> to vector<8x128xf32>
    %182 = arith.negf %181 : vector<8x128xf32>
    %183 = math.exp %182 : vector<8x128xf32>
    %cst_65 = arith.constant 1.000000e+00 : f32
    %184 = vector.broadcast %cst_65 : f32 to vector<8x128xf32>
    %185 = arith.addf %184, %183 : vector<8x128xf32>
    %186 = arith.divf %184, %185 : vector<8x128xf32>
    %187 = vector.extract_strided_slice %174 {offsets = [0, 256], sizes = [8, 128], strides = [1, 1]} : vector<8x512xf32> to vector<8x128xf32>
    %188 = math.tanh %187 : vector<8x128xf32>
    %189 = vector.extract_strided_slice %174 {offsets = [0, 384], sizes = [8, 128], strides = [1, 1]} : vector<8x512xf32> to vector<8x128xf32>
    %190 = arith.negf %189 : vector<8x128xf32>
    %191 = math.exp %190 : vector<8x128xf32>
    %cst_66 = arith.constant 1.000000e+00 : f32
    %192 = vector.broadcast %cst_66 : f32 to vector<8x128xf32>
    %193 = arith.addf %192, %191 : vector<8x128xf32>
    %194 = arith.divf %192, %193 : vector<8x128xf32>
    %195 = arith.mulf %186, %164 : vector<8x128xf32>
    %196 = arith.mulf %180, %188 : vector<8x128xf32>
    %197 = arith.addf %195, %196 : vector<8x128xf32>
    %198 = math.tanh %197 : vector<8x128xf32>
    %199 = arith.mulf %194, %198 : vector<8x128xf32>
    %c5_67 = arith.constant 5 : index
    %c0_68 = arith.constant 0 : index
    %c0_69 = arith.constant 0 : index
    %200 = vector.load %arg5[%c5_67, %c0_68, %c0_69] : memref<8x8x128xf32, #tpu.memory_space<vmem>>, vector<1x8x128xf32>
    %201 = vector.shape_cast %200 : vector<1x8x128xf32> to vector<8x128xf32>
    %202 = vector.shape_cast %199 : vector<8x128xf32> to vector<1x8x128xf32>
    tpu.vector_store %arg5[%c5_67, %c0_68, %c0_69], %202 {strides = array<i32>} : memref<8x8x128xf32, #tpu.memory_space<vmem>>, vector<1x8x128xf32>,
    %c6 = arith.constant 6 : index
    %c0_70 = arith.constant 0 : index
    %c0_71 = arith.constant 0 : index
    %203 = vector.load %arg1[%c6, %c0_70, %c0_71] : memref<8x8x512xf32, #tpu.memory_space<vmem>>, vector<1x8x512xf32>
    %204 = vector.shape_cast %203 : vector<1x8x512xf32> to vector<8x512xf32>
    %c0_72 = arith.constant 0 : index
    %c0_73 = arith.constant 0 : index
    %205 = vector.load %arg2[%c0_72, %c0_73] : memref<128x512xf32, #tpu.memory_space<vmem>>, vector<128x512xf32>
    %cst_74 = arith.constant dense<0.000000e+00> : vector<8x512xf32>
    %206 = tpu.matmul %199, %205, %cst_74 {dimension_numbers = #tpu.dot_dimension_numbers<[1], [0], [0], [1], [0, 0, 1, 1], [], []>} : vector<8x128xf32>, vector<128x512xf32>, vector<8x512xf32> -> vector<8x512xf32>
    %207 = arith.addf %204, %206 : vector<8x512xf32>
    %208 = vector.extract_strided_slice %207 {offsets = [0, 0], sizes = [8, 128], strides = [1, 1]} : vector<8x512xf32> to vector<8x128xf32>
    %209 = arith.negf %208 : vector<8x128xf32>
    %210 = math.exp %209 : vector<8x128xf32>
    %cst_75 = arith.constant 1.000000e+00 : f32
    %211 = vector.broadcast %cst_75 : f32 to vector<8x128xf32>
    %212 = arith.addf %211, %210 : vector<8x128xf32>
    %213 = arith.divf %211, %212 : vector<8x128xf32>
    %214 = vector.extract_strided_slice %207 {offsets = [0, 128], sizes = [8, 128], strides = [1, 1]} : vector<8x512xf32> to vector<8x128xf32>
    %215 = arith.negf %214 : vector<8x128xf32>
    %216 = math.exp %215 : vector<8x128xf32>
    %cst_76 = arith.constant 1.000000e+00 : f32
    %217 = vector.broadcast %cst_76 : f32 to vector<8x128xf32>
    %218 = arith.addf %217, %216 : vector<8x128xf32>
    %219 = arith.divf %217, %218 : vector<8x128xf32>
    %220 = vector.extract_strided_slice %207 {offsets = [0, 256], sizes = [8, 128], strides = [1, 1]} : vector<8x512xf32> to vector<8x128xf32>
    %221 = math.tanh %220 : vector<8x128xf32>
    %222 = vector.extract_strided_slice %207 {offsets = [0, 384], sizes = [8, 128], strides = [1, 1]} : vector<8x512xf32> to vector<8x128xf32>
    %223 = arith.negf %222 : vector<8x128xf32>
    %224 = math.exp %223 : vector<8x128xf32>
    %cst_77 = arith.constant 1.000000e+00 : f32
    %225 = vector.broadcast %cst_77 : f32 to vector<8x128xf32>
    %226 = arith.addf %225, %224 : vector<8x128xf32>
    %227 = arith.divf %225, %226 : vector<8x128xf32>
    %228 = arith.mulf %219, %197 : vector<8x128xf32>
    %229 = arith.mulf %213, %221 : vector<8x128xf32>
    %230 = arith.addf %228, %229 : vector<8x128xf32>
    %231 = math.tanh %230 : vector<8x128xf32>
    %232 = arith.mulf %227, %231 : vector<8x128xf32>
    %c6_78 = arith.constant 6 : index
    %c0_79 = arith.constant 0 : index
    %c0_80 = arith.constant 0 : index
    %233 = vector.load %arg5[%c6_78, %c0_79, %c0_80] : memref<8x8x128xf32, #tpu.memory_space<vmem>>, vector<1x8x128xf32>
    %234 = vector.shape_cast %233 : vector<1x8x128xf32> to vector<8x128xf32>
    %235 = vector.shape_cast %232 : vector<8x128xf32> to vector<1x8x128xf32>
    tpu.vector_store %arg5[%c6_78, %c0_79, %c0_80], %235 {strides = array<i32>} : memref<8x8x128xf32, #tpu.memory_space<vmem>>, vector<1x8x128xf32>,
    %c7 = arith.constant 7 : index
    %c0_81 = arith.constant 0 : index
    %c0_82 = arith.constant 0 : index
    %236 = vector.load %arg1[%c7, %c0_81, %c0_82] : memref<8x8x512xf32, #tpu.memory_space<vmem>>, vector<1x8x512xf32>
    %237 = vector.shape_cast %236 : vector<1x8x512xf32> to vector<8x512xf32>
    %c0_83 = arith.constant 0 : index
    %c0_84 = arith.constant 0 : index
    %238 = vector.load %arg2[%c0_83, %c0_84] : memref<128x512xf32, #tpu.memory_space<vmem>>, vector<128x512xf32>
    %cst_85 = arith.constant dense<0.000000e+00> : vector<8x512xf32>
    %239 = tpu.matmul %232, %238, %cst_85 {dimension_numbers = #tpu.dot_dimension_numbers<[1], [0], [0], [1], [0, 0, 1, 1], [], []>} : vector<8x128xf32>, vector<128x512xf32>, vector<8x512xf32> -> vector<8x512xf32>
    %240 = arith.addf %237, %239 : vector<8x512xf32>
    %241 = vector.extract_strided_slice %240 {offsets = [0, 0], sizes = [8, 128], strides = [1, 1]} : vector<8x512xf32> to vector<8x128xf32>
    %242 = arith.negf %241 : vector<8x128xf32>
    %243 = math.exp %242 : vector<8x128xf32>
    %cst_86 = arith.constant 1.000000e+00 : f32
    %244 = vector.broadcast %cst_86 : f32 to vector<8x128xf32>
    %245 = arith.addf %244, %243 : vector<8x128xf32>
    %246 = arith.divf %244, %245 : vector<8x128xf32>
    %247 = vector.extract_strided_slice %240 {offsets = [0, 128], sizes = [8, 128], strides = [1, 1]} : vector<8x512xf32> to vector<8x128xf32>
    %248 = arith.negf %247 : vector<8x128xf32>
    %249 = math.exp %248 : vector<8x128xf32>
    %cst_87 = arith.constant 1.000000e+00 : f32
    %250 = vector.broadcast %cst_87 : f32 to vector<8x128xf32>
    %251 = arith.addf %250, %249 : vector<8x128xf32>
    %252 = arith.divf %250, %251 : vector<8x128xf32>
    %253 = vector.extract_strided_slice %240 {offsets = [0, 256], sizes = [8, 128], strides = [1, 1]} : vector<8x512xf32> to vector<8x128xf32>
    %254 = math.tanh %253 : vector<8x128xf32>
    %255 = vector.extract_strided_slice %240 {offsets = [0, 384], sizes = [8, 128], strides = [1, 1]} : vector<8x512xf32> to vector<8x128xf32>
    %256 = arith.negf %255 : vector<8x128xf32>
    %257 = math.exp %256 : vector<8x128xf32>
    %cst_88 = arith.constant 1.000000e+00 : f32
    %258 = vector.broadcast %cst_88 : f32 to vector<8x128xf32>
    %259 = arith.addf %258, %257 : vector<8x128xf32>
    %260 = arith.divf %258, %259 : vector<8x128xf32>
    %261 = arith.mulf %252, %230 : vector<8x128xf32>
    %262 = arith.mulf %246, %254 : vector<8x128xf32>
    %263 = arith.addf %261, %262 : vector<8x128xf32>
    %264 = math.tanh %263 : vector<8x128xf32>
    %265 = arith.mulf %260, %264 : vector<8x128xf32>
    %c7_89 = arith.constant 7 : index
    %c0_90 = arith.constant 0 : index
    %c0_91 = arith.constant 0 : index
    %266 = vector.load %arg5[%c7_89, %c0_90, %c0_91] : memref<8x8x128xf32, #tpu.memory_space<vmem>>, vector<1x8x128xf32>
    %267 = vector.shape_cast %266 : vector<1x8x128xf32> to vector<8x128xf32>
    %268 = vector.shape_cast %265 : vector<8x128xf32> to vector<1x8x128xf32>
    tpu.vector_store %arg5[%c7_89, %c0_90, %c0_91], %268 {strides = array<i32>} : memref<8x8x128xf32, #tpu.memory_space<vmem>>, vector<1x8x128xf32>,
    %c0_92 = arith.constant 0 : index
    %c0_93 = arith.constant 0 : index
    %269 = vector.load %arg7[%c0_92, %c0_93] : memref<8x128xf32, #tpu.memory_space<vmem>>, vector<8x128xf32>
    tpu.vector_store %arg7[%c0_92, %c0_93], %265 {strides = array<i32>} : memref<8x128xf32, #tpu.memory_space<vmem>>, vector<8x128xf32>,
    %c0_94 = arith.constant 0 : index
    %c0_95 = arith.constant 0 : index
    %270 = vector.load %arg8[%c0_94, %c0_95] : memref<8x128xf32, #tpu.memory_space<vmem>>, vector<8x128xf32>
    tpu.vector_store %arg8[%c0_94, %c0_95], %263 {strides = array<i32>} : memref<8x128xf32, #tpu.memory_space<vmem>>, vector<8x128xf32>,
    %c0_i32_96 = arith.constant 0 : i32
    %271 = arith.cmpi eq, %arg0, %c0_i32_96 : i32
    %272 = arith.extui %271 : i1 to i32
    %c0_i32_97 = arith.constant 0 : i32
    %273 = arith.cmpi ne, %272, %c0_i32_97 : i32
    scf.if %273 {
      %c0_98 = arith.constant 0 : index
      %c0_99 = arith.constant 0 : index
      %274 = vector.load %arg6[%c0_98, %c0_99] : memref<8x128xf32, #tpu.memory_space<vmem>>, vector<8x128xf32>
      tpu.vector_store %arg6[%c0_98, %c0_99], %263 {strides = array<i32>} : memref<8x128xf32, #tpu.memory_space<vmem>>, vector<8x128xf32>,
    } else {
    }
    return
  }
  func.func @transform_0(%arg0: i32) -> (i32, i32, i32) {
    %c0_i32 = arith.constant 0 : i32
    %c0_i32_0 = arith.constant 0 : i32
    %c0_i32_1 = arith.constant 0 : i32
    return %arg0, %c0_i32, %c0_i32_0 : i32, i32, i32
  }
  func.func @transform_1(%arg0: i32) -> (i32, i32) {
    %c0_i32 = arith.constant 0 : i32
    %c0_i32_0 = arith.constant 0 : i32
    %c0_i32_1 = arith.constant 0 : i32
    return %c0_i32, %c0_i32_0 : i32, i32
  }
  func.func @transform_2(%arg0: i32) -> (i32, i32) {
    %c0_i32 = arith.constant 0 : i32
    %c0_i32_0 = arith.constant 0 : i32
    %c0_i32_1 = arith.constant 0 : i32
    return %c0_i32, %c0_i32_0 : i32, i32
  }
  func.func @transform_3(%arg0: i32) -> (i32, i32) {
    %c0_i32 = arith.constant 0 : i32
    %c0_i32_0 = arith.constant 0 : i32
    %c0_i32_1 = arith.constant 0 : i32
    return %c0_i32, %c0_i32_0 : i32, i32
  }
  func.func @transform_4(%arg0: i32) -> (i32, i32, i32) {
    %c0_i32 = arith.constant 0 : i32
    %c0_i32_0 = arith.constant 0 : i32
    %c0_i32_1 = arith.constant 0 : i32
    return %arg0, %c0_i32, %c0_i32_0 : i32, i32, i32
  }
  func.func @transform_5(%arg0: i32) -> (i32, i32) {
    %c0_i32 = arith.constant 0 : i32
    %c0_i32_0 = arith.constant 0 : i32
    %c0_i32_1 = arith.constant 0 : i32
    return %c0_i32, %c0_i32_0 : i32, i32
  }
}

</mosaic_0001>

<llo_original>
// kernel: lstm_forward.2
$region0: #{lstm_forward.2}
  #allocation0 [shape = 'u32[]', space=smem, size = 0x4, offset = 0x4, fixed_abs, tag = 'smem constant byte address 0x4 - core index']
  #allocation1 [shape = 'u32[144,128]{1,0:T(1,128)}', space=vmem, size = 0x12000, scoped, tag = 'internal scratch']
  #allocation2 [shape = 'f32[8,128]{1,0:T(8,128)}', space=vmem, size = 0x1000, scoped, tag = 'scratch operand']
  #allocation3 [shape = 'f32[8,128]{1,0:T(8,128)}', space=vmem, size = 0x1000, scoped, tag = 'scratch operand']
  %s0 = inlined_call_operand.vmem [shape: f32[8,8,512], index: 0, kind: input, shape index: {}]
  %s1 = inlined_call_operand.hbm [shape: f32[128,512], index: 1, kind: input, shape index: {}]
  %s2 = inlined_call_operand.vmem [shape: f32[8,128], index: 2, kind: input, shape index: {}, may-alias: {2,3}]
  %s3 = inlined_call_operand.vmem [shape: f32[8,128], index: 3, kind: input, shape index: {}, may-alias: {2,3}]
  %s4 = inlined_call_operand.vmem [shape: f32[8,8,128], index: 4, kind: output, shape index: {0}]
  %s5 = inlined_call_operand.vmem [shape: f32[8,128], index: 5, kind: output, shape index: {1}]
  %6 = xla_tuple %s4, %s5
  %s7 = sld [smem:[#allocation0]]
  $region46: #{lstm_forward.2} parent=0
    _
  %s9 = ssub.s32 1, %s7
  %s10 = scalar_select 0, %s9, %s7
  $region1: #{lstm_forward.2} parent=0
    #allocation4 [shape = 'u8[262144]{0}', space=vmem, size = 0x40000, scoped, tag = 'input window, operand 1, single buffered']
    #allocation5 [shape = 's32[1]{0}', space=sflag, size = 0x4, scoped, tag = 'scoped memory for lstm_forward.2']
    %11 = vsyncpa [#allocation5], 0
    // Predicated region
    $region2: #{lstm_forward.2} parent=1 // pred_check
      _
    $region3: #{lstm_forward.2} parent=1 // pred_check_branch
      %13 = sbr.rel (0) target = $region5
    $region4: #{lstm_forward.2} parent=1 // pred_region
      _
    $region5: #{lstm_forward.2} parent=1 // pred_fallthru
      _
    // Predicated region
    $region6: #{lstm_forward.2} parent=1 // pred_check
      _
    $region7: #{lstm_forward.2} parent=1 // pred_check_branch
      %15 = sbr.rel (0) target = $region9
    $region8: #{lstm_forward.2} parent=1 // pred_region
      %s17 = ssub.s32 8192, 8192
      %18 = vsyncadd [#allocation5], %s17
      %s19 = sshll.u32 [#allocation4], 4
      %s20 = int_to_ptr.vmem [resolvable:$true] %s19
      %25 = dma.hbm_to_vmem [thread:$0]  %s1, 8192, %s20, [#allocation5], 512, 512, 32
    $region9: #{lstm_forward.2} parent=1 // pred_fallthru
      _
    // Predicated region
    $region10: #{lstm_forward.2} parent=1 // pred_check
      _
    $region11: #{lstm_forward.2} parent=1 // pred_check_branch
      %27 = sbr.rel (0) target = $region13
    $region12: #{lstm_forward.2} parent=1 // pred_region
      _
    $region13: #{lstm_forward.2} parent=1 // pred_fallthru
      _
    // Predicated region
    $region14: #{lstm_forward.2} parent=1 // pred_check
      _
    $region15: #{lstm_forward.2} parent=1 // pred_check_branch
      %29 = sbr.rel (0) target = $region17
    $region16: #{lstm_forward.2} parent=1 // pred_region
      _
    $region17: #{lstm_forward.2} parent=1 // pred_fallthru
      _
    // Predicated region
    $region18: #{lstm_forward.2} parent=1 // pred_check
      _
    $region19: #{lstm_forward.2} parent=1 // pred_check_branch
      %31 = sbr.rel (0) target = $region21
    $region20: #{lstm_forward.2} parent=1 // pred_region
      %32 = dma.done [#allocation5], 8192
    $region21: #{lstm_forward.2} parent=1 // pred_fallthru
      _
    %p33 = scmp.eq.s32.totalorder 0, 0
    // Predicated region
    $region22: #{lstm_forward.2} parent=1 // pred_check
      %p34 = pneg %p33
    $region23: #{lstm_forward.2} parent=1 // pred_check_branch
      %36 = sbr.rel (%p34) target = $region25
    $region24: #{lstm_forward.2} parent=1 // pred_region
      %v37 = vld [vmem:[%s2] sm:$0xff]
      %38 = vst [vmem:[#allocation2] sm:$0xff] %v37
      %v39 = vld [vmem:[%s3] sm:$0xff]
      %40 = vst [vmem:[#allocation3] sm:$0xff] %v39
    $region25: #{lstm_forward.2} parent=1 // pred_fallthru
      _
    %v41 = vld [vmem:[#allocation2] sm:$0xff]
    %v42 = vld [vmem:[#allocation3] sm:$0xff]
    %v43 = vld [vmem:[%s0] sm:$0xff]
    %v44 = vld [vmem:[%s0 + $0x8] sm:$0xff]
    %v45 = vld [vmem:[%s0 + $0x10] sm:$0xff]
    %v46 = vld [vmem:[%s0 + $0x18] sm:$0xff]
    %v47 = vld [vmem:[#allocation4] sm:$0xff]
    %v48 = vld [vmem:[#allocation4 + $0x8] sm:$0xff]
    %v49 = vld [vmem:[#allocation4 + $0x10] sm:$0xff]
    %v50 = vld [vmem:[#allocation4 + $0x18] sm:$0xff]
    %v51 = vld [vmem:[#allocation4 + $0x20] sm:$0xff]
    %v52 = vld [vmem:[#allocation4 + $0x28] sm:$0xff]
    %v53 = vld [vmem:[#allocation4 + $0x30] sm:$0xff]
    %v54 = vld [vmem:[#allocation4 + $0x38] sm:$0xff]
    %v55 = vld [vmem:[#allocation4 + $0x40] sm:$0xff]
    %v56 = vld [vmem:[#allocation4 + $0x48] sm:$0xff]
    %v57 = vld [vmem:[#allocation4 + $0x50] sm:$0xff]
    %v58 = vld [vmem:[#allocation4 + $0x58] sm:$0xff]
    %v59 = vld [vmem:[#allocation4 + $0x60] sm:$0xff]
    %v60 = vld [vmem:[#allocation4 + $0x68] sm:$0xff]
    %v61 = vld [vmem:[#allocation4 + $0x70] sm:$0xff]
    %v62 = vld [vmem:[#allocation4 + $0x78] sm:$0xff]
    %v63 = vld [vmem:[#allocation4 + $0x80] sm:$0xff]
    %v64 = vld [vmem:[#allocation4 + $0x88] sm:$0xff]
    %v65 = vld [vmem:[#allocation4 + $0x90] sm:$0xff]
    %v66 = vld [vmem:[#allocation4 + $0x98] sm:$0xff]
    %v67 = vld [vmem:[#allocation4 + $0xa0] sm:$0xff]
    %v68 = vld [vmem:[#allocation4 + $0xa8] sm:$0xff]
    %v69 = vld [vmem:[#allocation4 + $0xb0] sm:$0xff]
    %v70 = vld [vmem:[#allocation4 + $0xb8] sm:$0xff]
    %v71 = vld [vmem:[#allocation4 + $0xc0] sm:$0xff]
    %v72 = vld [vmem:[#allocation4 + $0xc8] sm:$0xff]
    %v73 = vld [vmem:[#allocation4 + $0xd0] sm:$0xff]
    %v74 = vld [vmem:[#allocation4 + $0xd8] sm:$0xff]
    %v75 = vld [vmem:[#allocation4 + $0xe0] sm:$0xff]
    %v76 = vld [vmem:[#allocation4 + $0xe8] sm:$0xff]
    %v77 = vld [vmem:[#allocation4 + $0xf0] sm:$0xff]
    %v78 = vld [vmem:[#allocation4 + $0xf8] sm:$0xff]
    %v79 = vld [vmem:[#allocation4 + $0x100] sm:$0xff]
    %v80 = vld [vmem:[#allocation4 + $0x108] sm:$0xff]
    %v81 = vld [vmem:[#allocation4 + $0x110] sm:$0xff]
    %v82 = vld [vmem:[#allocation4 + $0x118] sm:$0xff]
    %v83 = vld [vmem:[#allocation4 + $0x120] sm:$0xff]
    %v84 = vld [vmem:[#allocation4 + $0x128] sm:$0xff]
    %v85 = vld [vmem:[#allocation4 + $0x130] sm:$0xff]
    %v86 = vld [vmem:[#allocation4 + $0x138] sm:$0xff]
    %v87 = vld [vmem:[#allocation4 + $0x140] sm:$0xff]
    %v88 = vld [vmem:[#allocation4 + $0x148] sm:$0xff]
    %v89 = vld [vmem:[#allocation4 + $0x150] sm:$0xff]
    %v90 = vld [vmem:[#allocation4 + $0x158] sm:$0xff]
    %v91 = vld [vmem:[#allocation4 + $0x160] sm:$0xff]
    %v92 = vld [vmem:[#allocation4 + $0x168] sm:$0xff]
    %v93 = vld [vmem:[#allocation4 + $0x170] sm:$0xff]
    %v94 = vld [vmem:[#allocation4 + $0x178] sm:$0xff]
    %v95 = vld [vmem:[#allocation4 + $0x180] sm:$0xff]
    %v96 = vld [vmem:[#allocation4 + $0x188] sm:$0xff]
    %v97 = vld [vmem:[#allocation4 + $0x190] sm:$0xff]
    %v98 = vld [vmem:[#allocation4 + $0x198] sm:$0xff]
    %v99 = vld [vmem:[#allocation4 + $0x1a0] sm:$0xff]
    %v100 = vld [vmem:[#allocation4 + $0x1a8] sm:$0xff]
    %v101 = vld [vmem:[#allocation4 + $0x1b0] sm:$0xff]
    %v102 = vld [vmem:[#allocation4 + $0x1b8] sm:$0xff]
    %v103 = vld [vmem:[#allocation4 + $0x1c0] sm:$0xff]
    %v104 = vld [vmem:[#allocation4 + $0x1c8] sm:$0xff]
    %v105 = vld [vmem:[#allocation4 + $0x1d0] sm:$0xff]
    %v106 = vld [vmem:[#allocation4 + $0x1d8] sm:$0xff]
    %v107 = vld [vmem:[#allocation4 + $0x1e0] sm:$0xff]
    %v108 = vld [vmem:[#allocation4 + $0x1e8] sm:$0xff]
    %v109 = vld [vmem:[#allocation4 + $0x1f0] sm:$0xff]
    %v110 = vld [vmem:[#allocation4 + $0x1f8] sm:$0xff]
    %111 = vmatprep.subr.mxu0 %v48
    %112 = vmatpush1.msra.mxu0 %v47
    %113 = vmatprep.subr.mxu0 %v52
    %114 = vmatpush1.msra.mxu0 %v51
    %115 = vmatprep.subr.mxu0 %v56
    %116 = vmatpush1.msra.mxu0 %v55
    %117 = vmatprep.subr.mxu0 %v60
    %118 = vmatpush1.msra.mxu0 %v59
    %119 = vmatprep.subr.mxu0 %v64
    %120 = vmatpush1.msra.mxu0 %v63
    %121 = vmatprep.subr.mxu0 %v68
    %122 = vmatpush1.msra.mxu0 %v67
    %123 = vmatprep.subr.mxu0 %v72
    %124 = vmatpush1.msra.mxu0 %v71
    %125 = vmatprep.subr.mxu0 %v76
    %126 = vmatpush1.msra.mxu0 %v75
    %127 = vmatprep.subr.mxu0 %v80
    %128 = vmatpush1.msra.mxu0 %v79
    %129 = vmatprep.subr.mxu0 %v84
    %130 = vmatpush1.msra.mxu0 %v83
    %131 = vmatprep.subr.mxu0 %v88
    %132 = vmatpush1.msra.mxu0 %v87
    %133 = vmatprep.subr.mxu0 %v92
    %134 = vmatpush1.msra.mxu0 %v91
    %135 = vmatprep.subr.mxu0 %v96
    %136 = vmatpush1.msra.mxu0 %v95
    %137 = vmatprep.subr.mxu0 %v100
    %138 = vmatpush1.msra.mxu0 %v99
    %139 = vmatprep.subr.mxu0 %v104
    %140 = vmatpush1.msra.mxu0 %v103
    %141 = vmatprep.subr.mxu0 %v108
    %142 = vmatpush1.msra.mxu0 %v107
    %143 = vmatprep.subr.mxu0 0.0
    %144 = vmatpush1.msra.mxu0 0.0
    %145 = vmatprep.subr.mxu0 0.0
    %146 = vmatpush1.msra.mxu0 0.0
    %147 = vmatprep.subr.mxu0 0.0
    %148 = vmatpush1.msra.mxu0 0.0
    %149 = vmatprep.subr.mxu0 0.0
    %150 = vmatpush1.msra.mxu0 0.0
    %151 = vmatprep.subr.mxu0 0.0
    %152 = vmatpush1.msra.mxu0 0.0
    %153 = vmatprep.subr.mxu0 0.0
    %154 = vmatpush1.msra.mxu0 0.0
    %155 = vmatprep.subr.mxu0 0.0
    %156 = vmatpush1.msra.mxu0 0.0
    %157 = vmatprep.subr.mxu0 0.0
    %158 = vmatpush1.msra.mxu0 0.0
    %159 = vmatprep.subr.mxu0 0.0
    %160 = vmatpush1.msra.mxu0 0.0
    %161 = vmatprep.subr.mxu0 0.0
    %162 = vmatpush1.msra.mxu0 0.0
    %163 = vmatprep.subr.mxu0 0.0
    %164 = vmatpush1.msra.mxu0 0.0
    %165 = vmatprep.subr.mxu0 0.0
    %166 = vmatpush1.msra.mxu0 0.0
    %167 = vmatprep.subr.mxu0 0.0
    %168 = vmatpush1.msra.mxu0 0.0
    %169 = vmatprep.subr.mxu0 0.0
    %170 = vmatpush1.msra.mxu0 0.0
    %171 = vmatprep.subr.mxu0 0.0
    %172 = vmatpush1.msra.mxu0 0.0
    %173 = vmatprep.subr.mxu0 0.0
    %174 = vmatpush1.msra.mxu0 0.0
    %175 = vmatprep.mubr.f32.mxu0 0.0
    %176 = vmatmul.mubr.f32.gmra.mrb[0].mxu0 %v41
    %v177 = vpop.f32.mrb[0].mxu0
    %v178 = vadd.f32 0.0, %v177
    %v179 = vpop.f32.mrb[0].mxu0
    %v180 = vadd.f32 0.0, %v179
    %181 = vdwg.mxu0
    %182 = vmatprep.subr.mxu0 %v50
    %183 = vmatpush1.msra.mxu0 %v49
    %184 = vmatprep.subr.mxu0 %v54
    %185 = vmatpush1.msra.mxu0 %v53
    %186 = vmatprep.subr.mxu0 %v58
    %187 = vmatpush1.msra.mxu0 %v57
    %188 = vmatprep.subr.mxu0 %v62
    %189 = vmatpush1.msra.mxu0 %v61
    %190 = vmatprep.subr.mxu0 %v66
    %191 = vmatpush1.msra.mxu0 %v65
    %192 = vmatprep.subr.mxu0 %v70
    %193 = vmatpush1.msra.mxu0 %v69
    %194 = vmatprep.subr.mxu0 %v74
    %195 = vmatpush1.msra.mxu0 %v73
    %196 = vmatprep.subr.mxu0 %v78
    %197 = vmatpush1.msra.mxu0 %v77
    %198 = vmatprep.subr.mxu0 %v82
    %199 = vmatpush1.msra.mxu0 %v81
    %200 = vmatprep.subr.mxu0 %v86
    %201 = vmatpush1.msra.mxu0 %v85
    %202 = vmatprep.subr.mxu0 %v90
    %203 = vmatpush1.msra.mxu0 %v89
    %204 = vmatprep.subr.mxu0 %v94
    %205 = vmatpush1.msra.mxu0 %v93
    %206 = vmatprep.subr.mxu0 %v98
    %207 = vmatpush1.msra.mxu0 %v97
    %208 = vmatprep.subr.mxu0 %v102
    %209 = vmatpush1.msra.mxu0 %v101
    %210 = vmatprep.subr.mxu0 %v106
    %211 = vmatpush1.msra.mxu0 %v105
    %212 = vmatprep.subr.mxu0 %v110
    %213 = vmatpush1.msra.mxu0 %v109
    %214 = vmatprep.subr.mxu0 0.0
    %215 = vmatpush1.msra.mxu0 0.0
    %216 = vmatprep.subr.mxu0 0.0
    %217 = vmatpush1.msra.mxu0 0.0
    %218 = vmatprep.subr.mxu0 0.0
    %219 = vmatpush1.msra.mxu0 0.0
    %220 = vmatprep.subr.mxu0 0.0
    %221 = vmatpush1.msra.mxu0 0.0
    %222 = vmatprep.subr.mxu0 0.0
    %223 = vmatpush1.msra.mxu0 0.0
    %224 = vmatprep.subr.mxu0 0.0
    %225 = vmatpush1.msra.mxu0 0.0
    %226 = vmatprep.subr.mxu0 0.0
    %227 = vmatpush1.msra.mxu0 0.0
    %228 = vmatprep.subr.mxu0 0.0
    %229 = vmatpush1.msra.mxu0 0.0
    %230 = vmatprep.subr.mxu0 0.0
    %231 = vmatpush1.msra.mxu0 0.0
    %232 = vmatprep.subr.mxu0 0.0
    %233 = vmatpush1.msra.mxu0 0.0
    %234 = vmatprep.subr.mxu0 0.0
    %235 = vmatpush1.msra.mxu0 0.0
    %236 = vmatprep.subr.mxu0 0.0
    %237 = vmatpush1.msra.mxu0 0.0
    %238 = vmatprep.subr.mxu0 0.0
    %239 = vmatpush1.msra.mxu0 0.0
    %240 = vmatprep.subr.mxu0 0.0
    %241 = vmatpush1.msra.mxu0 0.0
    %242 = vmatprep.subr.mxu0 0.0
    %243 = vmatpush1.msra.mxu0 0.0
    %244 = vmatprep.subr.mxu0 0.0
    %245 = vmatpush1.msra.mxu0 0.0
    %246 = vmatprep.mubr.f32.mxu0 0.0
    %247 = vmatmul.mubr.f32.gmra.mrb[0].mxu0 %v41
    %v248 = vpop.f32.mrb[0].mxu0
    %v249 = vadd.f32 0.0, %v248
    %v250 = vpop.f32.mrb[0].mxu0
    %v251 = vadd.f32 0.0, %v250
    %252 = vdwg.mxu0
    %v253 = vadd.f32 %v43, %v178
    %v254 = vadd.f32 %v44, %v180
    %v255 = vadd.f32 %v45, %v249
    %v256 = vadd.f32 %v46, %v251
    %v257 = vxor.u32 %v253, 2147483648
    %v258 = vmul.f32 %v257, 1.442695
    %v259 = vpow.pop %v258
    %v260 = vadd.f32 %v259, 1.0
    %v261 = vrcp.pop %v260
    %v262 = vmul.f32 1.0, %v261
    %v263 = vxor.u32 %v254, 2147483648
    %v264 = vmul.f32 %v263, 1.442695
    %v265 = vpow.pop %v264
    %v266 = vadd.f32 %v265, 1.0
    %v267 = vrcp.pop %v266
    %v268 = vmul.f32 1.0, %v267
    %v269 = vtanh.pop %v255
    %v270 = vxor.u32 %v256, 2147483648
    %v271 = vmul.f32 %v270, 1.442695
    %v272 = vpow.pop %v271
    %v273 = vadd.f32 %v272, 1.0
    %v274 = vrcp.pop %v273
    %v275 = vmul.f32 1.0, %v274
    %v276 = vmul.f32 %v268, %v42
    %v277 = vmul.f32 %v262, %v269
    %v278 = vadd.f32 %v276, %v277
    %v279 = vtanh.pop %v278
    %v280 = vmul.f32 %v275, %v279
    %281 = vst [vmem:[%s4] sm:$0xff] %v280
    %s282 = scalar_lea.vmem %s0, 32
    %v283 = vld [vmem:[%s282] sm:$0xff]
    %v284 = vld [vmem:[%s282 + $0x8] sm:$0xff]
    %v285 = vld [vmem:[%s282 + $0x10] sm:$0xff]
    %v286 = vld [vmem:[%s282 + $0x18] sm:$0xff]
    %v287 = vld [vmem:[#allocation4] sm:$0xff]
    %v288 = vld [vmem:[#allocation4 + $0x8] sm:$0xff]
    %v289 = vld [vmem:[#allocation4 + $0x10] sm:$0xff]
    %v290 = vld [vmem:[#allocation4 + $0x18] sm:$0xff]
    %v291 = vld [vmem:[#allocation4 + $0x20] sm:$0xff]
    %v292 = vld [vmem:[#allocation4 + $0x28] sm:$0xff]
    %v293 = vld [vmem:[#allocation4 + $0x30] sm:$0xff]
    %v294 = vld [vmem:[#allocation4 + $0x38] sm:$0xff]
    %v295 = vld [vmem:[#allocation4 + $0x40] sm:$0xff]
    %v296 = vld [vmem:[#allocation4 + $0x48] sm:$0xff]
    %v297 = vld [vmem:[#allocation4 + $0x50] sm:$0xff]
    %v298 = vld [vmem:[#allocation4 + $0x58] sm:$0xff]
    %v299 = vld [vmem:[#allocation4 + $0x60] sm:$0xff]
    %v300 = vld [vmem:[#allocation4 + $0x68] sm:$0xff]
    %v301 = vld [vmem:[#allocation4 + $0x70] sm:$0xff]
    %v302 = vld [vmem:[#allocation4 + $0x78] sm:$0xff]
    %v303 = vld [vmem:[#allocation4 + $0x80] sm:$0xff]
    %v304 = vld [vmem:[#allocation4 + $0x88] sm:$0xff]
    %v305 = vld [vmem:[#allocation4 + $0x90] sm:$0xff]
    %v306 = vld [vmem:[#allocation4 + $0x98] sm:$0xff]
    %v307 = vld [vmem:[#allocation4 + $0xa0] sm:$0xff]
    %v308 = vld [vmem:[#allocation4 + $0xa8] sm:$0xff]
    %v309 = vld [vmem:[#allocation4 + $0xb0] sm:$0xff]
    %v310 = vld [vmem:[#allocation4 + $0xb8] sm:$0xff]
    %v311 = vld [vmem:[#allocation4 + $0xc0] sm:$0xff]
    %v312 = vld [vmem:[#allocation4 + $0xc8] sm:$0xff]
    %v313 = vld [vmem:[#allocation4 + $0xd0] sm:$0xff]
    %v314 = vld [vmem:[#allocation4 + $0xd8] sm:$0xff]
    %v315 = vld [vmem:[#allocation4 + $0xe0] sm:$0xff]
    %v316 = vld [vmem:[#allocation4 + $0xe8] sm:$0xff]
    %v317 = vld [vmem:[#allocation4 + $0xf0] sm:$0xff]
    %v318 = vld [vmem:[#allocation4 + $0xf8] sm:$0xff]
    %v319 = vld [vmem:[#allocation4 + $0x100] sm:$0xff]
    %v320 = vld [vmem:[#allocation4 + $0x108] sm:$0xff]
    %v321 = vld [vmem:[#allocation4 + $0x110] sm:$0xff]
    %v322 = vld [vmem:[#allocation4 + $0x118] sm:$0xff]
    %v323 = vld [vmem:[#allocation4 + $0x120] sm:$0xff]
    %v324 = vld [vmem:[#allocation4 + $0x128] sm:$0xff]
    %v325 = vld [vmem:[#allocation4 + $0x130] sm:$0xff]
    %v326 = vld [vmem:[#allocation4 + $0x138] sm:$0xff]
    %v327 = vld [vmem:[#allocation4 + $0x140] sm:$0xff]
    %v328 = vld [vmem:[#allocation4 + $0x148] sm:$0xff]
    %v329 = vld [vmem:[#allocation4 + $0x150] sm:$0xff]
    %v330 = vld [vmem:[#allocation4 + $0x158] sm:$0xff]
    %v331 = vld [vmem:[#allocation4 + $0x160] sm:$0xff]
    %v332 = vld [vmem:[#allocation4 + $0x168] sm:$0xff]
    %v333 = vld [vmem:[#allocation4 + $0x170] sm:$0xff]
    %v334 = vld [vmem:[#allocation4 + $0x178] sm:$0xff]
    %v335 = vld [vmem:[#allocation4 + $0x180] sm:$0xff]
    %v336 = vld [vmem:[#allocation4 + $0x188] sm:$0xff]
    %v337 = vld [vmem:[#allocation4 + $0x190] sm:$0xff]
    %v338 = vld [vmem:[#allocation4 + $0x198] sm:$0xff]
    %v339 = vld [vmem:[#allocation4 + $0x1a0] sm:$0xff]
    %v340 = vld [vmem:[#allocation4 + $0x1a8] sm:$0xff]
    %v341 = vld [vmem:[#allocation4 + $0x1b0] sm:$0xff]
    %v342 = vld [vmem:[#allocation4 + $0x1b8] sm:$0xff]
    %v343 = vld [vmem:[#allocation4 + $0x1c0] sm:$0xff]
    %v344 = vld [vmem:[#allocation4 + $0x1c8] sm:$0xff]
    %v345 = vld [vmem:[#allocation4 + $0x1d0] sm:$0xff]
    %v346 = vld [vmem:[#allocation4 + $0x1d8] sm:$0xff]
    %v347 = vld [vmem:[#allocation4 + $0x1e0] sm:$0xff]
    %v348 = vld [vmem:[#allocation4 + $0x1e8] sm:$0xff]
    %v349 = vld [vmem:[#allocation4 + $0x1f0] sm:$0xff]
    %v350 = vld [vmem:[#allocation4 + $0x1f8] sm:$0xff]
    %351 = vmatprep.subr.mxu0 %v288
    %352 = vmatpush1.msra.mxu0 %v287
    %353 = vmatprep.subr.mxu0 %v292
    %354 = vmatpush1.msra.mxu0 %v291
    %355 = vmatprep.subr.mxu0 %v296
    %356 = vmatpush1.msra.mxu0 %v295
    %357 = vmatprep.subr.mxu0 %v300
    %358 = vmatpush1.msra.mxu0 %v299
    %359 = vmatprep.subr.mxu0 %v304
    %360 = vmatpush1.msra.mxu0 %v303
    %361 = vmatprep.subr.mxu0 %v308
    %362 = vmatpush1.msra.mxu0 %v307
    %363 = vmatprep.subr.mxu0 %v312
    %364 = vmatpush1.msra.mxu0 %v311
    %365 = vmatprep.subr.mxu0 %v316
    %366 = vmatpush1.msra.mxu0 %v315
    %367 = vmatprep.subr.mxu0 %v320
    %368 = vmatpush1.msra.mxu0 %v319
    %369 = vmatprep.subr.mxu0 %v324
    %370 = vmatpush1.msra.mxu0 %v323
    %371 = vmatprep.subr.mxu0 %v328
    %372 = vmatpush1.msra.mxu0 %v327
    %373 = vmatprep.subr.mxu0 %v332
    %374 = vmatpush1.msra.mxu0 %v331
    %375 = vmatprep.subr.mxu0 %v336
    %376 = vmatpush1.msra.mxu0 %v335
    %377 = vmatprep.subr.mxu0 %v340
    %378 = vmatpush1.msra.mxu0 %v339
    %379 = vmatprep.subr.mxu0 %v344
    %380 = vmatpush1.msra.mxu0 %v343
    %381 = vmatprep.subr.mxu0 %v348
    %382 = vmatpush1.msra.mxu0 %v347
    %383 = vmatprep.subr.mxu0 0.0
    %384 = vmatpush1.msra.mxu0 0.0
    %385 = vmatprep.subr.mxu0 0.0
    %386 = vmatpush1.msra.mxu0 0.0
    %387 = vmatprep.subr.mxu0 0.0
    %388 = vmatpush1.msra.mxu0 0.0
    %389 = vmatprep.subr.mxu0 0.0
    %390 = vmatpush1.msra.mxu0 0.0
    %391 = vmatprep.subr.mxu0 0.0
    %392 = vmatpush1.msra.mxu0 0.0
    %393 = vmatprep.subr.mxu0 0.0
    %394 = vmatpush1.msra.mxu0 0.0
    %395 = vmatprep.subr.mxu0 0.0
    %396 = vmatpush1.msra.mxu0 0.0
    %397 = vmatprep.subr.mxu0 0.0
    %398 = vmatpush1.msra.mxu0 0.0
    %399 = vmatprep.subr.mxu0 0.0
    %400 = vmatpush1.msra.mxu0 0.0
    %401 = vmatprep.subr.mxu0 0.0
    %402 = vmatpush1.msra.mxu0 0.0
    %403 = vmatprep.subr.mxu0 0.0
    %404 = vmatpush1.msra.mxu0 0.0
    %405 = vmatprep.subr.mxu0 0.0
    %406 = vmatpush1.msra.mxu0 0.0
    %407 = vmatprep.subr.mxu0 0.0
    %408 = vmatpush1.msra.mxu0 0.0
    %409 = vmatprep.subr.mxu0 0.0
    %410 = vmatpush1.msra.mxu0 0.0
    %411 = vmatprep.subr.mxu0 0.0
    %412 = vmatpush1.msra.mxu0 0.0
    %413 = vmatprep.subr.mxu0 0.0
    %414 = vmatpush1.msra.mxu0 0.0
    %415 = vmatprep.mubr.f32.mxu0 0.0
    %416 = vmatmul.mubr.f32.gmra.mrb[0].mxu0 %v280
    %v417 = vpop.f32.mrb[0].mxu0
    %v418 = vadd.f32 0.0, %v417
    %v419 = vpop.f32.mrb[0].mxu0
    %v420 = vadd.f32 0.0, %v419
    %421 = vdwg.mxu0
    %422 = vmatprep.subr.mxu0 %v290
    %423 = vmatpush1.msra.mxu0 %v289
    %424 = vmatprep.subr.mxu0 %v294
    %425 = vmatpush1.msra.mxu0 %v293
    %426 = vmatprep.subr.mxu0 %v298
    %427 = vmatpush1.msra.mxu0 %v297
    %428 = vmatprep.subr.mxu0 %v302
    %429 = vmatpush1.msra.mxu0 %v301
    %430 = vmatprep.subr.mxu0 %v306
    %431 = vmatpush1.msra.mxu0 %v305
    %432 = vmatprep.subr.mxu0 %v310
    %433 = vmatpush1.msra.mxu0 %v309
    %434 = vmatprep.subr.mxu0 %v314
    %435 = vmatpush1.msra.mxu0 %v313
    %436 = vmatprep.subr.mxu0 %v318
    %437 = vmatpush1.msra.mxu0 %v317
    %438 = vmatprep.subr.mxu0 %v322
    %439 = vmatpush1.msra.mxu0 %v321
    %440 = vmatprep.subr.mxu0 %v326
    %441 = vmatpush1.msra.mxu0 %v325
    %442 = vmatprep.subr.mxu0 %v330
    %443 = vmatpush1.msra.mxu0 %v329
    %444 = vmatprep.subr.mxu0 %v334
    %445 = vmatpush1.msra.mxu0 %v333
    %446 = vmatprep.subr.mxu0 %v338
    %447 = vmatpush1.msra.mxu0 %v337
    %448 = vmatprep.subr.mxu0 %v342
    %449 = vmatpush1.msra.mxu0 %v341
    %450 = vmatprep.subr.mxu0 %v346
    %451 = vmatpush1.msra.mxu0 %v345
    %452 = vmatprep.subr.mxu0 %v350
    %453 = vmatpush1.msra.mxu0 %v349
    %454 = vmatprep.subr.mxu0 0.0
    %455 = vmatpush1.msra.mxu0 0.0
    %456 = vmatprep.subr.mxu0 0.0
    %457 = vmatpush1.msra.mxu0 0.0
    %458 = vmatprep.subr.mxu0 0.0
    %459 = vmatpush1.msra.mxu0 0.0
    %460 = vmatprep.subr.mxu0 0.0
    %461 = vmatpush1.msra.mxu0 0.0
    %462 = vmatprep.subr.mxu0 0.0
    %463 = vmatpush1.msra.mxu0 0.0
    %464 = vmatprep.subr.mxu0 0.0
    %465 = vmatpush1.msra.mxu0 0.0
    %466 = vmatprep.subr.mxu0 0.0
    %467 = vmatpush1.msra.mxu0 0.0
    %468 = vmatprep.subr.mxu0 0.0
    %469 = vmatpush1.msra.mxu0 0.0
    %470 = vmatprep.subr.mxu0 0.0
    %471 = vmatpush1.msra.mxu0 0.0
    %472 = vmatprep.subr.mxu0 0.0
    %473 = vmatpush1.msra.mxu0 0.0
    %474 = vmatprep.subr.mxu0 0.0
    %475 = vmatpush1.msra.mxu0 0.0
    %476 = vmatprep.subr.mxu0 0.0
    %477 = vmatpush1.msra.mxu0 0.0
    %478 = vmatprep.subr.mxu0 0.0
    %479 = vmatpush1.msra.mxu0 0.0
    %480 = vmatprep.subr.mxu0 0.0
    %481 = vmatpush1.msra.mxu0 0.0
    %482 = vmatprep.subr.mxu0 0.0
    %483 = vmatpush1.msra.mxu0 0.0
    %484 = vmatprep.subr.mxu0 0.0
    %485 = vmatpush1.msra.mxu0 0.0
    %486 = vmatprep.mubr.f32.mxu0 0.0
    %487 = vmatmul.mubr.f32.gmra.mrb[0].mxu0 %v280
    %v488 = vpop.f32.mrb[0].mxu0
    %v489 = vadd.f32 0.0, %v488
    %v490 = vpop.f32.mrb[0].mxu0
    %v491 = vadd.f32 0.0, %v490
    %492 = vdwg.mxu0
    %v493 = vadd.f32 %v283, %v418
    %v494 = vadd.f32 %v284, %v420
    %v495 = vadd.f32 %v285, %v489
    %v496 = vadd.f32 %v286, %v491
    %v497 = vxor.u32 %v493, 2147483648
    %v498 = vmul.f32 %v497, 1.442695
    %v499 = vpow.pop %v498
    %v500 = vadd.f32 %v499, 1.0
    %v501 = vrcp.pop %v500
    %v502 = vmul.f32 1.0, %v501
    %v503 = vxor.u32 %v494, 2147483648
    %v504 = vmul.f32 %v503, 1.442695
    %v505 = vpow.pop %v504
    %v506 = vadd.f32 %v505, 1.0
    %v507 = vrcp.pop %v506
    %v508 = vmul.f32 1.0, %v507
    %v509 = vtanh.pop %v495
    %v510 = vxor.u32 %v496, 2147483648
    %v511 = vmul.f32 %v510, 1.442695
    %v512 = vpow.pop %v511
    %v513 = vadd.f32 %v512, 1.0
    %v514 = vrcp.pop %v513
    %v515 = vmul.f32 1.0, %v514
    %v516 = vmul.f32 %v508, %v278
    %v517 = vmul.f32 %v502, %v509
    %v518 = vadd.f32 %v516, %v517
    %v519 = vtanh.pop %v518
    %v520 = vmul.f32 %v515, %v519
    %s521 = scalar_lea.vmem %s4, 8
    %522 = vst [vmem:[%s521] sm:$0xff] %v520
    %s523 = scalar_lea.vmem %s0, 64
    %v524 = vld [vmem:[%s523] sm:$0xff]
    %v525 = vld [vmem:[%s523 + $0x8] sm:$0xff]
    %v526 = vld [vmem:[%s523 + $0x10] sm:$0xff]
    %v527 = vld [vmem:[%s523 + $0x18] sm:$0xff]
    %v528 = vld [vmem:[#allocation4] sm:$0xff]
    %v529 = vld [vmem:[#allocation4 + $0x8] sm:$0xff]
    %v530 = vld [vmem:[#allocation4 + $0x10] sm:$0xff]
    %v531 = vld [vmem:[#allocation4 + $0x18] sm:$0xff]
    %v532 = vld [vmem:[#allocation4 + $0x20] sm:$0xff]
    %v533 = vld [vmem:[#allocation4 + $0x28] sm:$0xff]
    %v534 = vld [vmem:[#allocation4 + $0x30] sm:$0xff]
    %v535 = vld [vmem:[#allocation4 + $0x38] sm:$0xff]
    %v536 = vld [vmem:[#allocation4 + $0x40] sm:$0xff]
    %v537 = vld [vmem:[#allocation4 + $0x48] sm:$0xff]
    %v538 = vld [vmem:[#allocation4 + $0x50] sm:$0xff]
    %v539 = vld [vmem:[#allocation4 + $0x58] sm:$0xff]
    %v540 = vld [vmem:[#allocation4 + $0x60] sm:$0xff]
    %v541 = vld [vmem:[#allocation4 + $0x68] sm:$0xff]
    %v542 = vld [vmem:[#allocation4 + $0x70] sm:$0xff]
    %v543 = vld [vmem:[#allocation4 + $0x78] sm:$0xff]
    %v544 = vld [vmem:[#allocation4 + $0x80] sm:$0xff]
    %v545 = vld [vmem:[#allocation4 + $0x88] sm:$0xff]
    %v546 = vld [vmem:[#allocation4 + $0x90] sm:$0xff]
    %v547 = vld [vmem:[#allocation4 + $0x98] sm:$0xff]
    %v548 = vld [vmem:[#allocation4 + $0xa0] sm:$0xff]
    %v549 = vld [vmem:[#allocation4 + $0xa8] sm:$0xff]
    %v550 = vld [vmem:[#allocation4 + $0xb0] sm:$0xff]
    %v551 = vld [vmem:[#allocation4 + $0xb8] sm:$0xff]
    %v552 = vld [vmem:[#allocation4 + $0xc0] sm:$0xff]
    %v553 = vld [vmem:[#allocation4 + $0xc8] sm:$0xff]
    %v554 = vld [vmem:[#allocation4 + $0xd0] sm:$0xff]
    %v555 = vld [vmem:[#allocation4 + $0xd8] sm:$0xff]
    %v556 = vld [vmem:[#allocation4 + $0xe0] sm:$0xff]
    %v557 = vld [vmem:[#allocation4 + $0xe8] sm:$0xff]
    %v558 = vld [vmem:[#allocation4 + $0xf0] sm:$0xff]
    %v559 = vld [vmem:[#allocation4 + $0xf8] sm:$0xff]
    %v560 = vld [vmem:[#allocation4 + $0x100] sm:$0xff]
    %v561 = vld [vmem:[#allocation4 + $0x108] sm:$0xff]
    %v562 = vld [vmem:[#allocation4 + $0x110] sm:$0xff]
    %v563 = vld [vmem:[#allocation4 + $0x118] sm:$0xff]
    %v564 = vld [vmem:[#allocation4 + $0x120] sm:$0xff]
    %v565 = vld [vmem:[#allocation4 + $0x128] sm:$0xff]
    %v566 = vld [vmem:[#allocation4 + $0x130] sm:$0xff]
    %v567 = vld [vmem:[#allocation4 + $0x138] sm:$0xff]
    %v568 = vld [vmem:[#allocation4 + $0x140] sm:$0xff]
    %v569 = vld [vmem:[#allocation4 + $0x148] sm:$0xff]
    %v570 = vld [vmem:[#allocation4 + $0x150] sm:$0xff]
    %v571 = vld [vmem:[#allocation4 + $0x158] sm:$0xff]
    %v572 = vld [vmem:[#allocation4 + $0x160] sm:$0xff]
    %v573 = vld [vmem:[#allocation4 + $0x168] sm:$0xff]
    %v574 = vld [vmem:[#allocation4 + $0x170] sm:$0xff]
    %v575 = vld [vmem:[#allocation4 + $0x178] sm:$0xff]
    %v576 = vld [vmem:[#allocation4 + $0x180] sm:$0xff]
    %v577 = vld [vmem:[#allocation4 + $0x188] sm:$0xff]
    %v578 = vld [vmem:[#allocation4 + $0x190] sm:$0xff]
    %v579 = vld [vmem:[#allocation4 + $0x198] sm:$0xff]
    %v580 = vld [vmem:[#allocation4 + $0x1a0] sm:$0xff]
    %v581 = vld [vmem:[#allocation4 + $0x1a8] sm:$0xff]
    %v582 = vld [vmem:[#allocation4 + $0x1b0] sm:$0xff]
    %v583 = vld [vmem:[#allocation4 + $0x1b8] sm:$0xff]
    %v584 = vld [vmem:[#allocation4 + $0x1c0] sm:$0xff]
    %v585 = vld [vmem:[#allocation4 + $0x1c8] sm:$0xff]
    %v586 = vld [vmem:[#allocation4 + $0x1d0] sm:$0xff]
    %v587 = vld [vmem:[#allocation4 + $0x1d8] sm:$0xff]
    %v588 = vld [vmem:[#allocation4 + $0x1e0] sm:$0xff]
    %v589 = vld [vmem:[#allocation4 + $0x1e8] sm:$0xff]
    %v590 = vld [vmem:[#allocation4 + $0x1f0] sm:$0xff]
    %v591 = vld [vmem:[#allocation4 + $0x1f8] sm:$0xff]
    %592 = vmatprep.subr.mxu0 %v529
    %593 = vmatpush1.msra.mxu0 %v528
    %594 = vmatprep.subr.mxu0 %v533
    %595 = vmatpush1.msra.mxu0 %v532
    %596 = vmatprep.subr.mxu0 %v537
    %597 = vmatpush1.msra.mxu0 %v536
    %598 = vmatprep.subr.mxu0 %v541
    %599 = vmatpush1.msra.mxu0 %v540
    %600 = vmatprep.subr.mxu0 %v545
    %601 = vmatpush1.msra.mxu0 %v544
    %602 = vmatprep.subr.mxu0 %v549
    %603 = vmatpush1.msra.mxu0 %v548
    %604 = vmatprep.subr.mxu0 %v553
    %605 = vmatpush1.msra.mxu0 %v552
    %606 = vmatprep.subr.mxu0 %v557
    %607 = vmatpush1.msra.mxu0 %v556
    %608 = vmatprep.subr.mxu0 %v561
    %609 = vmatpush1.msra.mxu0 %v560
    %610 = vmatprep.subr.mxu0 %v565
    %611 = vmatpush1.msra.mxu0 %v564
    %612 = vmatprep.subr.mxu0 %v569
    %613 = vmatpush1.msra.mxu0 %v568
    %614 = vmatprep.subr.mxu0 %v573
    %615 = vmatpush1.msra.mxu0 %v572
    %616 = vmatprep.subr.mxu0 %v577
    %617 = vmatpush1.msra.mxu0 %v576
    %618 = vmatprep.subr.mxu0 %v581
    %619 = vmatpush1.msra.mxu0 %v580
    %620 = vmatprep.subr.mxu0 %v585
    %621 = vmatpush1.msra.mxu0 %v584
    %622 = vmatprep.subr.mxu0 %v589
    %623 = vmatpush1.msra.mxu0 %v588
    %624 = vmatprep.subr.mxu0 0.0
    %625 = vmatpush1.msra.mxu0 0.0
    %626 = vmatprep.subr.mxu0 0.0
    %627 = vmatpush1.msra.mxu0 0.0
    %628 = vmatprep.subr.mxu0 0.0
    %629 = vmatpush1.msra.mxu0 0.0
    %630 = vmatprep.subr.mxu0 0.0
    %631 = vmatpush1.msra.mxu0 0.0
    %632 = vmatprep.subr.mxu0 0.0
    %633 = vmatpush1.msra.mxu0 0.0
    %634 = vmatprep.subr.mxu0 0.0
    %635 = vmatpush1.msra.mxu0 0.0
    %636 = vmatprep.subr.mxu0 0.0
    %637 = vmatpush1.msra.mxu0 0.0
    %638 = vmatprep.subr.mxu0 0.0
    %639 = vmatpush1.msra.mxu0 0.0
    %640 = vmatprep.subr.mxu0 0.0
    %641 = vmatpush1.msra.mxu0 0.0
    %642 = vmatprep.subr.mxu0 0.0
    %643 = vmatpush1.msra.mxu0 0.0
    %644 = vmatprep.subr.mxu0 0.0
    %645 = vmatpush1.msra.mxu0 0.0
    %646 = vmatprep.subr.mxu0 0.0
    %647 = vmatpush1.msra.mxu0 0.0
    %648 = vmatprep.subr.mxu0 0.0
    %649 = vmatpush1.msra.mxu0 0.0
    %650 = vmatprep.subr.mxu0 0.0
    %651 = vmatpush1.msra.mxu0 0.0
    %652 = vmatprep.subr.mxu0 0.0
    %653 = vmatpush1.msra.mxu0 0.0
    %654 = vmatprep.subr.mxu0 0.0
    %655 = vmatpush1.msra.mxu0 0.0
    %656 = vmatprep.mubr.f32.mxu0 0.0
    %657 = vmatmul.mubr.f32.gmra.mrb[0].mxu0 %v520
    %v658 = vpop.f32.mrb[0].mxu0
    %v659 = vadd.f32 0.0, %v658
    %v660 = vpop.f32.mrb[0].mxu0
    %v661 = vadd.f32 0.0, %v660
    %662 = vdwg.mxu0
    %663 = vmatprep.subr.mxu0 %v531
    %664 = vmatpush1.msra.mxu0 %v530
    %665 = vmatprep.subr.mxu0 %v535
    %666 = vmatpush1.msra.mxu0 %v534
    %667 = vmatprep.subr.mxu0 %v539
    %668 = vmatpush1.msra.mxu0 %v538
    %669 = vmatprep.subr.mxu0 %v543
    %670 = vmatpush1.msra.mxu0 %v542
    %671 = vmatprep.subr.mxu0 %v547
    %672 = vmatpush1.msra.mxu0 %v546
    %673 = vmatprep.subr.mxu0 %v551
    %674 = vmatpush1.msra.mxu0 %v550
    %675 = vmatprep.subr.mxu0 %v555
    %676 = vmatpush1.msra.mxu0 %v554
    %677 = vmatprep.subr.mxu0 %v559
    %678 = vmatpush1.msra.mxu0 %v558
    %679 = vmatprep.subr.mxu0 %v563
    %680 = vmatpush1.msra.mxu0 %v562
    %681 = vmatprep.subr.mxu0 %v567
    %682 = vmatpush1.msra.mxu0 %v566
    %683 = vmatprep.subr.mxu0 %v571
    %684 = vmatpush1.msra.mxu0 %v570
    %685 = vmatprep.subr.mxu0 %v575
    %686 = vmatpush1.msra.mxu0 %v574
    %687 = vmatprep.subr.mxu0 %v579
    %688 = vmatpush1.msra.mxu0 %v578
    %689 = vmatprep.subr.mxu0 %v583
    %690 = vmatpush1.msra.mxu0 %v582
    %691 = vmatprep.subr.mxu0 %v587
    %692 = vmatpush1.msra.mxu0 %v586
    %693 = vmatprep.subr.mxu0 %v591
    %694 = vmatpush1.msra.mxu0 %v590
    %695 = vmatprep.subr.mxu0 0.0
    %696 = vmatpush1.msra.mxu0 0.0
    %697 = vmatprep.subr.mxu0 0.0
    %698 = vmatpush1.msra.mxu0 0.0
    %699 = vmatprep.subr.mxu0 0.0
    %700 = vmatpush1.msra.mxu0 0.0
    %701 = vmatprep.subr.mxu0 0.0
    %702 = vmatpush1.msra.mxu0 0.0
    %703 = vmatprep.subr.mxu0 0.0
    %704 = vmatpush1.msra.mxu0 0.0
    %705 = vmatprep.subr.mxu0 0.0
    %706 = vmatpush1.msra.mxu0 0.0
    %707 = vmatprep.subr.mxu0 0.0
    %708 = vmatpush1.msra.mxu0 0.0
    %709 = vmatprep.subr.mxu0 0.0
    %710 = vmatpush1.msra.mxu0 0.0
    %711 = vmatprep.subr.mxu0 0.0
    %712 = vmatpush1.msra.mxu0 0.0
    %713 = vmatprep.subr.mxu0 0.0
    %714 = vmatpush1.msra.mxu0 0.0
    %715 = vmatprep.subr.mxu0 0.0
    %716 = vmatpush1.msra.mxu0 0.0
    %717 = vmatprep.subr.mxu0 0.0
    %718 = vmatpush1.msra.mxu0 0.0
    %719 = vmatprep.subr.mxu0 0.0
    %720 = vmatpush1.msra.mxu0 0.0
    %721 = vmatprep.subr.mxu0 0.0
    %722 = vmatpush1.msra.mxu0 0.0
    %723 = vmatprep.subr.mxu0 0.0
    %724 = vmatpush1.msra.mxu0 0.0
    %725 = vmatprep.subr.mxu0 0.0
    %726 = vmatpush1.msra.mxu0 0.0
    %727 = vmatprep.mubr.f32.mxu0 0.0
    %728 = vmatmul.mubr.f32.gmra.mrb[0].mxu0 %v520
    %v729 = vpop.f32.mrb[0].mxu0
    %v730 = vadd.f32 0.0, %v729
    %v731 = vpop.f32.mrb[0].mxu0
    %v732 = vadd.f32 0.0, %v731
    %733 = vdwg.mxu0
    %v734 = vadd.f32 %v524, %v659
    %v735 = vadd.f32 %v525, %v661
    %v736 = vadd.f32 %v526, %v730
    %v737 = vadd.f32 %v527, %v732
    %v738 = vxor.u32 %v734, 2147483648
    %v739 = vmul.f32 %v738, 1.442695
    %v740 = vpow.pop %v739
    %v741 = vadd.f32 %v740, 1.0
    %v742 = vrcp.pop %v741
    %v743 = vmul.f32 1.0, %v742
    %v744 = vxor.u32 %v735, 2147483648
    %v745 = vmul.f32 %v744, 1.442695
    %v746 = vpow.pop %v745
    %v747 = vadd.f32 %v746, 1.0
    %v748 = vrcp.pop %v747
    %v749 = vmul.f32 1.0, %v748
    %v750 = vtanh.pop %v736
    %v751 = vxor.u32 %v737, 2147483648
    %v752 = vmul.f32 %v751, 1.442695
    %v753 = vpow.pop %v752
    %v754 = vadd.f32 %v753, 1.0
    %v755 = vrcp.pop %v754
    %v756 = vmul.f32 1.0, %v755
    %v757 = vmul.f32 %v749, %v518
    %v758 = vmul.f32 %v743, %v750
    %v759 = vadd.f32 %v757, %v758
    %v760 = vtanh.pop %v759
    %v761 = vmul.f32 %v756, %v760
    %s762 = scalar_lea.vmem %s4, 16
    %763 = vst [vmem:[%s762] sm:$0xff] %v761
    %s764 = scalar_lea.vmem %s0, 96
    %v765 = vld [vmem:[%s764] sm:$0xff]
    %v766 = vld [vmem:[%s764 + $0x8] sm:$0xff]
    %v767 = vld [vmem:[%s764 + $0x10] sm:$0xff]
    %v768 = vld [vmem:[%s764 + $0x18] sm:$0xff]
    %v769 = vld [vmem:[#allocation4] sm:$0xff]
    %v770 = vld [vmem:[#allocation4 + $0x8] sm:$0xff]
    %v771 = vld [vmem:[#allocation4 + $0x10] sm:$0xff]
    %v772 = vld [vmem:[#allocation4 + $0x18] sm:$0xff]
    %v773 = vld [vmem:[#allocation4 + $0x20] sm:$0xff]
    %v774 = vld [vmem:[#allocation4 + $0x28] sm:$0xff]
    %v775 = vld [vmem:[#allocation4 + $0x30] sm:$0xff]
    %v776 = vld [vmem:[#allocation4 + $0x38] sm:$0xff]
    %v777 = vld [vmem:[#allocation4 + $0x40] sm:$0xff]
    %v778 = vld [vmem:[#allocation4 + $0x48] sm:$0xff]
    %v779 = vld [vmem:[#allocation4 + $0x50] sm:$0xff]
    %v780 = vld [vmem:[#allocation4 + $0x58] sm:$0xff]
    %v781 = vld [vmem:[#allocation4 + $0x60] sm:$0xff]
    %v782 = vld [vmem:[#allocation4 + $0x68] sm:$0xff]
    %v783 = vld [vmem:[#allocation4 + $0x70] sm:$0xff]
    %v784 = vld [vmem:[#allocation4 + $0x78] sm:$0xff]
    %v785 = vld [vmem:[#allocation4 + $0x80] sm:$0xff]
    %v786 = vld [vmem:[#allocation4 + $0x88] sm:$0xff]
    %v787 = vld [vmem:[#allocation4 + $0x90] sm:$0xff]
    %v788 = vld [vmem:[#allocation4 + $0x98] sm:$0xff]
    %v789 = vld [vmem:[#allocation4 + $0xa0] sm:$0xff]
    %v790 = vld [vmem:[#allocation4 + $0xa8] sm:$0xff]
    %v791 = vld [vmem:[#allocation4 + $0xb0] sm:$0xff]
    %v792 = vld [vmem:[#allocation4 + $0xb8] sm:$0xff]
    %v793 = vld [vmem:[#allocation4 + $0xc0] sm:$0xff]
    %v794 = vld [vmem:[#allocation4 + $0xc8] sm:$0xff]
    %v795 = vld [vmem:[#allocation4 + $0xd0] sm:$0xff]
    %v796 = vld [vmem:[#allocation4 + $0xd8] sm:$0xff]
    %v797 = vld [vmem:[#allocation4 + $0xe0] sm:$0xff]
    %v798 = vld [vmem:[#allocation4 + $0xe8] sm:$0xff]
    %v799 = vld [vmem:[#allocation4 + $0xf0] sm:$0xff]
    %v800 = vld [vmem:[#allocation4 + $0xf8] sm:$0xff]
    %v801 = vld [vmem:[#allocation4 + $0x100] sm:$0xff]
    %v802 = vld [vmem:[#allocation4 + $0x108] sm:$0xff]
    %v803 = vld [vmem:[#allocation4 + $0x110] sm:$0xff]
    %v804 = vld [vmem:[#allocation4 + $0x118] sm:$0xff]
    %v805 = vld [vmem:[#allocation4 + $0x120] sm:$0xff]
    %v806 = vld [vmem:[#allocation4 + $0x128] sm:$0xff]
    %v807 = vld [vmem:[#allocation4 + $0x130] sm:$0xff]
    %v808 = vld [vmem:[#allocation4 + $0x138] sm:$0xff]
    %v809 = vld [vmem:[#allocation4 + $0x140] sm:$0xff]
    %v810 = vld [vmem:[#allocation4 + $0x148] sm:$0xff]
    %v811 = vld [vmem:[#allocation4 + $0x150] sm:$0xff]
    %v812 = vld [vmem:[#allocation4 + $0x158] sm:$0xff]
    %v813 = vld [vmem:[#allocation4 + $0x160] sm:$0xff]
    %v814 = vld [vmem:[#allocation4 + $0x168] sm:$0xff]
    %v815 = vld [vmem:[#allocation4 + $0x170] sm:$0xff]
    %v816 = vld [vmem:[#allocation4 + $0x178] sm:$0xff]
    %v817 = vld [vmem:[#allocation4 + $0x180] sm:$0xff]
    %v818 = vld [vmem:[#allocation4 + $0x188] sm:$0xff]
    %v819 = vld [vmem:[#allocation4 + $0x190] sm:$0xff]
    %v820 = vld [vmem:[#allocation4 + $0x198] sm:$0xff]
    %v821 = vld [vmem:[#allocation4 + $0x1a0] sm:$0xff]
    %v822 = vld [vmem:[#allocation4 + $0x1a8] sm:$0xff]
    %v823 = vld [vmem:[#allocation4 + $0x1b0] sm:$0xff]
    %v824 = vld [vmem:[#allocation4 + $0x1b8] sm:$0xff]
    %v825 = vld [vmem:[#allocation4 + $0x1c0] sm:$0xff]
    %v826 = vld [vmem:[#allocation4 + $0x1c8] sm:$0xff]
    %v827 = vld [vmem:[#allocation4 + $0x1d0] sm:$0xff]
    %v828 = vld [vmem:[#allocation4 + $0x1d8] sm:$0xff]
    %v829 = vld [vmem:[#allocation4 + $0x1e0] sm:$0xff]
    %v830 = vld [vmem:[#allocation4 + $0x1e8] sm:$0xff]
    %v831 = vld [vmem:[#allocation4 + $0x1f0] sm:$0xff]
    %v832 = vld [vmem:[#allocation4 + $0x1f8] sm:$0xff]
    %833 = vmatprep.subr.mxu0 %v770
    %834 = vmatpush1.msra.mxu0 %v769
    %835 = vmatprep.subr.mxu0 %v774
    %836 = vmatpush1.msra.mxu0 %v773
    %837 = vmatprep.subr.mxu0 %v778
    %838 = vmatpush1.msra.mxu0 %v777
    %839 = vmatprep.subr.mxu0 %v782
    %840 = vmatpush1.msra.mxu0 %v781
    %841 = vmatprep.subr.mxu0 %v786
    %842 = vmatpush1.msra.mxu0 %v785
    %843 = vmatprep.subr.mxu0 %v790
    %844 = vmatpush1.msra.mxu0 %v789
    %845 = vmatprep.subr.mxu0 %v794
    %846 = vmatpush1.msra.mxu0 %v793
    %847 = vmatprep.subr.mxu0 %v798
    %848 = vmatpush1.msra.mxu0 %v797
    %849 = vmatprep.subr.mxu0 %v802
    %850 = vmatpush1.msra.mxu0 %v801
    %851 = vmatprep.subr.mxu0 %v806
    %852 = vmatpush1.msra.mxu0 %v805
    %853 = vmatprep.subr.mxu0 %v810
    %854 = vmatpush1.msra.mxu0 %v809
    %855 = vmatprep.subr.mxu0 %v814
    %856 = vmatpush1.msra.mxu0 %v813
    %857 = vmatprep.subr.mxu0 %v818
    %858 = vmatpush1.msra.mxu0 %v817
    %859 = vmatprep.subr.mxu0 %v822
    %860 = vmatpush1.msra.mxu0 %v821
    %861 = vmatprep.subr.mxu0 %v826
    %862 = vmatpush1.msra.mxu0 %v825
    %863 = vmatprep.subr.mxu0 %v830
    %864 = vmatpush1.msra.mxu0 %v829
    %865 = vmatprep.subr.mxu0 0.0
    %866 = vmatpush1.msra.mxu0 0.0
    %867 = vmatprep.subr.mxu0 0.0
    %868 = vmatpush1.msra.mxu0 0.0
    %869 = vmatprep.subr.mxu0 0.0
    %870 = vmatpush1.msra.mxu0 0.0
    %871 = vmatprep.subr.mxu0 0.0
    %872 = vmatpush1.msra.mxu0 0.0
    %873 = vmatprep.subr.mxu0 0.0
    %874 = vmatpush1.msra.mxu0 0.0
    %875 = vmatprep.subr.mxu0 0.0
    %876 = vmatpush1.msra.mxu0 0.0
    %877 = vmatprep.subr.mxu0 0.0
    %878 = vmatpush1.msra.mxu0 0.0
    %879 = vmatprep.subr.mxu0 0.0
    %880 = vmatpush1.msra.mxu0 0.0
    %881 = vmatprep.subr.mxu0 0.0
    %882 = vmatpush1.msra.mxu0 0.0
    %883 = vmatprep.subr.mxu0 0.0
    %884 = vmatpush1.msra.mxu0 0.0
    %885 = vmatprep.subr.mxu0 0.0
    %886 = vmatpush1.msra.mxu0 0.0
    %887 = vmatprep.subr.mxu0 0.0
    %888 = vmatpush1.msra.mxu0 0.0
    %889 = vmatprep.subr.mxu0 0.0
    %890 = vmatpush1.msra.mxu0 0.0
    %891 = vmatprep.subr.mxu0 0.0
    %892 = vmatpush1.msra.mxu0 0.0
    %893 = vmatprep.subr.mxu0 0.0
    %894 = vmatpush1.msra.mxu0 0.0
    %895 = vmatprep.subr.mxu0 0.0
    %896 = vmatpush1.msra.mxu0 0.0
    %897 = vmatprep.mubr.f32.mxu0 0.0
    %898 = vmatmul.mubr.f32.gmra.mrb[0].mxu0 %v761
    %v899 = vpop.f32.mrb[0].mxu0
    %v900 = vadd.f32 0.0, %v899
    %v901 = vpop.f32.mrb[0].mxu0
    %v902 = vadd.f32 0.0, %v901
    %903 = vdwg.mxu0
    %904 = vmatprep.subr.mxu0 %v772
    %905 = vmatpush1.msra.mxu0 %v771
    %906 = vmatprep.subr.mxu0 %v776
    %907 = vmatpush1.msra.mxu0 %v775
    %908 = vmatprep.subr.mxu0 %v780
    %909 = vmatpush1.msra.mxu0 %v779
    %910 = vmatprep.subr.mxu0 %v784
    %911 = vmatpush1.msra.mxu0 %v783
    %912 = vmatprep.subr.mxu0 %v788
    %913 = vmatpush1.msra.mxu0 %v787
    %914 = vmatprep.subr.mxu0 %v792
    %915 = vmatpush1.msra.mxu0 %v791
    %916 = vmatprep.subr.mxu0 %v796
    %917 = vmatpush1.msra.mxu0 %v795
    %918 = vmatprep.subr.mxu0 %v800
    %919 = vmatpush1.msra.mxu0 %v799
    %920 = vmatprep.subr.mxu0 %v804
    %921 = vmatpush1.msra.mxu0 %v803
    %922 = vmatprep.subr.mxu0 %v808
    %923 = vmatpush1.msra.mxu0 %v807
    %924 = vmatprep.subr.mxu0 %v812
    %925 = vmatpush1.msra.mxu0 %v811
    %926 = vmatprep.subr.mxu0 %v816
    %927 = vmatpush1.msra.mxu0 %v815
    %928 = vmatprep.subr.mxu0 %v820
    %929 = vmatpush1.msra.mxu0 %v819
    %930 = vmatprep.subr.mxu0 %v824
    %931 = vmatpush1.msra.mxu0 %v823
    %932 = vmatprep.subr.mxu0 %v828
    %933 = vmatpush1.msra.mxu0 %v827
    %934 = vmatprep.subr.mxu0 %v832
    %935 = vmatpush1.msra.mxu0 %v831
    %936 = vmatprep.subr.mxu0 0.0
    %937 = vmatpush1.msra.mxu0 0.0
    %938 = vmatprep.subr.mxu0 0.0
    %939 = vmatpush1.msra.mxu0 0.0
    %940 = vmatprep.subr.mxu0 0.0
    %941 = vmatpush1.msra.mxu0 0.0
    %942 = vmatprep.subr.mxu0 0.0
    %943 = vmatpush1.msra.mxu0 0.0
    %944 = vmatprep.subr.mxu0 0.0
    %945 = vmatpush1.msra.mxu0 0.0
    %946 = vmatprep.subr.mxu0 0.0
    %947 = vmatpush1.msra.mxu0 0.0
    %948 = vmatprep.subr.mxu0 0.0
    %949 = vmatpush1.msra.mxu0 0.0
    %950 = vmatprep.subr.mxu0 0.0
    %951 = vmatpush1.msra.mxu0 0.0
    %952 = vmatprep.subr.mxu0 0.0
    %953 = vmatpush1.msra.mxu0 0.0
    %954 = vmatprep.subr.mxu0 0.0
    %955 = vmatpush1.msra.mxu0 0.0
    %956 = vmatprep.subr.mxu0 0.0
    %957 = vmatpush1.msra.mxu0 0.0
    %958 = vmatprep.subr.mxu0 0.0
    %959 = vmatpush1.msra.mxu0 0.0
    %960 = vmatprep.subr.mxu0 0.0
    %961 = vmatpush1.msra.mxu0 0.0
    %962 = vmatprep.subr.mxu0 0.0
    %963 = vmatpush1.msra.mxu0 0.0
    %964 = vmatprep.subr.mxu0 0.0
    %965 = vmatpush1.msra.mxu0 0.0
    %966 = vmatprep.subr.mxu0 0.0
    %967 = vmatpush1.msra.mxu0 0.0
    %968 = vmatprep.mubr.f32.mxu0 0.0
    %969 = vmatmul.mubr.f32.gmra.mrb[0].mxu0 %v761
    %v970 = vpop.f32.mrb[0].mxu0
    %v971 = vadd.f32 0.0, %v970
    %v972 = vpop.f32.mrb[0].mxu0
    %v973 = vadd.f32 0.0, %v972
    %974 = vdwg.mxu0
    %v975 = vadd.f32 %v765, %v900
    %v976 = vadd.f32 %v766, %v902
    %v977 = vadd.f32 %v767, %v971
    %v978 = vadd.f32 %v768, %v973
    %v979 = vxor.u32 %v975, 2147483648
    %v980 = vmul.f32 %v979, 1.442695
    %v981 = vpow.pop %v980
    %v982 = vadd.f32 %v981, 1.0
    %v983 = vrcp.pop %v982
    %v984 = vmul.f32 1.0, %v983
    %v985 = vxor.u32 %v976, 2147483648
    %v986 = vmul.f32 %v985, 1.442695
    %v987 = vpow.pop %v986
    %v988 = vadd.f32 %v987, 1.0
    %v989 = vrcp.pop %v988
    %v990 = vmul.f32 1.0, %v989
    %v991 = vtanh.pop %v977
    %v992 = vxor.u32 %v978, 2147483648
    %v993 = vmul.f32 %v992, 1.442695
    %v994 = vpow.pop %v993
    %v995 = vadd.f32 %v994, 1.0
    %v996 = vrcp.pop %v995
    %v997 = vmul.f32 1.0, %v996
    %v998 = vmul.f32 %v990, %v759
    %v999 = vmul.f32 %v984, %v991
    %v1000 = vadd.f32 %v998, %v999
    %v1001 = vtanh.pop %v1000
    %v1002 = vmul.f32 %v997, %v1001
    %s1003 = scalar_lea.vmem %s4, 24
    %1004 = vst [vmem:[%s1003] sm:$0xff] %v1002
    %s1005 = scalar_lea.vmem %s0, 128
    %v1006 = vld [vmem:[%s1005] sm:$0xff]
    %v1007 = vld [vmem:[%s1005 + $0x8] sm:$0xff]
    %v1008 = vld [vmem:[%s1005 + $0x10] sm:$0xff]
    %v1009 = vld [vmem:[%s1005 + $0x18] sm:$0xff]
    %v1010 = vld [vmem:[#allocation4] sm:$0xff]
    %v1011 = vld [vmem:[#allocation4 + $0x8] sm:$0xff]
    %v1012 = vld [vmem:[#allocation4 + $0x10] sm:$0xff]
    %v1013 = vld [vmem:[#allocation4 + $0x18] sm:$0xff]
    %v1014 = vld [vmem:[#allocation4 + $0x20] sm:$0xff]
    %v1015 = vld [vmem:[#allocation4 + $0x28] sm:$0xff]
    %v1016 = vld [vmem:[#allocation4 + $0x30] sm:$0xff]
    %v1017 = vld [vmem:[#allocation4 + $0x38] sm:$0xff]
    %v1018 = vld [vmem:[#allocation4 + $0x40] sm:$0xff]
    %v1019 = vld [vmem:[#allocation4 + $0x48] sm:$0xff]
    %v1020 = vld [vmem:[#allocation4 + $0x50] sm:$0xff]
    %v1021 = vld [vmem:[#allocation4 + $0x58] sm:$0xff]
    %v1022 = vld [vmem:[#allocation4 + $0x60] sm:$0xff]
    %v1023 = vld [vmem:[#allocation4 + $0x68] sm:$0xff]
    %v1024 = vld [vmem:[#allocation4 + $0x70] sm:$0xff]
    %v1025 = vld [vmem:[#allocation4 + $0x78] sm:$0xff]
    %v1026 = vld [vmem:[#allocation4 + $0x80] sm:$0xff]
    %v1027 = vld [vmem:[#allocation4 + $0x88] sm:$0xff]
    %v1028 = vld [vmem:[#allocation4 + $0x90] sm:$0xff]
    %v1029 = vld [vmem:[#allocation4 + $0x98] sm:$0xff]
    %v1030 = vld [vmem:[#allocation4 + $0xa0] sm:$0xff]
    %v1031 = vld [vmem:[#allocation4 + $0xa8] sm:$0xff]
    %v1032 = vld [vmem:[#allocation4 + $0xb0] sm:$0xff]
    %v1033 = vld [vmem:[#allocation4 + $0xb8] sm:$0xff]
    %v1034 = vld [vmem:[#allocation4 + $0xc0] sm:$0xff]
    %v1035 = vld [vmem:[#allocation4 + $0xc8] sm:$0xff]
    %v1036 = vld [vmem:[#allocation4 + $0xd0] sm:$0xff]
    %v1037 = vld [vmem:[#allocation4 + $0xd8] sm:$0xff]
    %v1038 = vld [vmem:[#allocation4 + $0xe0] sm:$0xff]
    %v1039 = vld [vmem:[#allocation4 + $0xe8] sm:$0xff]
    %v1040 = vld [vmem:[#allocation4 + $0xf0] sm:$0xff]
    %v1041 = vld [vmem:[#allocation4 + $0xf8] sm:$0xff]
    %v1042 = vld [vmem:[#allocation4 + $0x100] sm:$0xff]
    %v1043 = vld [vmem:[#allocation4 + $0x108] sm:$0xff]
    %v1044 = vld [vmem:[#allocation4 + $0x110] sm:$0xff]
    %v1045 = vld [vmem:[#allocation4 + $0x118] sm:$0xff]
    %v1046 = vld [vmem:[#allocation4 + $0x120] sm:$0xff]
    %v1047 = vld [vmem:[#allocation4 + $0x128] sm:$0xff]
    %v1048 = vld [vmem:[#allocation4 + $0x130] sm:$0xff]
    %v1049 = vld [vmem:[#allocation4 + $0x138] sm:$0xff]
    %v1050 = vld [vmem:[#allocation4 + $0x140] sm:$0xff]
    %v1051 = vld [vmem:[#allocation4 + $0x148] sm:$0xff]
    %v1052 = vld [vmem:[#allocation4 + $0x150] sm:$0xff]
    %v1053 = vld [vmem:[#allocation4 + $0x158] sm:$0xff]
    %v1054 = vld [vmem:[#allocation4 + $0x160] sm:$0xff]
    %v1055 = vld [vmem:[#allocation4 + $0x168] sm:$0xff]
    %v1056 = vld [vmem:[#allocation4 + $0x170] sm:$0xff]
    %v1057 = vld [vmem:[#allocation4 + $0x178] sm:$0xff]
    %v1058 = vld [vmem:[#allocation4 + $0x180] sm:$0xff]
    %v1059 = vld [vmem:[#allocation4 + $0x188] sm:$0xff]
    %v1060 = vld [vmem:[#allocation4 + $0x190] sm:$0xff]
    %v1061 = vld [vmem:[#allocation4 + $0x198] sm:$0xff]
    %v1062 = vld [vmem:[#allocation4 + $0x1a0] sm:$0xff]
    %v1063 = vld [vmem:[#allocation4 + $0x1a8] sm:$0xff]
    %v1064 = vld [vmem:[#allocation4 + $0x1b0] sm:$0xff]
    %v1065 = vld [vmem:[#allocation4 + $0x1b8] sm:$0xff]
    %v1066 = vld [vmem:[#allocation4 + $0x1c0] sm:$0xff]
    %v1067 = vld [vmem:[#allocation4 + $0x1c8] sm:$0xff]
    %v1068 = vld [vmem:[#allocation4 + $0x1d0] sm:$0xff]
    %v1069 = vld [vmem:[#allocation4 + $0x1d8] sm:$0xff]
    %v1070 = vld [vmem:[#allocation4 + $0x1e0] sm:$0xff]
    %v1071 = vld [vmem:[#allocation4 + $0x1e8] sm:$0xff]
    %v1072 = vld [vmem:[#allocation4 + $0x1f0] sm:$0xff]
    %v1073 = vld [vmem:[#allocation4 + $0x1f8] sm:$0xff]
    %1074 = vmatprep.subr.mxu0 %v1011
    %1075 = vmatpush1.msra.mxu0 %v1010
    %1076 = vmatprep.subr.mxu0 %v1015
    %1077 = vmatpush1.msra.mxu0 %v1014
    %1078 = vmatprep.subr.mxu0 %v1019
    %1079 = vmatpush1.msra.mxu0 %v1018
    %1080 = vmatprep.subr.mxu0 %v1023
    %1081 = vmatpush1.msra.mxu0 %v1022
    %1082 = vmatprep.subr.mxu0 %v1027
    %1083 = vmatpush1.msra.mxu0 %v1026
    %1084 = vmatprep.subr.mxu0 %v1031
    %1085 = vmatpush1.msra.mxu0 %v1030
    %1086 = vmatprep.subr.mxu0 %v1035
    %1087 = vmatpush1.msra.mxu0 %v1034
    %1088 = vmatprep.subr.mxu0 %v1039
    %1089 = vmatpush1.msra.mxu0 %v1038
    %1090 = vmatprep.subr.mxu0 %v1043
    %1091 = vmatpush1.msra.mxu0 %v1042
    %1092 = vmatprep.subr.mxu0 %v1047
    %1093 = vmatpush1.msra.mxu0 %v1046
    %1094 = vmatprep.subr.mxu0 %v1051
    %1095 = vmatpush1.msra.mxu0 %v1050
    %1096 = vmatprep.subr.mxu0 %v1055
    %1097 = vmatpush1.msra.mxu0 %v1054
    %1098 = vmatprep.subr.mxu0 %v1059
    %1099 = vmatpush1.msra.mxu0 %v1058
    %1100 = vmatprep.subr.mxu0 %v1063
    %1101 = vmatpush1.msra.mxu0 %v1062
    %1102 = vmatprep.subr.mxu0 %v1067
    %1103 = vmatpush1.msra.mxu0 %v1066
    %1104 = vmatprep.subr.mxu0 %v1071
    %1105 = vmatpush1.msra.mxu0 %v1070
    %1106 = vmatprep.subr.mxu0 0.0
    %1107 = vmatpush1.msra.mxu0 0.0
    %1108 = vmatprep.subr.mxu0 0.0
    %1109 = vmatpush1.msra.mxu0 0.0
    %1110 = vmatprep.subr.mxu0 0.0
    %1111 = vmatpush1.msra.mxu0 0.0
    %1112 = vmatprep.subr.mxu0 0.0
    %1113 = vmatpush1.msra.mxu0 0.0
    %1114 = vmatprep.subr.mxu0 0.0
    %1115 = vmatpush1.msra.mxu0 0.0
    %1116 = vmatprep.subr.mxu0 0.0
    %1117 = vmatpush1.msra.mxu0 0.0
    %1118 = vmatprep.subr.mxu0 0.0
    %1119 = vmatpush1.msra.mxu0 0.0
    %1120 = vmatprep.subr.mxu0 0.0
    %1121 = vmatpush1.msra.mxu0 0.0
    %1122 = vmatprep.subr.mxu0 0.0
    %1123 = vmatpush1.msra.mxu0 0.0
    %1124 = vmatprep.subr.mxu0 0.0
    %1125 = vmatpush1.msra.mxu0 0.0
    %1126 = vmatprep.subr.mxu0 0.0
    %1127 = vmatpush1.msra.mxu0 0.0
    %1128 = vmatprep.subr.mxu0 0.0
    %1129 = vmatpush1.msra.mxu0 0.0
    %1130 = vmatprep.subr.mxu0 0.0
    %1131 = vmatpush1.msra.mxu0 0.0
    %1132 = vmatprep.subr.mxu0 0.0
    %1133 = vmatpush1.msra.mxu0 0.0
    %1134 = vmatprep.subr.mxu0 0.0
    %1135 = vmatpush1.msra.mxu0 0.0
    %1136 = vmatprep.subr.mxu0 0.0
    %1137 = vmatpush1.msra.mxu0 0.0
    %1138 = vmatprep.mubr.f32.mxu0 0.0
    %1139 = vmatmul.mubr.f32.gmra.mrb[0].mxu0 %v1002
    %v1140 = vpop.f32.mrb[0].mxu0
    %v1141 = vadd.f32 0.0, %v1140
    %v1142 = vpop.f32.mrb[0].mxu0
    %v1143 = vadd.f32 0.0, %v1142
    %1144 = vdwg.mxu0
    %1145 = vmatprep.subr.mxu0 %v1013
    %1146 = vmatpush1.msra.mxu0 %v1012
    %1147 = vmatprep.subr.mxu0 %v1017
    %1148 = vmatpush1.msra.mxu0 %v1016
    %1149 = vmatprep.subr.mxu0 %v1021
    %1150 = vmatpush1.msra.mxu0 %v1020
    %1151 = vmatprep.subr.mxu0 %v1025
    %1152 = vmatpush1.msra.mxu0 %v1024
    %1153 = vmatprep.subr.mxu0 %v1029
    %1154 = vmatpush1.msra.mxu0 %v1028
    %1155 = vmatprep.subr.mxu0 %v1033
    %1156 = vmatpush1.msra.mxu0 %v1032
    %1157 = vmatprep.subr.mxu0 %v1037
    %1158 = vmatpush1.msra.mxu0 %v1036
    %1159 = vmatprep.subr.mxu0 %v1041
    %1160 = vmatpush1.msra.mxu0 %v1040
    %1161 = vmatprep.subr.mxu0 %v1045
    %1162 = vmatpush1.msra.mxu0 %v1044
    %1163 = vmatprep.subr.mxu0 %v1049
    %1164 = vmatpush1.msra.mxu0 %v1048
    %1165 = vmatprep.subr.mxu0 %v1053
    %1166 = vmatpush1.msra.mxu0 %v1052
    %1167 = vmatprep.subr.mxu0 %v1057
    %1168 = vmatpush1.msra.mxu0 %v1056
    %1169 = vmatprep.subr.mxu0 %v1061
    %1170 = vmatpush1.msra.mxu0 %v1060
    %1171 = vmatprep.subr.mxu0 %v1065
    %1172 = vmatpush1.msra.mxu0 %v1064
    %1173 = vmatprep.subr.mxu0 %v1069
    %1174 = vmatpush1.msra.mxu0 %v1068
    %1175 = vmatprep.subr.mxu0 %v1073
    %1176 = vmatpush1.msra.mxu0 %v1072
    %1177 = vmatprep.subr.mxu0 0.0
    %1178 = vmatpush1.msra.mxu0 0.0
    %1179 = vmatprep.subr.mxu0 0.0
    %1180 = vmatpush1.msra.mxu0 0.0
    %1181 = vmatprep.subr.mxu0 0.0
    %1182 = vmatpush1.msra.mxu0 0.0
    %1183 = vmatprep.subr.mxu0 0.0
    %1184 = vmatpush1.msra.mxu0 0.0
    %1185 = vmatprep.subr.mxu0 0.0
    %1186 = vmatpush1.msra.mxu0 0.0
    %1187 = vmatprep.subr.mxu0 0.0
    %1188 = vmatpush1.msra.mxu0 0.0
    %1189 = vmatprep.subr.mxu0 0.0
    %1190 = vmatpush1.msra.mxu0 0.0
    %1191 = vmatprep.subr.mxu0 0.0
    %1192 = vmatpush1.msra.mxu0 0.0
    %1193 = vmatprep.subr.mxu0 0.0
    %1194 = vmatpush1.msra.mxu0 0.0
    %1195 = vmatprep.subr.mxu0 0.0
    %1196 = vmatpush1.msra.mxu0 0.0
    %1197 = vmatprep.subr.mxu0 0.0
    %1198 = vmatpush1.msra.mxu0 0.0
    %1199 = vmatprep.subr.mxu0 0.0
    %1200 = vmatpush1.msra.mxu0 0.0
    %1201 = vmatprep.subr.mxu0 0.0
    %1202 = vmatpush1.msra.mxu0 0.0
    %1203 = vmatprep.subr.mxu0 0.0
    %1204 = vmatpush1.msra.mxu0 0.0
    %1205 = vmatprep.subr.mxu0 0.0
    %1206 = vmatpush1.msra.mxu0 0.0
    %1207 = vmatprep.subr.mxu0 0.0
    %1208 = vmatpush1.msra.mxu0 0.0
    %1209 = vmatprep.mubr.f32.mxu0 0.0
    %1210 = vmatmul.mubr.f32.gmra.mrb[0].mxu0 %v1002
    %v1211 = vpop.f32.mrb[0].mxu0
    %v1212 = vadd.f32 0.0, %v1211
    %v1213 = vpop.f32.mrb[0].mxu0
    %v1214 = vadd.f32 0.0, %v1213
    %1215 = vdwg.mxu0
    %v1216 = vadd.f32 %v1006, %v1141
    %v1217 = vadd.f32 %v1007, %v1143
    %v1218 = vadd.f32 %v1008, %v1212
    %v1219 = vadd.f32 %v1009, %v1214
    %v1220 = vxor.u32 %v1216, 2147483648
    %v1221 = vmul.f32 %v1220, 1.442695
    %v1222 = vpow.pop %v1221
    %v1223 = vadd.f32 %v1222, 1.0
    %v1224 = vrcp.pop %v1223
    %v1225 = vmul.f32 1.0, %v1224
    %v1226 = vxor.u32 %v1217, 2147483648
    %v1227 = vmul.f32 %v1226, 1.442695
    %v1228 = vpow.pop %v1227
    %v1229 = vadd.f32 %v1228, 1.0
    %v1230 = vrcp.pop %v1229
    %v1231 = vmul.f32 1.0, %v1230
    %v1232 = vtanh.pop %v1218
    %v1233 = vxor.u32 %v1219, 2147483648
    %v1234 = vmul.f32 %v1233, 1.442695
    %v1235 = vpow.pop %v1234
    %v1236 = vadd.f32 %v1235, 1.0
    %v1237 = vrcp.pop %v1236
    %v1238 = vmul.f32 1.0, %v1237
    %v1239 = vmul.f32 %v1231, %v1000
    %v1240 = vmul.f32 %v1225, %v1232
    %v1241 = vadd.f32 %v1239, %v1240
    %v1242 = vtanh.pop %v1241
    %v1243 = vmul.f32 %v1238, %v1242
    %s1244 = scalar_lea.vmem %s4, 32
    %1245 = vst [vmem:[%s1244] sm:$0xff] %v1243
    %s1246 = scalar_lea.vmem %s0, 160
    %v1247 = vld [vmem:[%s1246] sm:$0xff]
    %v1248 = vld [vmem:[%s1246 + $0x8] sm:$0xff]
    %v1249 = vld [vmem:[%s1246 + $0x10] sm:$0xff]
    %v1250 = vld [vmem:[%s1246 + $0x18] sm:$0xff]
    %v1251 = vld [vmem:[#allocation4] sm:$0xff]
    %v1252 = vld [vmem:[#allocation4 + $0x8] sm:$0xff]
    %v1253 = vld [vmem:[#allocation4 + $0x10] sm:$0xff]
    %v1254 = vld [vmem:[#allocation4 + $0x18] sm:$0xff]
    %v1255 = vld [vmem:[#allocation4 + $0x20] sm:$0xff]
    %v1256 = vld [vmem:[#allocation4 + $0x28] sm:$0xff]
    %v1257 = vld [vmem:[#allocation4 + $0x30] sm:$0xff]
    %v1258 = vld [vmem:[#allocation4 + $0x38] sm:$0xff]
    %v1259 = vld [vmem:[#allocation4 + $0x40] sm:$0xff]
    %v1260 = vld [vmem:[#allocation4 + $0x48] sm:$0xff]
    %v1261 = vld [vmem:[#allocation4 + $0x50] sm:$0xff]
    %v1262 = vld [vmem:[#allocation4 + $0x58] sm:$0xff]
    %v1263 = vld [vmem:[#allocation4 + $0x60] sm:$0xff]
    %v1264 = vld [vmem:[#allocation4 + $0x68] sm:$0xff]
    %v1265 = vld [vmem:[#allocation4 + $0x70] sm:$0xff]
    %v1266 = vld [vmem:[#allocation4 + $0x78] sm:$0xff]
    %v1267 = vld [vmem:[#allocation4 + $0x80] sm:$0xff]
    %v1268 = vld [vmem:[#allocation4 + $0x88] sm:$0xff]
    %v1269 = vld [vmem:[#allocation4 + $0x90] sm:$0xff]
    %v1270 = vld [vmem:[#allocation4 + $0x98] sm:$0xff]
    %v1271 = vld [vmem:[#allocation4 + $0xa0] sm:$0xff]
    %v1272 = vld [vmem:[#allocation4 + $0xa8] sm:$0xff]
    %v1273 = vld [vmem:[#allocation4 + $0xb0] sm:$0xff]
    %v1274 = vld [vmem:[#allocation4 + $0xb8] sm:$0xff]
    %v1275 = vld [vmem:[#allocation4 + $0xc0] sm:$0xff]
    %v1276 = vld [vmem:[#allocation4 + $0xc8] sm:$0xff]
    %v1277 = vld [vmem:[#allocation4 + $0xd0] sm:$0xff]
    %v1278 = vld [vmem:[#allocation4 + $0xd8] sm:$0xff]
    %v1279 = vld [vmem:[#allocation4 + $0xe0] sm:$0xff]
    %v1280 = vld [vmem:[#allocation4 + $0xe8] sm:$0xff]
    %v1281 = vld [vmem:[#allocation4 + $0xf0] sm:$0xff]
    %v1282 = vld [vmem:[#allocation4 + $0xf8] sm:$0xff]
    %v1283 = vld [vmem:[#allocation4 + $0x100] sm:$0xff]
    %v1284 = vld [vmem:[#allocation4 + $0x108] sm:$0xff]
    %v1285 = vld [vmem:[#allocation4 + $0x110] sm:$0xff]
    %v1286 = vld [vmem:[#allocation4 + $0x118] sm:$0xff]
    %v1287 = vld [vmem:[#allocation4 + $0x120] sm:$0xff]
    %v1288 = vld [vmem:[#allocation4 + $0x128] sm:$0xff]
    %v1289 = vld [vmem:[#allocation4 + $0x130] sm:$0xff]
    %v1290 = vld [vmem:[#allocation4 + $0x138] sm:$0xff]
    %v1291 = vld [vmem:[#allocation4 + $0x140] sm:$0xff]
    %v1292 = vld [vmem:[#allocation4 + $0x148] sm:$0xff]
    %v1293 = vld [vmem:[#allocation4 + $0x150] sm:$0xff]
    %v1294 = vld [vmem:[#allocation4 + $0x158] sm:$0xff]
    %v1295 = vld [vmem:[#allocation4 + $0x160] sm:$0xff]
    %v1296 = vld [vmem:[#allocation4 + $0x168] sm:$0xff]
    %v1297 = vld [vmem:[#allocation4 + $0x170] sm:$0xff]
    %v1298 = vld [vmem:[#allocation4 + $0x178] sm:$0xff]
    %v1299 = vld [vmem:[#allocation4 + $0x180] sm:$0xff]
    %v1300 = vld [vmem:[#allocation4 + $0x188] sm:$0xff]
    %v1301 = vld [vmem:[#allocation4 + $0x190] sm:$0xff]
    %v1302 = vld [vmem:[#allocation4 + $0x198] sm:$0xff]
    %v1303 = vld [vmem:[#allocation4 + $0x1a0] sm:$0xff]
    %v1304 = vld [vmem:[#allocation4 + $0x1a8] sm:$0xff]
    %v1305 = vld [vmem:[#allocation4 + $0x1b0] sm:$0xff]
    %v1306 = vld [vmem:[#allocation4 + $0x1b8] sm:$0xff]
    %v1307 = vld [vmem:[#allocation4 + $0x1c0] sm:$0xff]
    %v1308 = vld [vmem:[#allocation4 + $0x1c8] sm:$0xff]
    %v1309 = vld [vmem:[#allocation4 + $0x1d0] sm:$0xff]
    %v1310 = vld [vmem:[#allocation4 + $0x1d8] sm:$0xff]
    %v1311 = vld [vmem:[#allocation4 + $0x1e0] sm:$0xff]
    %v1312 = vld [vmem:[#allocation4 + $0x1e8] sm:$0xff]
    %v1313 = vld [vmem:[#allocation4 + $0x1f0] sm:$0xff]
    %v1314 = vld [vmem:[#allocation4 + $0x1f8] sm:$0xff]
    %1315 = vmatprep.subr.mxu0 %v1252
    %1316 = vmatpush1.msra.mxu0 %v1251
    %1317 = vmatprep.subr.mxu0 %v1256
    %1318 = vmatpush1.msra.mxu0 %v1255
    %1319 = vmatprep.subr.mxu0 %v1260
    %1320 = vmatpush1.msra.mxu0 %v1259
    %1321 = vmatprep.subr.mxu0 %v1264
    %1322 = vmatpush1.msra.mxu0 %v1263
    %1323 = vmatprep.subr.mxu0 %v1268
    %1324 = vmatpush1.msra.mxu0 %v1267
    %1325 = vmatprep.subr.mxu0 %v1272
    %1326 = vmatpush1.msra.mxu0 %v1271
    %1327 = vmatprep.subr.mxu0 %v1276
    %1328 = vmatpush1.msra.mxu0 %v1275
    %1329 = vmatprep.subr.mxu0 %v1280
    %1330 = vmatpush1.msra.mxu0 %v1279
    %1331 = vmatprep.subr.mxu0 %v1284
    %1332 = vmatpush1.msra.mxu0 %v1283
    %1333 = vmatprep.subr.mxu0 %v1288
    %1334 = vmatpush1.msra.mxu0 %v1287
    %1335 = vmatprep.subr.mxu0 %v1292
    %1336 = vmatpush1.msra.mxu0 %v1291
    %1337 = vmatprep.subr.mxu0 %v1296
    %1338 = vmatpush1.msra.mxu0 %v1295
    %1339 = vmatprep.subr.mxu0 %v1300
    %1340 = vmatpush1.msra.mxu0 %v1299
    %1341 = vmatprep.subr.mxu0 %v1304
    %1342 = vmatpush1.msra.mxu0 %v1303
    %1343 = vmatprep.subr.mxu0 %v1308
    %1344 = vmatpush1.msra.mxu0 %v1307
    %1345 = vmatprep.subr.mxu0 %v1312
    %1346 = vmatpush1.msra.mxu0 %v1311
    %1347 = vmatprep.subr.mxu0 0.0
    %1348 = vmatpush1.msra.mxu0 0.0
    %1349 = vmatprep.subr.mxu0 0.0
    %1350 = vmatpush1.msra.mxu0 0.0
    %1351 = vmatprep.subr.mxu0 0.0
    %1352 = vmatpush1.msra.mxu0 0.0
    %1353 = vmatprep.subr.mxu0 0.0
    %1354 = vmatpush1.msra.mxu0 0.0
    %1355 = vmatprep.subr.mxu0 0.0
    %1356 = vmatpush1.msra.mxu0 0.0
    %1357 = vmatprep.subr.mxu0 0.0
    %1358 = vmatpush1.msra.mxu0 0.0
    %1359 = vmatprep.subr.mxu0 0.0
    %1360 = vmatpush1.msra.mxu0 0.0
    %1361 = vmatprep.subr.mxu0 0.0
    %1362 = vmatpush1.msra.mxu0 0.0
    %1363 = vmatprep.subr.mxu0 0.0
    %1364 = vmatpush1.msra.mxu0 0.0
    %1365 = vmatprep.subr.mxu0 0.0
    %1366 = vmatpush1.msra.mxu0 0.0
    %1367 = vmatprep.subr.mxu0 0.0
    %1368 = vmatpush1.msra.mxu0 0.0
    %1369 = vmatprep.subr.mxu0 0.0
    %1370 = vmatpush1.msra.mxu0 0.0
    %1371 = vmatprep.subr.mxu0 0.0
    %1372 = vmatpush1.msra.mxu0 0.0
    %1373 = vmatprep.subr.mxu0 0.0
    %1374 = vmatpush1.msra.mxu0 0.0
    %1375 = vmatprep.subr.mxu0 0.0
    %1376 = vmatpush1.msra.mxu0 0.0
    %1377 = vmatprep.subr.mxu0 0.0
    %1378 = vmatpush1.msra.mxu0 0.0
    %1379 = vmatprep.mubr.f32.mxu0 0.0
    %1380 = vmatmul.mubr.f32.gmra.mrb[0].mxu0 %v1243
    %v1381 = vpop.f32.mrb[0].mxu0
    %v1382 = vadd.f32 0.0, %v1381
    %v1383 = vpop.f32.mrb[0].mxu0
    %v1384 = vadd.f32 0.0, %v1383
    %1385 = vdwg.mxu0
    %1386 = vmatprep.subr.mxu0 %v1254
    %1387 = vmatpush1.msra.mxu0 %v1253
    %1388 = vmatprep.subr.mxu0 %v1258
    %1389 = vmatpush1.msra.mxu0 %v1257
    %1390 = vmatprep.subr.mxu0 %v1262
    %1391 = vmatpush1.msra.mxu0 %v1261
    %1392 = vmatprep.subr.mxu0 %v1266
    %1393 = vmatpush1.msra.mxu0 %v1265
    %1394 = vmatprep.subr.mxu0 %v1270
    %1395 = vmatpush1.msra.mxu0 %v1269
    %1396 = vmatprep.subr.mxu0 %v1274
    %1397 = vmatpush1.msra.mxu0 %v1273
    %1398 = vmatprep.subr.mxu0 %v1278
    %1399 = vmatpush1.msra.mxu0 %v1277
    %1400 = vmatprep.subr.mxu0 %v1282
    %1401 = vmatpush1.msra.mxu0 %v1281
    %1402 = vmatprep.subr.mxu0 %v1286
    %1403 = vmatpush1.msra.mxu0 %v1285
    %1404 = vmatprep.subr.mxu0 %v1290
    %1405 = vmatpush1.msra.mxu0 %v1289
    %1406 = vmatprep.subr.mxu0 %v1294
    %1407 = vmatpush1.msra.mxu0 %v1293
    %1408 = vmatprep.subr.mxu0 %v1298
    %1409 = vmatpush1.msra.mxu0 %v1297
    %1410 = vmatprep.subr.mxu0 %v1302
    %1411 = vmatpush1.msra.mxu0 %v1301
    %1412 = vmatprep.subr.mxu0 %v1306
    %1413 = vmatpush1.msra.mxu0 %v1305
    %1414 = vmatprep.subr.mxu0 %v1310
    %1415 = vmatpush1.msra.mxu0 %v1309
    %1416 = vmatprep.subr.mxu0 %v1314
    %1417 = vmatpush1.msra.mxu0 %v1313
    %1418 = vmatprep.subr.mxu0 0.0
    %1419 = vmatpush1.msra.mxu0 0.0
    %1420 = vmatprep.subr.mxu0 0.0
    %1421 = vmatpush1.msra.mxu0 0.0
    %1422 = vmatprep.subr.mxu0 0.0
    %1423 = vmatpush1.msra.mxu0 0.0
    %1424 = vmatprep.subr.mxu0 0.0
    %1425 = vmatpush1.msra.mxu0 0.0
    %1426 = vmatprep.subr.mxu0 0.0
    %1427 = vmatpush1.msra.mxu0 0.0
    %1428 = vmatprep.subr.mxu0 0.0
    %1429 = vmatpush1.msra.mxu0 0.0
    %1430 = vmatprep.subr.mxu0 0.0
    %1431 = vmatpush1.msra.mxu0 0.0
    %1432 = vmatprep.subr.mxu0 0.0
    %1433 = vmatpush1.msra.mxu0 0.0
    %1434 = vmatprep.subr.mxu0 0.0
    %1435 = vmatpush1.msra.mxu0 0.0
    %1436 = vmatprep.subr.mxu0 0.0
    %1437 = vmatpush1.msra.mxu0 0.0
    %1438 = vmatprep.subr.mxu0 0.0
    %1439 = vmatpush1.msra.mxu0 0.0
    %1440 = vmatprep.subr.mxu0 0.0
    %1441 = vmatpush1.msra.mxu0 0.0
    %1442 = vmatprep.subr.mxu0 0.0
    %1443 = vmatpush1.msra.mxu0 0.0
    %1444 = vmatprep.subr.mxu0 0.0
    %1445 = vmatpush1.msra.mxu0 0.0
    %1446 = vmatprep.subr.mxu0 0.0
    %1447 = vmatpush1.msra.mxu0 0.0
    %1448 = vmatprep.subr.mxu0 0.0
    %1449 = vmatpush1.msra.mxu0 0.0
    %1450 = vmatprep.mubr.f32.mxu0 0.0
    %1451 = vmatmul.mubr.f32.gmra.mrb[0].mxu0 %v1243
    %v1452 = vpop.f32.mrb[0].mxu0
    %v1453 = vadd.f32 0.0, %v1452
    %v1454 = vpop.f32.mrb[0].mxu0
    %v1455 = vadd.f32 0.0, %v1454
    %1456 = vdwg.mxu0
    %v1457 = vadd.f32 %v1247, %v1382
    %v1458 = vadd.f32 %v1248, %v1384
    %v1459 = vadd.f32 %v1249, %v1453
    %v1460 = vadd.f32 %v1250, %v1455
    %v1461 = vxor.u32 %v1457, 2147483648
    %v1462 = vmul.f32 %v1461, 1.442695
    %v1463 = vpow.pop %v1462
    %v1464 = vadd.f32 %v1463, 1.0
    %v1465 = vrcp.pop %v1464
    %v1466 = vmul.f32 1.0, %v1465
    %v1467 = vxor.u32 %v1458, 2147483648
    %v1468 = vmul.f32 %v1467, 1.442695
    %v1469 = vpow.pop %v1468
    %v1470 = vadd.f32 %v1469, 1.0
    %v1471 = vrcp.pop %v1470
    %v1472 = vmul.f32 1.0, %v1471
    %v1473 = vtanh.pop %v1459
    %v1474 = vxor.u32 %v1460, 2147483648
    %v1475 = vmul.f32 %v1474, 1.442695
    %v1476 = vpow.pop %v1475
    %v1477 = vadd.f32 %v1476, 1.0
    %v1478 = vrcp.pop %v1477
    %v1479 = vmul.f32 1.0, %v1478
    %v1480 = vmul.f32 %v1472, %v1241
    %v1481 = vmul.f32 %v1466, %v1473
    %v1482 = vadd.f32 %v1480, %v1481
    %v1483 = vtanh.pop %v1482
    %v1484 = vmul.f32 %v1479, %v1483
    %s1485 = scalar_lea.vmem %s4, 40
    %1486 = vst [vmem:[%s1485] sm:$0xff] %v1484
    %s1487 = scalar_lea.vmem %s0, 192
    %v1488 = vld [vmem:[%s1487] sm:$0xff]
    %v1489 = vld [vmem:[%s1487 + $0x8] sm:$0xff]
    %v1490 = vld [vmem:[%s1487 + $0x10] sm:$0xff]
    %v1491 = vld [vmem:[%s1487 + $0x18] sm:$0xff]
    %v1492 = vld [vmem:[#allocation4] sm:$0xff]
    %v1493 = vld [vmem:[#allocation4 + $0x8] sm:$0xff]
    %v1494 = vld [vmem:[#allocation4 + $0x10] sm:$0xff]
    %v1495 = vld [vmem:[#allocation4 + $0x18] sm:$0xff]
    %v1496 = vld [vmem:[#allocation4 + $0x20] sm:$0xff]
    %v1497 = vld [vmem:[#allocation4 + $0x28] sm:$0xff]
    %v1498 = vld [vmem:[#allocation4 + $0x30] sm:$0xff]
    %v1499 = vld [vmem:[#allocation4 + $0x38] sm:$0xff]
    %v1500 = vld [vmem:[#allocation4 + $0x40] sm:$0xff]
    %v1501 = vld [vmem:[#allocation4 + $0x48] sm:$0xff]
    %v1502 = vld [vmem:[#allocation4 + $0x50] sm:$0xff]
    %v1503 = vld [vmem:[#allocation4 + $0x58] sm:$0xff]
    %v1504 = vld [vmem:[#allocation4 + $0x60] sm:$0xff]
    %v1505 = vld [vmem:[#allocation4 + $0x68] sm:$0xff]
    %v1506 = vld [vmem:[#allocation4 + $0x70] sm:$0xff]
    %v1507 = vld [vmem:[#allocation4 + $0x78] sm:$0xff]
    %v1508 = vld [vmem:[#allocation4 + $0x80] sm:$0xff]
    %v1509 = vld [vmem:[#allocation4 + $0x88] sm:$0xff]
    %v1510 = vld [vmem:[#allocation4 + $0x90] sm:$0xff]
    %v1511 = vld [vmem:[#allocation4 + $0x98] sm:$0xff]
    %v1512 = vld [vmem:[#allocation4 + $0xa0] sm:$0xff]
    %v1513 = vld [vmem:[#allocation4 + $0xa8] sm:$0xff]
    %v1514 = vld [vmem:[#allocation4 + $0xb0] sm:$0xff]
    %v1515 = vld [vmem:[#allocation4 + $0xb8] sm:$0xff]
    %v1516 = vld [vmem:[#allocation4 + $0xc0] sm:$0xff]
    %v1517 = vld [vmem:[#allocation4 + $0xc8] sm:$0xff]
    %v1518 = vld [vmem:[#allocation4 + $0xd0] sm:$0xff]
    %v1519 = vld [vmem:[#allocation4 + $0xd8] sm:$0xff]
    %v1520 = vld [vmem:[#allocation4 + $0xe0] sm:$0xff]
    %v1521 = vld [vmem:[#allocation4 + $0xe8] sm:$0xff]
    %v1522 = vld [vmem:[#allocation4 + $0xf0] sm:$0xff]
    %v1523 = vld [vmem:[#allocation4 + $0xf8] sm:$0xff]
    %v1524 = vld [vmem:[#allocation4 + $0x100] sm:$0xff]
    %v1525 = vld [vmem:[#allocation4 + $0x108] sm:$0xff]
    %v1526 = vld [vmem:[#allocation4 + $0x110] sm:$0xff]
    %v1527 = vld [vmem:[#allocation4 + $0x118] sm:$0xff]
    %v1528 = vld [vmem:[#allocation4 + $0x120] sm:$0xff]
    %v1529 = vld [vmem:[#allocation4 + $0x128] sm:$0xff]
    %v1530 = vld [vmem:[#allocation4 + $0x130] sm:$0xff]
    %v1531 = vld [vmem:[#allocation4 + $0x138] sm:$0xff]
    %v1532 = vld [vmem:[#allocation4 + $0x140] sm:$0xff]
    %v1533 = vld [vmem:[#allocation4 + $0x148] sm:$0xff]
    %v1534 = vld [vmem:[#allocation4 + $0x150] sm:$0xff]
    %v1535 = vld [vmem:[#allocation4 + $0x158] sm:$0xff]
    %v1536 = vld [vmem:[#allocation4 + $0x160] sm:$0xff]
    %v1537 = vld [vmem:[#allocation4 + $0x168] sm:$0xff]
    %v1538 = vld [vmem:[#allocation4 + $0x170] sm:$0xff]
    %v1539 = vld [vmem:[#allocation4 + $0x178] sm:$0xff]
    %v1540 = vld [vmem:[#allocation4 + $0x180] sm:$0xff]
    %v1541 = vld [vmem:[#allocation4 + $0x188] sm:$0xff]
    %v1542 = vld [vmem:[#allocation4 + $0x190] sm:$0xff]
    %v1543 = vld [vmem:[#allocation4 + $0x198] sm:$0xff]
    %v1544 = vld [vmem:[#allocation4 + $0x1a0] sm:$0xff]
    %v1545 = vld [vmem:[#allocation4 + $0x1a8] sm:$0xff]
    %v1546 = vld [vmem:[#allocation4 + $0x1b0] sm:$0xff]
    %v1547 = vld [vmem:[#allocation4 + $0x1b8] sm:$0xff]
    %v1548 = vld [vmem:[#allocation4 + $0x1c0] sm:$0xff]
    %v1549 = vld [vmem:[#allocation4 + $0x1c8] sm:$0xff]
    %v1550 = vld [vmem:[#allocation4 + $0x1d0] sm:$0xff]
    %v1551 = vld [vmem:[#allocation4 + $0x1d8] sm:$0xff]
    %v1552 = vld [vmem:[#allocation4 + $0x1e0] sm:$0xff]
    %v1553 = vld [vmem:[#allocation4 + $0x1e8] sm:$0xff]
    %v1554 = vld [vmem:[#allocation4 + $0x1f0] sm:$0xff]
    %v1555 = vld [vmem:[#allocation4 + $0x1f8] sm:$0xff]
    %1556 = vmatprep.subr.mxu0 %v1493
    %1557 = vmatpush1.msra.mxu0 %v1492
    %1558 = vmatprep.subr.mxu0 %v1497
    %1559 = vmatpush1.msra.mxu0 %v1496
    %1560 = vmatprep.subr.mxu0 %v1501
    %1561 = vmatpush1.msra.mxu0 %v1500
    %1562 = vmatprep.subr.mxu0 %v1505
    %1563 = vmatpush1.msra.mxu0 %v1504
    %1564 = vmatprep.subr.mxu0 %v1509
    %1565 = vmatpush1.msra.mxu0 %v1508
    %1566 = vmatprep.subr.mxu0 %v1513
    %1567 = vmatpush1.msra.mxu0 %v1512
    %1568 = vmatprep.subr.mxu0 %v1517
    %1569 = vmatpush1.msra.mxu0 %v1516
    %1570 = vmatprep.subr.mxu0 %v1521
    %1571 = vmatpush1.msra.mxu0 %v1520
    %1572 = vmatprep.subr.mxu0 %v1525
    %1573 = vmatpush1.msra.mxu0 %v1524
    %1574 = vmatprep.subr.mxu0 %v1529
    %1575 = vmatpush1.msra.mxu0 %v1528
    %1576 = vmatprep.subr.mxu0 %v1533
    %1577 = vmatpush1.msra.mxu0 %v1532
    %1578 = vmatprep.subr.mxu0 %v1537
    %1579 = vmatpush1.msra.mxu0 %v1536
    %1580 = vmatprep.subr.mxu0 %v1541
    %1581 = vmatpush1.msra.mxu0 %v1540
    %1582 = vmatprep.subr.mxu0 %v1545
    %1583 = vmatpush1.msra.mxu0 %v1544
    %1584 = vmatprep.subr.mxu0 %v1549
    %1585 = vmatpush1.msra.mxu0 %v1548
    %1586 = vmatprep.subr.mxu0 %v1553
    %1587 = vmatpush1.msra.mxu0 %v1552
    %1588 = vmatprep.subr.mxu0 0.0
    %1589 = vmatpush1.msra.mxu0 0.0
    %1590 = vmatprep.subr.mxu0 0.0
    %1591 = vmatpush1.msra.mxu0 0.0
    %1592 = vmatprep.subr.mxu0 0.0
    %1593 = vmatpush1.msra.mxu0 0.0
    %1594 = vmatprep.subr.mxu0 0.0
    %1595 = vmatpush1.msra.mxu0 0.0
    %1596 = vmatprep.subr.mxu0 0.0
    %1597 = vmatpush1.msra.mxu0 0.0
    %1598 = vmatprep.subr.mxu0 0.0
    %1599 = vmatpush1.msra.mxu0 0.0
    %1600 = vmatprep.subr.mxu0 0.0
    %1601 = vmatpush1.msra.mxu0 0.0
    %1602 = vmatprep.subr.mxu0 0.0
    %1603 = vmatpush1.msra.mxu0 0.0
    %1604 = vmatprep.subr.mxu0 0.0
    %1605 = vmatpush1.msra.mxu0 0.0
    %1606 = vmatprep.subr.mxu0 0.0
    %1607 = vmatpush1.msra.mxu0 0.0
    %1608 = vmatprep.subr.mxu0 0.0
    %1609 = vmatpush1.msra.mxu0 0.0
    %1610 = vmatprep.subr.mxu0 0.0
    %1611 = vmatpush1.msra.mxu0 0.0
    %1612 = vmatprep.subr.mxu0 0.0
    %1613 = vmatpush1.msra.mxu0 0.0
    %1614 = vmatprep.subr.mxu0 0.0
    %1615 = vmatpush1.msra.mxu0 0.0
    %1616 = vmatprep.subr.mxu0 0.0
    %1617 = vmatpush1.msra.mxu0 0.0
    %1618 = vmatprep.subr.mxu0 0.0
    %1619 = vmatpush1.msra.mxu0 0.0
    %1620 = vmatprep.mubr.f32.mxu0 0.0
    %1621 = vmatmul.mubr.f32.gmra.mrb[0].mxu0 %v1484
    %v1622 = vpop.f32.mrb[0].mxu0
    %v1623 = vadd.f32 0.0, %v1622
    %v1624 = vpop.f32.mrb[0].mxu0
    %v1625 = vadd.f32 0.0, %v1624
    %1626 = vdwg.mxu0
    %1627 = vmatprep.subr.mxu0 %v1495
    %1628 = vmatpush1.msra.mxu0 %v1494
    %1629 = vmatprep.subr.mxu0 %v1499
    %1630 = vmatpush1.msra.mxu0 %v1498
    %1631 = vmatprep.subr.mxu0 %v1503
    %1632 = vmatpush1.msra.mxu0 %v1502
    %1633 = vmatprep.subr.mxu0 %v1507
    %1634 = vmatpush1.msra.mxu0 %v1506
    %1635 = vmatprep.subr.mxu0 %v1511
    %1636 = vmatpush1.msra.mxu0 %v1510
    %1637 = vmatprep.subr.mxu0 %v1515
    %1638 = vmatpush1.msra.mxu0 %v1514
    %1639 = vmatprep.subr.mxu0 %v1519
    %1640 = vmatpush1.msra.mxu0 %v1518
    %1641 = vmatprep.subr.mxu0 %v1523
    %1642 = vmatpush1.msra.mxu0 %v1522
    %1643 = vmatprep.subr.mxu0 %v1527
    %1644 = vmatpush1.msra.mxu0 %v1526
    %1645 = vmatprep.subr.mxu0 %v1531
    %1646 = vmatpush1.msra.mxu0 %v1530
    %1647 = vmatprep.subr.mxu0 %v1535
    %1648 = vmatpush1.msra.mxu0 %v1534
    %1649 = vmatprep.subr.mxu0 %v1539
    %1650 = vmatpush1.msra.mxu0 %v1538
    %1651 = vmatprep.subr.mxu0 %v1543
    %1652 = vmatpush1.msra.mxu0 %v1542
    %1653 = vmatprep.subr.mxu0 %v1547
    %1654 = vmatpush1.msra.mxu0 %v1546
    %1655 = vmatprep.subr.mxu0 %v1551
    %1656 = vmatpush1.msra.mxu0 %v1550
    %1657 = vmatprep.subr.mxu0 %v1555
    %1658 = vmatpush1.msra.mxu0 %v1554
    %1659 = vmatprep.subr.mxu0 0.0
    %1660 = vmatpush1.msra.mxu0 0.0
    %1661 = vmatprep.subr.mxu0 0.0
    %1662 = vmatpush1.msra.mxu0 0.0
    %1663 = vmatprep.subr.mxu0 0.0
    %1664 = vmatpush1.msra.mxu0 0.0
    %1665 = vmatprep.subr.mxu0 0.0
    %1666 = vmatpush1.msra.mxu0 0.0
    %1667 = vmatprep.subr.mxu0 0.0
    %1668 = vmatpush1.msra.mxu0 0.0
    %1669 = vmatprep.subr.mxu0 0.0
    %1670 = vmatpush1.msra.mxu0 0.0
    %1671 = vmatprep.subr.mxu0 0.0
    %1672 = vmatpush1.msra.mxu0 0.0
    %1673 = vmatprep.subr.mxu0 0.0
    %1674 = vmatpush1.msra.mxu0 0.0
    %1675 = vmatprep.subr.mxu0 0.0
    %1676 = vmatpush1.msra.mxu0 0.0
    %1677 = vmatprep.subr.mxu0 0.0
    %1678 = vmatpush1.msra.mxu0 0.0
    %1679 = vmatprep.subr.mxu0 0.0
    %1680 = vmatpush1.msra.mxu0 0.0
    %1681 = vmatprep.subr.mxu0 0.0
    %1682 = vmatpush1.msra.mxu0 0.0
    %1683 = vmatprep.subr.mxu0 0.0
    %1684 = vmatpush1.msra.mxu0 0.0
    %1685 = vmatprep.subr.mxu0 0.0
    %1686 = vmatpush1.msra.mxu0 0.0
    %1687 = vmatprep.subr.mxu0 0.0
    %1688 = vmatpush1.msra.mxu0 0.0
    %1689 = vmatprep.subr.mxu0 0.0
    %1690 = vmatpush1.msra.mxu0 0.0
    %1691 = vmatprep.mubr.f32.mxu0 0.0
    %1692 = vmatmul.mubr.f32.gmra.mrb[0].mxu0 %v1484
    %v1693 = vpop.f32.mrb[0].mxu0
    %v1694 = vadd.f32 0.0, %v1693
    %v1695 = vpop.f32.mrb[0].mxu0
    %v1696 = vadd.f32 0.0, %v1695
    %1697 = vdwg.mxu0
    %v1698 = vadd.f32 %v1488, %v1623
    %v1699 = vadd.f32 %v1489, %v1625
    %v1700 = vadd.f32 %v1490, %v1694
    %v1701 = vadd.f32 %v1491, %v1696
    %v1702 = vxor.u32 %v1698, 2147483648
    %v1703 = vmul.f32 %v1702, 1.442695
    %v1704 = vpow.pop %v1703
    %v1705 = vadd.f32 %v1704, 1.0
    %v1706 = vrcp.pop %v1705
    %v1707 = vmul.f32 1.0, %v1706
    %v1708 = vxor.u32 %v1699, 2147483648
    %v1709 = vmul.f32 %v1708, 1.442695
    %v1710 = vpow.pop %v1709
    %v1711 = vadd.f32 %v1710, 1.0
    %v1712 = vrcp.pop %v1711
    %v1713 = vmul.f32 1.0, %v1712
    %v1714 = vtanh.pop %v1700
    %v1715 = vxor.u32 %v1701, 2147483648
    %v1716 = vmul.f32 %v1715, 1.442695
    %v1717 = vpow.pop %v1716
    %v1718 = vadd.f32 %v1717, 1.0
    %v1719 = vrcp.pop %v1718
    %v1720 = vmul.f32 1.0, %v1719
    %v1721 = vmul.f32 %v1713, %v1482
    %v1722 = vmul.f32 %v1707, %v1714
    %v1723 = vadd.f32 %v1721, %v1722
    %v1724 = vtanh.pop %v1723
    %v1725 = vmul.f32 %v1720, %v1724
    %s1726 = scalar_lea.vmem %s4, 48
    %1727 = vst [vmem:[%s1726] sm:$0xff] %v1725
    %s1728 = scalar_lea.vmem %s0, 224
    %v1729 = vld [vmem:[%s1728] sm:$0xff]
    %v1730 = vld [vmem:[%s1728 + $0x8] sm:$0xff]
    %v1731 = vld [vmem:[%s1728 + $0x10] sm:$0xff]
    %v1732 = vld [vmem:[%s1728 + $0x18] sm:$0xff]
    %v1733 = vld [vmem:[#allocation4] sm:$0xff]
    %v1734 = vld [vmem:[#allocation4 + $0x8] sm:$0xff]
    %v1735 = vld [vmem:[#allocation4 + $0x10] sm:$0xff]
    %v1736 = vld [vmem:[#allocation4 + $0x18] sm:$0xff]
    %v1737 = vld [vmem:[#allocation4 + $0x20] sm:$0xff]
    %v1738 = vld [vmem:[#allocation4 + $0x28] sm:$0xff]
    %v1739 = vld [vmem:[#allocation4 + $0x30] sm:$0xff]
    %v1740 = vld [vmem:[#allocation4 + $0x38] sm:$0xff]
    %v1741 = vld [vmem:[#allocation4 + $0x40] sm:$0xff]
    %v1742 = vld [vmem:[#allocation4 + $0x48] sm:$0xff]
    %v1743 = vld [vmem:[#allocation4 + $0x50] sm:$0xff]
    %v1744 = vld [vmem:[#allocation4 + $0x58] sm:$0xff]
    %v1745 = vld [vmem:[#allocation4 + $0x60] sm:$0xff]
    %v1746 = vld [vmem:[#allocation4 + $0x68] sm:$0xff]
    %v1747 = vld [vmem:[#allocation4 + $0x70] sm:$0xff]
    %v1748 = vld [vmem:[#allocation4 + $0x78] sm:$0xff]
    %v1749 = vld [vmem:[#allocation4 + $0x80] sm:$0xff]
    %v1750 = vld [vmem:[#allocation4 + $0x88] sm:$0xff]
    %v1751 = vld [vmem:[#allocation4 + $0x90] sm:$0xff]
    %v1752 = vld [vmem:[#allocation4 + $0x98] sm:$0xff]
    %v1753 = vld [vmem:[#allocation4 + $0xa0] sm:$0xff]
    %v1754 = vld [vmem:[#allocation4 + $0xa8] sm:$0xff]
    %v1755 = vld [vmem:[#allocation4 + $0xb0] sm:$0xff]
    %v1756 = vld [vmem:[#allocation4 + $0xb8] sm:$0xff]
    %v1757 = vld [vmem:[#allocation4 + $0xc0] sm:$0xff]
    %v1758 = vld [vmem:[#allocation4 + $0xc8] sm:$0xff]
    %v1759 = vld [vmem:[#allocation4 + $0xd0] sm:$0xff]
    %v1760 = vld [vmem:[#allocation4 + $0xd8] sm:$0xff]
    %v1761 = vld [vmem:[#allocation4 + $0xe0] sm:$0xff]
    %v1762 = vld [vmem:[#allocation4 + $0xe8] sm:$0xff]
    %v1763 = vld [vmem:[#allocation4 + $0xf0] sm:$0xff]
    %v1764 = vld [vmem:[#allocation4 + $0xf8] sm:$0xff]
    %v1765 = vld [vmem:[#allocation4 + $0x100] sm:$0xff]
    %v1766 = vld [vmem:[#allocation4 + $0x108] sm:$0xff]
    %v1767 = vld [vmem:[#allocation4 + $0x110] sm:$0xff]
    %v1768 = vld [vmem:[#allocation4 + $0x118] sm:$0xff]
    %v1769 = vld [vmem:[#allocation4 + $0x120] sm:$0xff]
    %v1770 = vld [vmem:[#allocation4 + $0x128] sm:$0xff]
    %v1771 = vld [vmem:[#allocation4 + $0x130] sm:$0xff]
    %v1772 = vld [vmem:[#allocation4 + $0x138] sm:$0xff]
    %v1773 = vld [vmem:[#allocation4 + $0x140] sm:$0xff]
    %v1774 = vld [vmem:[#allocation4 + $0x148] sm:$0xff]
    %v1775 = vld [vmem:[#allocation4 + $0x150] sm:$0xff]
    %v1776 = vld [vmem:[#allocation4 + $0x158] sm:$0xff]
    %v1777 = vld [vmem:[#allocation4 + $0x160] sm:$0xff]
    %v1778 = vld [vmem:[#allocation4 + $0x168] sm:$0xff]
    %v1779 = vld [vmem:[#allocation4 + $0x170] sm:$0xff]
    %v1780 = vld [vmem:[#allocation4 + $0x178] sm:$0xff]
    %v1781 = vld [vmem:[#allocation4 + $0x180] sm:$0xff]
    %v1782 = vld [vmem:[#allocation4 + $0x188] sm:$0xff]
    %v1783 = vld [vmem:[#allocation4 + $0x190] sm:$0xff]
    %v1784 = vld [vmem:[#allocation4 + $0x198] sm:$0xff]
    %v1785 = vld [vmem:[#allocation4 + $0x1a0] sm:$0xff]
    %v1786 = vld [vmem:[#allocation4 + $0x1a8] sm:$0xff]
    %v1787 = vld [vmem:[#allocation4 + $0x1b0] sm:$0xff]
    %v1788 = vld [vmem:[#allocation4 + $0x1b8] sm:$0xff]
    %v1789 = vld [vmem:[#allocation4 + $0x1c0] sm:$0xff]
    %v1790 = vld [vmem:[#allocation4 + $0x1c8] sm:$0xff]
    %v1791 = vld [vmem:[#allocation4 + $0x1d0] sm:$0xff]
    %v1792 = vld [vmem:[#allocation4 + $0x1d8] sm:$0xff]
    %v1793 = vld [vmem:[#allocation4 + $0x1e0] sm:$0xff]
    %v1794 = vld [vmem:[#allocation4 + $0x1e8] sm:$0xff]
    %v1795 = vld [vmem:[#allocation4 + $0x1f0] sm:$0xff]
    %v1796 = vld [vmem:[#allocation4 + $0x1f8] sm:$0xff]
    %1797 = vmatprep.subr.mxu0 %v1734
    %1798 = vmatpush1.msra.mxu0 %v1733
    %1799 = vmatprep.subr.mxu0 %v1738
    %1800 = vmatpush1.msra.mxu0 %v1737
    %1801 = vmatprep.subr.mxu0 %v1742
    %1802 = vmatpush1.msra.mxu0 %v1741
    %1803 = vmatprep.subr.mxu0 %v1746
    %1804 = vmatpush1.msra.mxu0 %v1745
    %1805 = vmatprep.subr.mxu0 %v1750
    %1806 = vmatpush1.msra.mxu0 %v1749
    %1807 = vmatprep.subr.mxu0 %v1754
    %1808 = vmatpush1.msra.mxu0 %v1753
    %1809 = vmatprep.subr.mxu0 %v1758
    %1810 = vmatpush1.msra.mxu0 %v1757
    %1811 = vmatprep.subr.mxu0 %v1762
    %1812 = vmatpush1.msra.mxu0 %v1761
    %1813 = vmatprep.subr.mxu0 %v1766
    %1814 = vmatpush1.msra.mxu0 %v1765
    %1815 = vmatprep.subr.mxu0 %v1770
    %1816 = vmatpush1.msra.mxu0 %v1769
    %1817 = vmatprep.subr.mxu0 %v1774
    %1818 = vmatpush1.msra.mxu0 %v1773
    %1819 = vmatprep.subr.mxu0 %v1778
    %1820 = vmatpush1.msra.mxu0 %v1777
    %1821 = vmatprep.subr.mxu0 %v1782
    %1822 = vmatpush1.msra.mxu0 %v1781
    %1823 = vmatprep.subr.mxu0 %v1786
    %1824 = vmatpush1.msra.mxu0 %v1785
    %1825 = vmatprep.subr.mxu0 %v1790
    %1826 = vmatpush1.msra.mxu0 %v1789
    %1827 = vmatprep.subr.mxu0 %v1794
    %1828 = vmatpush1.msra.mxu0 %v1793
    %1829 = vmatprep.subr.mxu0 0.0
    %1830 = vmatpush1.msra.mxu0 0.0
    %1831 = vmatprep.subr.mxu0 0.0
    %1832 = vmatpush1.msra.mxu0 0.0
    %1833 = vmatprep.subr.mxu0 0.0
    %1834 = vmatpush1.msra.mxu0 0.0
    %1835 = vmatprep.subr.mxu0 0.0
    %1836 = vmatpush1.msra.mxu0 0.0
    %1837 = vmatprep.subr.mxu0 0.0
    %1838 = vmatpush1.msra.mxu0 0.0
    %1839 = vmatprep.subr.mxu0 0.0
    %1840 = vmatpush1.msra.mxu0 0.0
    %1841 = vmatprep.subr.mxu0 0.0
    %1842 = vmatpush1.msra.mxu0 0.0
    %1843 = vmatprep.subr.mxu0 0.0
    %1844 = vmatpush1.msra.mxu0 0.0
    %1845 = vmatprep.subr.mxu0 0.0
    %1846 = vmatpush1.msra.mxu0 0.0
    %1847 = vmatprep.subr.mxu0 0.0
    %1848 = vmatpush1.msra.mxu0 0.0
    %1849 = vmatprep.subr.mxu0 0.0
    %1850 = vmatpush1.msra.mxu0 0.0
    %1851 = vmatprep.subr.mxu0 0.0
    %1852 = vmatpush1.msra.mxu0 0.0
    %1853 = vmatprep.subr.mxu0 0.0
    %1854 = vmatpush1.msra.mxu0 0.0
    %1855 = vmatprep.subr.mxu0 0.0
    %1856 = vmatpush1.msra.mxu0 0.0
    %1857 = vmatprep.subr.mxu0 0.0
    %1858 = vmatpush1.msra.mxu0 0.0
    %1859 = vmatprep.subr.mxu0 0.0
    %1860 = vmatpush1.msra.mxu0 0.0
    %1861 = vmatprep.mubr.f32.mxu0 0.0
    %1862 = vmatmul.mubr.f32.gmra.mrb[0].mxu0 %v1725
    %v1863 = vpop.f32.mrb[0].mxu0
    %v1864 = vadd.f32 0.0, %v1863
    %v1865 = vpop.f32.mrb[0].mxu0
    %v1866 = vadd.f32 0.0, %v1865
    %1867 = vdwg.mxu0
    %1868 = vmatprep.subr.mxu0 %v1736
    %1869 = vmatpush1.msra.mxu0 %v1735
    %1870 = vmatprep.subr.mxu0 %v1740
    %1871 = vmatpush1.msra.mxu0 %v1739
    %1872 = vmatprep.subr.mxu0 %v1744
    %1873 = vmatpush1.msra.mxu0 %v1743
    %1874 = vmatprep.subr.mxu0 %v1748
    %1875 = vmatpush1.msra.mxu0 %v1747
    %1876 = vmatprep.subr.mxu0 %v1752
    %1877 = vmatpush1.msra.mxu0 %v1751
    %1878 = vmatprep.subr.mxu0 %v1756
    %1879 = vmatpush1.msra.mxu0 %v1755
    %1880 = vmatprep.subr.mxu0 %v1760
    %1881 = vmatpush1.msra.mxu0 %v1759
    %1882 = vmatprep.subr.mxu0 %v1764
    %1883 = vmatpush1.msra.mxu0 %v1763
    %1884 = vmatprep.subr.mxu0 %v1768
    %1885 = vmatpush1.msra.mxu0 %v1767
    %1886 = vmatprep.subr.mxu0 %v1772
    %1887 = vmatpush1.msra.mxu0 %v1771
    %1888 = vmatprep.subr.mxu0 %v1776
    %1889 = vmatpush1.msra.mxu0 %v1775
    %1890 = vmatprep.subr.mxu0 %v1780
    %1891 = vmatpush1.msra.mxu0 %v1779
    %1892 = vmatprep.subr.mxu0 %v1784
    %1893 = vmatpush1.msra.mxu0 %v1783
    %1894 = vmatprep.subr.mxu0 %v1788
    %1895 = vmatpush1.msra.mxu0 %v1787
    %1896 = vmatprep.subr.mxu0 %v1792
    %1897 = vmatpush1.msra.mxu0 %v1791
    %1898 = vmatprep.subr.mxu0 %v1796
    %1899 = vmatpush1.msra.mxu0 %v1795
    %1900 = vmatprep.subr.mxu0 0.0
    %1901 = vmatpush1.msra.mxu0 0.0
    %1902 = vmatprep.subr.mxu0 0.0
    %1903 = vmatpush1.msra.mxu0 0.0
    %1904 = vmatprep.subr.mxu0 0.0
    %1905 = vmatpush1.msra.mxu0 0.0
    %1906 = vmatprep.subr.mxu0 0.0
    %1907 = vmatpush1.msra.mxu0 0.0
    %1908 = vmatprep.subr.mxu0 0.0
    %1909 = vmatpush1.msra.mxu0 0.0
    %1910 = vmatprep.subr.mxu0 0.0
    %1911 = vmatpush1.msra.mxu0 0.0
    %1912 = vmatprep.subr.mxu0 0.0
    %1913 = vmatpush1.msra.mxu0 0.0
    %1914 = vmatprep.subr.mxu0 0.0
    %1915 = vmatpush1.msra.mxu0 0.0
    %1916 = vmatprep.subr.mxu0 0.0
    %1917 = vmatpush1.msra.mxu0 0.0
    %1918 = vmatprep.subr.mxu0 0.0
    %1919 = vmatpush1.msra.mxu0 0.0
    %1920 = vmatprep.subr.mxu0 0.0
    %1921 = vmatpush1.msra.mxu0 0.0
    %1922 = vmatprep.subr.mxu0 0.0
    %1923 = vmatpush1.msra.mxu0 0.0
    %1924 = vmatprep.subr.mxu0 0.0
    %1925 = vmatpush1.msra.mxu0 0.0
    %1926 = vmatprep.subr.mxu0 0.0
    %1927 = vmatpush1.msra.mxu0 0.0
    %1928 = vmatprep.subr.mxu0 0.0
    %1929 = vmatpush1.msra.mxu0 0.0
    %1930 = vmatprep.subr.mxu0 0.0
    %1931 = vmatpush1.msra.mxu0 0.0
    %1932 = vmatprep.mubr.f32.mxu0 0.0
    %1933 = vmatmul.mubr.f32.gmra.mrb[0].mxu0 %v1725
    %v1934 = vpop.f32.mrb[0].mxu0
    %v1935 = vadd.f32 0.0, %v1934
    %v1936 = vpop.f32.mrb[0].mxu0
    %v1937 = vadd.f32 0.0, %v1936
    %1938 = vdwg.mxu0
    %v1939 = vadd.f32 %v1729, %v1864
    %v1940 = vadd.f32 %v1730, %v1866
    %v1941 = vadd.f32 %v1731, %v1935
    %v1942 = vadd.f32 %v1732, %v1937
    %v1943 = vxor.u32 %v1939, 2147483648
    %v1944 = vmul.f32 %v1943, 1.442695
    %v1945 = vpow.pop %v1944
    %v1946 = vadd.f32 %v1945, 1.0
    %v1947 = vrcp.pop %v1946
    %v1948 = vmul.f32 1.0, %v1947
    %v1949 = vxor.u32 %v1940, 2147483648
    %v1950 = vmul.f32 %v1949, 1.442695
    %v1951 = vpow.pop %v1950
    %v1952 = vadd.f32 %v1951, 1.0
    %v1953 = vrcp.pop %v1952
    %v1954 = vmul.f32 1.0, %v1953
    %v1955 = vtanh.pop %v1941
    %v1956 = vxor.u32 %v1942, 2147483648
    %v1957 = vmul.f32 %v1956, 1.442695
    %v1958 = vpow.pop %v1957
    %v1959 = vadd.f32 %v1958, 1.0
    %v1960 = vrcp.pop %v1959
    %v1961 = vmul.f32 1.0, %v1960
    %v1962 = vmul.f32 %v1954, %v1723
    %v1963 = vmul.f32 %v1948, %v1955
    %v1964 = vadd.f32 %v1962, %v1963
    %v1965 = vtanh.pop %v1964
    %v1966 = vmul.f32 %v1961, %v1965
    %s1967 = scalar_lea.vmem %s4, 56
    %1968 = vst [vmem:[%s1967] sm:$0xff] %v1966
    %1969 = vst [vmem:[#allocation2] sm:$0xff] %v1966
    %1970 = vst [vmem:[#allocation3] sm:$0xff] %v1964
    // Predicated region
    $region26: #{lstm_forward.2} parent=1 // pred_check
      %p1971 = pneg %p33
    $region27: #{lstm_forward.2} parent=1 // pred_check_branch
      %1973 = sbr.rel (%p1971) target = $region29
    $region28: #{lstm_forward.2} parent=1 // pred_region
      %1974 = vst [vmem:[%s5] sm:$0xff] %v1964
    $region29: #{lstm_forward.2} parent=1 // pred_fallthru
      _
    // Predicated region
    $region30: #{lstm_forward.2} parent=1 // pred_check
      _
    $region31: #{lstm_forward.2} parent=1 // pred_check_branch
      %1976 = sbr.rel (0) target = $region33
    $region32: #{lstm_forward.2} parent=1 // pred_region
      _
    $region33: #{lstm_forward.2} parent=1 // pred_fallthru
      _
    // Predicated region
    $region34: #{lstm_forward.2} parent=1 // pred_check
      _
    $region35: #{lstm_forward.2} parent=1 // pred_check_branch
      %1978 = sbr.rel (0) target = $region37
    $region36: #{lstm_forward.2} parent=1 // pred_region
      _
    $region37: #{lstm_forward.2} parent=1 // pred_fallthru
      _
    // Predicated region
    $region38: #{lstm_forward.2} parent=1 // pred_check
      _
    $region39: #{lstm_forward.2} parent=1 // pred_check_branch
      %1980 = sbr.rel (0) target = $region41
    $region40: #{lstm_forward.2} parent=1 // pred_region
      _
    $region41: #{lstm_forward.2} parent=1 // pred_fallthru
      _
    // Predicated region
    $region42: #{lstm_forward.2} parent=1 // pred_check
      _
    $region43: #{lstm_forward.2} parent=1 // pred_check_branch
      %1982 = sbr.rel (0) target = $region45
    $region44: #{lstm_forward.2} parent=1 // pred_region
      _
    $region45: #{lstm_forward.2} parent=1 // pred_fallthru
      _
    %1983 = vsyncpa [#allocation5], 1

// kernel: lstm_forward.3
$region0: #{lstm_forward.3}
  #allocation0 [shape = 'u32[]', space=smem, size = 0x4, offset = 0x4, fixed_abs, tag = 'smem constant byte address 0x4 - core index']
  #allocation1 [shape = 'u32[144,128]{1,0:T(1,128)}', space=vmem, size = 0x12000, scoped, tag = 'internal scratch']
  #allocation2 [shape = 'f32[8,128]{1,0:T(8,128)}', space=vmem, size = 0x1000, scoped, tag = 'scratch operand']
  #allocation3 [shape = 'f32[8,128]{1,0:T(8,128)}', space=vmem, size = 0x1000, scoped, tag = 'scratch operand']
  %s0 = inlined_call_operand.vmem [shape: f32[8,8,512], index: 0, kind: input, shape index: {}]
  %s1 = inlined_call_operand.vmem [shape: f32[128,512], index: 1, kind: input, shape index: {}]
  %s2 = inlined_call_operand.vmem [shape: f32[8,128], index: 2, kind: input, shape index: {}, may-alias: {2,3}]
  %s3 = inlined_call_operand.vmem [shape: f32[8,128], index: 3, kind: input, shape index: {}, may-alias: {2,3}]
  %s4 = inlined_call_operand.vmem [shape: f32[8,8,128], index: 4, kind: output, shape index: {0}]
  %s5 = inlined_call_operand.vmem [shape: f32[8,128], index: 5, kind: output, shape index: {1}]
  %6 = xla_tuple %s4, %s5
  %s7 = sld [smem:[#allocation0]]
  $region42: #{lstm_forward.3} parent=0
    _
  %s9 = ssub.s32 1, %s7
  %s10 = scalar_select 0, %s9, %s7
  // Predicated region
  $region2: #{lstm_forward.3} parent=0 // pred_check
    _
  $region3: #{lstm_forward.3} parent=0 // pred_check_branch
    %12 = sbr.rel (0) target = $region5
  $region4: #{lstm_forward.3} parent=0 // pred_region
    _
  $region5: #{lstm_forward.3} parent=0 // pred_fallthru
    _
  // Predicated region
  $region6: #{lstm_forward.3} parent=0 // pred_check
    _
  $region7: #{lstm_forward.3} parent=0 // pred_check_branch
    %14 = sbr.rel (0) target = $region9
  $region8: #{lstm_forward.3} parent=0 // pred_region
    _
  $region9: #{lstm_forward.3} parent=0 // pred_fallthru
    _
  // Predicated region
  $region10: #{lstm_forward.3} parent=0 // pred_check
    _
  $region11: #{lstm_forward.3} parent=0 // pred_check_branch
    %16 = sbr.rel (0) target = $region13
  $region12: #{lstm_forward.3} parent=0 // pred_region
    _
  $region13: #{lstm_forward.3} parent=0 // pred_fallthru
    _
  // Predicated region
  $region14: #{lstm_forward.3} parent=0 // pred_check
    _
  $region15: #{lstm_forward.3} parent=0 // pred_check_branch
    %18 = sbr.rel (0) target = $region17
  $region16: #{lstm_forward.3} parent=0 // pred_region
    _
  $region17: #{lstm_forward.3} parent=0 // pred_fallthru
    _
  %p19 = scmp.eq.s32.totalorder 0, 0
  // Predicated region
  $region18: #{lstm_forward.3} parent=0 // pred_check
    %p20 = pneg %p19
  $region19: #{lstm_forward.3} parent=0 // pred_check_branch
    %22 = sbr.rel (%p20) target = $region21
  $region20: #{lstm_forward.3} parent=0 // pred_region
    %v23 = vld [vmem:[%s2] sm:$0xff]
    %24 = vst [vmem:[#allocation2] sm:$0xff] %v23
    %v25 = vld [vmem:[%s3] sm:$0xff]
    %26 = vst [vmem:[#allocation3] sm:$0xff] %v25
  $region21: #{lstm_forward.3} parent=0 // pred_fallthru
    _
  %v27 = vld [vmem:[#allocation2] sm:$0xff]
  %v28 = vld [vmem:[#allocation3] sm:$0xff]
  %v29 = vld [vmem:[%s0] sm:$0xff]
  %v30 = vld [vmem:[%s0 + $0x8] sm:$0xff]
  %v31 = vld [vmem:[%s0 + $0x10] sm:$0xff]
  %v32 = vld [vmem:[%s0 + $0x18] sm:$0xff]
  %v33 = vld [vmem:[%s1] sm:$0xff]
  %v34 = vld [vmem:[%s1 + $0x8] sm:$0xff]
  %v35 = vld [vmem:[%s1 + $0x10] sm:$0xff]
  %v36 = vld [vmem:[%s1 + $0x18] sm:$0xff]
  %v37 = vld [vmem:[%s1 + $0x20] sm:$0xff]
  %v38 = vld [vmem:[%s1 + $0x28] sm:$0xff]
  %v39 = vld [vmem:[%s1 + $0x30] sm:$0xff]
  %v40 = vld [vmem:[%s1 + $0x38] sm:$0xff]
  %v41 = vld [vmem:[%s1 + $0x40] sm:$0xff]
  %v42 = vld [vmem:[%s1 + $0x48] sm:$0xff]
  %v43 = vld [vmem:[%s1 + $0x50] sm:$0xff]
  %v44 = vld [vmem:[%s1 + $0x58] sm:$0xff]
  %v45 = vld [vmem:[%s1 + $0x60] sm:$0xff]
  %v46 = vld [vmem:[%s1 + $0x68] sm:$0xff]
  %v47 = vld [vmem:[%s1 + $0x70] sm:$0xff]
  %v48 = vld [vmem:[%s1 + $0x78] sm:$0xff]
  %v49 = vld [vmem:[%s1 + $0x80] sm:$0xff]
  %v50 = vld [vmem:[%s1 + $0x88] sm:$0xff]
  %v51 = vld [vmem:[%s1 + $0x90] sm:$0xff]
  %v52 = vld [vmem:[%s1 + $0x98] sm:$0xff]
  %v53 = vld [vmem:[%s1 + $0xa0] sm:$0xff]
  %v54 = vld [vmem:[%s1 + $0xa8] sm:$0xff]
  %v55 = vld [vmem:[%s1 + $0xb0] sm:$0xff]
  %v56 = vld [vmem:[%s1 + $0xb8] sm:$0xff]
  %v57 = vld [vmem:[%s1 + $0xc0] sm:$0xff]
  %v58 = vld [vmem:[%s1 + $0xc8] sm:$0xff]
  %v59 = vld [vmem:[%s1 + $0xd0] sm:$0xff]
  %v60 = vld [vmem:[%s1 + $0xd8] sm:$0xff]
  %v61 = vld [vmem:[%s1 + $0xe0] sm:$0xff]
  %v62 = vld [vmem:[%s1 + $0xe8] sm:$0xff]
  %v63 = vld [vmem:[%s1 + $0xf0] sm:$0xff]
  %v64 = vld [vmem:[%s1 + $0xf8] sm:$0xff]
  %v65 = vld [vmem:[%s1 + $0x100] sm:$0xff]
  %v66 = vld [vmem:[%s1 + $0x108] sm:$0xff]
  %v67 = vld [vmem:[%s1 + $0x110] sm:$0xff]
  %v68 = vld [vmem:[%s1 + $0x118] sm:$0xff]
  %v69 = vld [vmem:[%s1 + $0x120] sm:$0xff]
  %v70 = vld [vmem:[%s1 + $0x128] sm:$0xff]
  %v71 = vld [vmem:[%s1 + $0x130] sm:$0xff]
  %v72 = vld [vmem:[%s1 + $0x138] sm:$0xff]
  %v73 = vld [vmem:[%s1 + $0x140] sm:$0xff]
  %v74 = vld [vmem:[%s1 + $0x148] sm:$0xff]
  %v75 = vld [vmem:[%s1 + $0x150] sm:$0xff]
  %v76 = vld [vmem:[%s1 + $0x158] sm:$0xff]
  %v77 = vld [vmem:[%s1 + $0x160] sm:$0xff]
  %v78 = vld [vmem:[%s1 + $0x168] sm:$0xff]
  %v79 = vld [vmem:[%s1 + $0x170] sm:$0xff]
  %v80 = vld [vmem:[%s1 + $0x178] sm:$0xff]
  %v81 = vld [vmem:[%s1 + $0x180] sm:$0xff]
  %v82 = vld [vmem:[%s1 + $0x188] sm:$0xff]
  %v83 = vld [vmem:[%s1 + $0x190] sm:$0xff]
  %v84 = vld [vmem:[%s1 + $0x198] sm:$0xff]
  %v85 = vld [vmem:[%s1 + $0x1a0] sm:$0xff]
  %v86 = vld [vmem:[%s1 + $0x1a8] sm:$0xff]
  %v87 = vld [vmem:[%s1 + $0x1b0] sm:$0xff]
  %v88 = vld [vmem:[%s1 + $0x1b8] sm:$0xff]
  %v89 = vld [vmem:[%s1 + $0x1c0] sm:$0xff]
  %v90 = vld [vmem:[%s1 + $0x1c8] sm:$0xff]
  %v91 = vld [vmem:[%s1 + $0x1d0] sm:$0xff]
  %v92 = vld [vmem:[%s1 + $0x1d8] sm:$0xff]
  %v93 = vld [vmem:[%s1 + $0x1e0] sm:$0xff]
  %v94 = vld [vmem:[%s1 + $0x1e8] sm:$0xff]
  %v95 = vld [vmem:[%s1 + $0x1f0] sm:$0xff]
  %v96 = vld [vmem:[%s1 + $0x1f8] sm:$0xff]
  %97 = vmatprep.subr.mxu0 %v34
  %98 = vmatpush1.msra.mxu0 %v33
  %99 = vmatprep.subr.mxu0 %v38
  %100 = vmatpush1.msra.mxu0 %v37
  %101 = vmatprep.subr.mxu0 %v42
  %102 = vmatpush1.msra.mxu0 %v41
  %103 = vmatprep.subr.mxu0 %v46
  %104 = vmatpush1.msra.mxu0 %v45
  %105 = vmatprep.subr.mxu0 %v50
  %106 = vmatpush1.msra.mxu0 %v49
  %107 = vmatprep.subr.mxu0 %v54
  %108 = vmatpush1.msra.mxu0 %v53
  %109 = vmatprep.subr.mxu0 %v58
  %110 = vmatpush1.msra.mxu0 %v57
  %111 = vmatprep.subr.mxu0 %v62
  %112 = vmatpush1.msra.mxu0 %v61
  %113 = vmatprep.subr.mxu0 %v66
  %114 = vmatpush1.msra.mxu0 %v65
  %115 = vmatprep.subr.mxu0 %v70
  %116 = vmatpush1.msra.mxu0 %v69
  %117 = vmatprep.subr.mxu0 %v74
  %118 = vmatpush1.msra.mxu0 %v73
  %119 = vmatprep.subr.mxu0 %v78
  %120 = vmatpush1.msra.mxu0 %v77
  %121 = vmatprep.subr.mxu0 %v82
  %122 = vmatpush1.msra.mxu0 %v81
  %123 = vmatprep.subr.mxu0 %v86
  %124 = vmatpush1.msra.mxu0 %v85
  %125 = vmatprep.subr.mxu0 %v90
  %126 = vmatpush1.msra.mxu0 %v89
  %127 = vmatprep.subr.mxu0 %v94
  %128 = vmatpush1.msra.mxu0 %v93
  %129 = vmatprep.subr.mxu0 0.0
  %130 = vmatpush1.msra.mxu0 0.0
  %131 = vmatprep.subr.mxu0 0.0
  %132 = vmatpush1.msra.mxu0 0.0
  %133 = vmatprep.subr.mxu0 0.0
  %134 = vmatpush1.msra.mxu0 0.0
  %135 = vmatprep.subr.mxu0 0.0
  %136 = vmatpush1.msra.mxu0 0.0
  %137 = vmatprep.subr.mxu0 0.0
  %138 = vmatpush1.msra.mxu0 0.0
  %139 = vmatprep.subr.mxu0 0.0
  %140 = vmatpush1.msra.mxu0 0.0
  %141 = vmatprep.subr.mxu0 0.0
  %142 = vmatpush1.msra.mxu0 0.0
  %143 = vmatprep.subr.mxu0 0.0
  %144 = vmatpush1.msra.mxu0 0.0
  %145 = vmatprep.subr.mxu0 0.0
  %146 = vmatpush1.msra.mxu0 0.0
  %147 = vmatprep.subr.mxu0 0.0
  %148 = vmatpush1.msra.mxu0 0.0
  %149 = vmatprep.subr.mxu0 0.0
  %150 = vmatpush1.msra.mxu0 0.0
  %151 = vmatprep.subr.mxu0 0.0
  %152 = vmatpush1.msra.mxu0 0.0
  %153 = vmatprep.subr.mxu0 0.0
  %154 = vmatpush1.msra.mxu0 0.0
  %155 = vmatprep.subr.mxu0 0.0
  %156 = vmatpush1.msra.mxu0 0.0
  %157 = vmatprep.subr.mxu0 0.0
  %158 = vmatpush1.msra.mxu0 0.0
  %159 = vmatprep.subr.mxu0 0.0
  %160 = vmatpush1.msra.mxu0 0.0
  %161 = vmatprep.mubr.f32.mxu0 0.0
  %162 = vmatmul.mubr.f32.gmra.mrb[0].mxu0 %v27
  %v163 = vpop.f32.mrb[0].mxu0
  %v164 = vadd.f32 0.0, %v163
  %v165 = vpop.f32.mrb[0].mxu0
  %v166 = vadd.f32 0.0, %v165
  %167 = vdwg.mxu0
  %168 = vmatprep.subr.mxu0 %v36
  %169 = vmatpush1.msra.mxu0 %v35
  %170 = vmatprep.subr.mxu0 %v40
  %171 = vmatpush1.msra.mxu0 %v39
  %172 = vmatprep.subr.mxu0 %v44
  %173 = vmatpush1.msra.mxu0 %v43
  %174 = vmatprep.subr.mxu0 %v48
  %175 = vmatpush1.msra.mxu0 %v47
  %176 = vmatprep.subr.mxu0 %v52
  %177 = vmatpush1.msra.mxu0 %v51
  %178 = vmatprep.subr.mxu0 %v56
  %179 = vmatpush1.msra.mxu0 %v55
  %180 = vmatprep.subr.mxu0 %v60
  %181 = vmatpush1.msra.mxu0 %v59
  %182 = vmatprep.subr.mxu0 %v64
  %183 = vmatpush1.msra.mxu0 %v63
  %184 = vmatprep.subr.mxu0 %v68
  %185 = vmatpush1.msra.mxu0 %v67
  %186 = vmatprep.subr.mxu0 %v72
  %187 = vmatpush1.msra.mxu0 %v71
  %188 = vmatprep.subr.mxu0 %v76
  %189 = vmatpush1.msra.mxu0 %v75
  %190 = vmatprep.subr.mxu0 %v80
  %191 = vmatpush1.msra.mxu0 %v79
  %192 = vmatprep.subr.mxu0 %v84
  %193 = vmatpush1.msra.mxu0 %v83
  %194 = vmatprep.subr.mxu0 %v88
  %195 = vmatpush1.msra.mxu0 %v87
  %196 = vmatprep.subr.mxu0 %v92
  %197 = vmatpush1.msra.mxu0 %v91
  %198 = vmatprep.subr.mxu0 %v96
  %199 = vmatpush1.msra.mxu0 %v95
  %200 = vmatprep.subr.mxu0 0.0
  %201 = vmatpush1.msra.mxu0 0.0
  %202 = vmatprep.subr.mxu0 0.0
  %203 = vmatpush1.msra.mxu0 0.0
  %204 = vmatprep.subr.mxu0 0.0
  %205 = vmatpush1.msra.mxu0 0.0
  %206 = vmatprep.subr.mxu0 0.0
  %207 = vmatpush1.msra.mxu0 0.0
  %208 = vmatprep.subr.mxu0 0.0
  %209 = vmatpush1.msra.mxu0 0.0
  %210 = vmatprep.subr.mxu0 0.0
  %211 = vmatpush1.msra.mxu0 0.0
  %212 = vmatprep.subr.mxu0 0.0
  %213 = vmatpush1.msra.mxu0 0.0
  %214 = vmatprep.subr.mxu0 0.0
  %215 = vmatpush1.msra.mxu0 0.0
  %216 = vmatprep.subr.mxu0 0.0
  %217 = vmatpush1.msra.mxu0 0.0
  %218 = vmatprep.subr.mxu0 0.0
  %219 = vmatpush1.msra.mxu0 0.0
  %220 = vmatprep.subr.mxu0 0.0
  %221 = vmatpush1.msra.mxu0 0.0
  %222 = vmatprep.subr.mxu0 0.0
  %223 = vmatpush1.msra.mxu0 0.0
  %224 = vmatprep.subr.mxu0 0.0
  %225 = vmatpush1.msra.mxu0 0.0
  %226 = vmatprep.subr.mxu0 0.0
  %227 = vmatpush1.msra.mxu0 0.0
  %228 = vmatprep.subr.mxu0 0.0
  %229 = vmatpush1.msra.mxu0 0.0
  %230 = vmatprep.subr.mxu0 0.0
  %231 = vmatpush1.msra.mxu0 0.0
  %232 = vmatprep.mubr.f32.mxu0 0.0
  %233 = vmatmul.mubr.f32.gmra.mrb[0].mxu0 %v27
  %v234 = vpop.f32.mrb[0].mxu0
  %v235 = vadd.f32 0.0, %v234
  %v236 = vpop.f32.mrb[0].mxu0
  %v237 = vadd.f32 0.0, %v236
  %238 = vdwg.mxu0
  %v239 = vadd.f32 %v29, %v164
  %v240 = vadd.f32 %v30, %v166
  %v241 = vadd.f32 %v31, %v235
  %v242 = vadd.f32 %v32, %v237
  %v243 = vxor.u32 %v239, 2147483648
  %v244 = vmul.f32 %v243, 1.442695
  %v245 = vpow.pop %v244
  %v246 = vadd.f32 %v245, 1.0
  %v247 = vrcp.pop %v246
  %v248 = vmul.f32 1.0, %v247
  %v249 = vxor.u32 %v240, 2147483648
  %v250 = vmul.f32 %v249, 1.442695
  %v251 = vpow.pop %v250
  %v252 = vadd.f32 %v251, 1.0
  %v253 = vrcp.pop %v252
  %v254 = vmul.f32 1.0, %v253
  %v255 = vtanh.pop %v241
  %v256 = vxor.u32 %v242, 2147483648
  %v257 = vmul.f32 %v256, 1.442695
  %v258 = vpow.pop %v257
  %v259 = vadd.f32 %v258, 1.0
  %v260 = vrcp.pop %v259
  %v261 = vmul.f32 1.0, %v260
  %v262 = vmul.f32 %v254, %v28
  %v263 = vmul.f32 %v248, %v255
  %v264 = vadd.f32 %v262, %v263
  %v265 = vtanh.pop %v264
  %v266 = vmul.f32 %v261, %v265
  %267 = vst [vmem:[%s4] sm:$0xff] %v266
  %s268 = scalar_lea.vmem %s0, 32
  %v269 = vld [vmem:[%s268] sm:$0xff]
  %v270 = vld [vmem:[%s268 + $0x8] sm:$0xff]
  %v271 = vld [vmem:[%s268 + $0x10] sm:$0xff]
  %v272 = vld [vmem:[%s268 + $0x18] sm:$0xff]
  %v273 = vld [vmem:[%s1] sm:$0xff]
  %v274 = vld [vmem:[%s1 + $0x8] sm:$0xff]
  %v275 = vld [vmem:[%s1 + $0x10] sm:$0xff]
  %v276 = vld [vmem:[%s1 + $0x18] sm:$0xff]
  %v277 = vld [vmem:[%s1 + $0x20] sm:$0xff]
  %v278 = vld [vmem:[%s1 + $0x28] sm:$0xff]
  %v279 = vld [vmem:[%s1 + $0x30] sm:$0xff]
  %v280 = vld [vmem:[%s1 + $0x38] sm:$0xff]
  %v281 = vld [vmem:[%s1 + $0x40] sm:$0xff]
  %v282 = vld [vmem:[%s1 + $0x48] sm:$0xff]
  %v283 = vld [vmem:[%s1 + $0x50] sm:$0xff]
  %v284 = vld [vmem:[%s1 + $0x58] sm:$0xff]
  %v285 = vld [vmem:[%s1 + $0x60] sm:$0xff]
  %v286 = vld [vmem:[%s1 + $0x68] sm:$0xff]
  %v287 = vld [vmem:[%s1 + $0x70] sm:$0xff]
  %v288 = vld [vmem:[%s1 + $0x78] sm:$0xff]
  %v289 = vld [vmem:[%s1 + $0x80] sm:$0xff]
  %v290 = vld [vmem:[%s1 + $0x88] sm:$0xff]
  %v291 = vld [vmem:[%s1 + $0x90] sm:$0xff]
  %v292 = vld [vmem:[%s1 + $0x98] sm:$0xff]
  %v293 = vld [vmem:[%s1 + $0xa0] sm:$0xff]
  %v294 = vld [vmem:[%s1 + $0xa8] sm:$0xff]
  %v295 = vld [vmem:[%s1 + $0xb0] sm:$0xff]
  %v296 = vld [vmem:[%s1 + $0xb8] sm:$0xff]
  %v297 = vld [vmem:[%s1 + $0xc0] sm:$0xff]
  %v298 = vld [vmem:[%s1 + $0xc8] sm:$0xff]
  %v299 = vld [vmem:[%s1 + $0xd0] sm:$0xff]
  %v300 = vld [vmem:[%s1 + $0xd8] sm:$0xff]
  %v301 = vld [vmem:[%s1 + $0xe0] sm:$0xff]
  %v302 = vld [vmem:[%s1 + $0xe8] sm:$0xff]
  %v303 = vld [vmem:[%s1 + $0xf0] sm:$0xff]
  %v304 = vld [vmem:[%s1 + $0xf8] sm:$0xff]
  %v305 = vld [vmem:[%s1 + $0x100] sm:$0xff]
  %v306 = vld [vmem:[%s1 + $0x108] sm:$0xff]
  %v307 = vld [vmem:[%s1 + $0x110] sm:$0xff]
  %v308 = vld [vmem:[%s1 + $0x118] sm:$0xff]
  %v309 = vld [vmem:[%s1 + $0x120] sm:$0xff]
  %v310 = vld [vmem:[%s1 + $0x128] sm:$0xff]
  %v311 = vld [vmem:[%s1 + $0x130] sm:$0xff]
  %v312 = vld [vmem:[%s1 + $0x138] sm:$0xff]
  %v313 = vld [vmem:[%s1 + $0x140] sm:$0xff]
  %v314 = vld [vmem:[%s1 + $0x148] sm:$0xff]
  %v315 = vld [vmem:[%s1 + $0x150] sm:$0xff]
  %v316 = vld [vmem:[%s1 + $0x158] sm:$0xff]
  %v317 = vld [vmem:[%s1 + $0x160] sm:$0xff]
  %v318 = vld [vmem:[%s1 + $0x168] sm:$0xff]
  %v319 = vld [vmem:[%s1 + $0x170] sm:$0xff]
  %v320 = vld [vmem:[%s1 + $0x178] sm:$0xff]
  %v321 = vld [vmem:[%s1 + $0x180] sm:$0xff]
  %v322 = vld [vmem:[%s1 + $0x188] sm:$0xff]
  %v323 = vld [vmem:[%s1 + $0x190] sm:$0xff]
  %v324 = vld [vmem:[%s1 + $0x198] sm:$0xff]
  %v325 = vld [vmem:[%s1 + $0x1a0] sm:$0xff]
  %v326 = vld [vmem:[%s1 + $0x1a8] sm:$0xff]
  %v327 = vld [vmem:[%s1 + $0x1b0] sm:$0xff]
  %v328 = vld [vmem:[%s1 + $0x1b8] sm:$0xff]
  %v329 = vld [vmem:[%s1 + $0x1c0] sm:$0xff]
  %v330 = vld [vmem:[%s1 + $0x1c8] sm:$0xff]
  %v331 = vld [vmem:[%s1 + $0x1d0] sm:$0xff]
  %v332 = vld [vmem:[%s1 + $0x1d8] sm:$0xff]
  %v333 = vld [vmem:[%s1 + $0x1e0] sm:$0xff]
  %v334 = vld [vmem:[%s1 + $0x1e8] sm:$0xff]
  %v335 = vld [vmem:[%s1 + $0x1f0] sm:$0xff]
  %v336 = vld [vmem:[%s1 + $0x1f8] sm:$0xff]
  %337 = vmatprep.subr.mxu0 %v274
  %338 = vmatpush1.msra.mxu0 %v273
  %339 = vmatprep.subr.mxu0 %v278
  %340 = vmatpush1.msra.mxu0 %v277
  %341 = vmatprep.subr.mxu0 %v282
  %342 = vmatpush1.msra.mxu0 %v281
  %343 = vmatprep.subr.mxu0 %v286
  %344 = vmatpush1.msra.mxu0 %v285
  %345 = vmatprep.subr.mxu0 %v290
  %346 = vmatpush1.msra.mxu0 %v289
  %347 = vmatprep.subr.mxu0 %v294
  %348 = vmatpush1.msra.mxu0 %v293
  %349 = vmatprep.subr.mxu0 %v298
  %350 = vmatpush1.msra.mxu0 %v297
  %351 = vmatprep.subr.mxu0 %v302
  %352 = vmatpush1.msra.mxu0 %v301
  %353 = vmatprep.subr.mxu0 %v306
  %354 = vmatpush1.msra.mxu0 %v305
  %355 = vmatprep.subr.mxu0 %v310
  %356 = vmatpush1.msra.mxu0 %v309
  %357 = vmatprep.subr.mxu0 %v314
  %358 = vmatpush1.msra.mxu0 %v313
  %359 = vmatprep.subr.mxu0 %v318
  %360 = vmatpush1.msra.mxu0 %v317
  %361 = vmatprep.subr.mxu0 %v322
  %362 = vmatpush1.msra.mxu0 %v321
  %363 = vmatprep.subr.mxu0 %v326
  %364 = vmatpush1.msra.mxu0 %v325
  %365 = vmatprep.subr.mxu0 %v330
  %366 = vmatpush1.msra.mxu0 %v329
  %367 = vmatprep.subr.mxu0 %v334
  %368 = vmatpush1.msra.mxu0 %v333
  %369 = vmatprep.subr.mxu0 0.0
  %370 = vmatpush1.msra.mxu0 0.0
  %371 = vmatprep.subr.mxu0 0.0
  %372 = vmatpush1.msra.mxu0 0.0
  %373 = vmatprep.subr.mxu0 0.0
  %374 = vmatpush1.msra.mxu0 0.0
  %375 = vmatprep.subr.mxu0 0.0
  %376 = vmatpush1.msra.mxu0 0.0
  %377 = vmatprep.subr.mxu0 0.0
  %378 = vmatpush1.msra.mxu0 0.0
  %379 = vmatprep.subr.mxu0 0.0
  %380 = vmatpush1.msra.mxu0 0.0
  %381 = vmatprep.subr.mxu0 0.0
  %382 = vmatpush1.msra.mxu0 0.0
  %383 = vmatprep.subr.mxu0 0.0
  %384 = vmatpush1.msra.mxu0 0.0
  %385 = vmatprep.subr.mxu0 0.0
  %386 = vmatpush1.msra.mxu0 0.0
  %387 = vmatprep.subr.mxu0 0.0
  %388 = vmatpush1.msra.mxu0 0.0
  %389 = vmatprep.subr.mxu0 0.0
  %390 = vmatpush1.msra.mxu0 0.0
  %391 = vmatprep.subr.mxu0 0.0
  %392 = vmatpush1.msra.mxu0 0.0
  %393 = vmatprep.subr.mxu0 0.0
  %394 = vmatpush1.msra.mxu0 0.0
  %395 = vmatprep.subr.mxu0 0.0
  %396 = vmatpush1.msra.mxu0 0.0
  %397 = vmatprep.subr.mxu0 0.0
  %398 = vmatpush1.msra.mxu0 0.0
  %399 = vmatprep.subr.mxu0 0.0
  %400 = vmatpush1.msra.mxu0 0.0
  %401 = vmatprep.mubr.f32.mxu0 0.0
  %402 = vmatmul.mubr.f32.gmra.mrb[0].mxu0 %v266
  %v403 = vpop.f32.mrb[0].mxu0
  %v404 = vadd.f32 0.0, %v403
  %v405 = vpop.f32.mrb[0].mxu0
  %v406 = vadd.f32 0.0, %v405
  %407 = vdwg.mxu0
  %408 = vmatprep.subr.mxu0 %v276
  %409 = vmatpush1.msra.mxu0 %v275
  %410 = vmatprep.subr.mxu0 %v280
  %411 = vmatpush1.msra.mxu0 %v279
  %412 = vmatprep.subr.mxu0 %v284
  %413 = vmatpush1.msra.mxu0 %v283
  %414 = vmatprep.subr.mxu0 %v288
  %415 = vmatpush1.msra.mxu0 %v287
  %416 = vmatprep.subr.mxu0 %v292
  %417 = vmatpush1.msra.mxu0 %v291
  %418 = vmatprep.subr.mxu0 %v296
  %419 = vmatpush1.msra.mxu0 %v295
  %420 = vmatprep.subr.mxu0 %v300
  %421 = vmatpush1.msra.mxu0 %v299
  %422 = vmatprep.subr.mxu0 %v304
  %423 = vmatpush1.msra.mxu0 %v303
  %424 = vmatprep.subr.mxu0 %v308
  %425 = vmatpush1.msra.mxu0 %v307
  %426 = vmatprep.subr.mxu0 %v312
  %427 = vmatpush1.msra.mxu0 %v311
  %428 = vmatprep.subr.mxu0 %v316
  %429 = vmatpush1.msra.mxu0 %v315
  %430 = vmatprep.subr.mxu0 %v320
  %431 = vmatpush1.msra.mxu0 %v319
  %432 = vmatprep.subr.mxu0 %v324
  %433 = vmatpush1.msra.mxu0 %v323
  %434 = vmatprep.subr.mxu0 %v328
  %435 = vmatpush1.msra.mxu0 %v327
  %436 = vmatprep.subr.mxu0 %v332
  %437 = vmatpush1.msra.mxu0 %v331
  %438 = vmatprep.subr.mxu0 %v336
  %439 = vmatpush1.msra.mxu0 %v335
  %440 = vmatprep.subr.mxu0 0.0
  %441 = vmatpush1.msra.mxu0 0.0
  %442 = vmatprep.subr.mxu0 0.0
  %443 = vmatpush1.msra.mxu0 0.0
  %444 = vmatprep.subr.mxu0 0.0
  %445 = vmatpush1.msra.mxu0 0.0
  %446 = vmatprep.subr.mxu0 0.0
  %447 = vmatpush1.msra.mxu0 0.0
  %448 = vmatprep.subr.mxu0 0.0
  %449 = vmatpush1.msra.mxu0 0.0
  %450 = vmatprep.subr.mxu0 0.0
  %451 = vmatpush1.msra.mxu0 0.0
  %452 = vmatprep.subr.mxu0 0.0
  %453 = vmatpush1.msra.mxu0 0.0
  %454 = vmatprep.subr.mxu0 0.0
  %455 = vmatpush1.msra.mxu0 0.0
  %456 = vmatprep.subr.mxu0 0.0
  %457 = vmatpush1.msra.mxu0 0.0
  %458 = vmatprep.subr.mxu0 0.0
  %459 = vmatpush1.msra.mxu0 0.0
  %460 = vmatprep.subr.mxu0 0.0
  %461 = vmatpush1.msra.mxu0 0.0
  %462 = vmatprep.subr.mxu0 0.0
  %463 = vmatpush1.msra.mxu0 0.0
  %464 = vmatprep.subr.mxu0 0.0
  %465 = vmatpush1.msra.mxu0 0.0
  %466 = vmatprep.subr.mxu0 0.0
  %467 = vmatpush1.msra.mxu0 0.0
  %468 = vmatprep.subr.mxu0 0.0
  %469 = vmatpush1.msra.mxu0 0.0
  %470 = vmatprep.subr.mxu0 0.0
  %471 = vmatpush1.msra.mxu0 0.0
  %472 = vmatprep.mubr.f32.mxu0 0.0
  %473 = vmatmul.mubr.f32.gmra.mrb[0].mxu0 %v266
  %v474 = vpop.f32.mrb[0].mxu0
  %v475 = vadd.f32 0.0, %v474
  %v476 = vpop.f32.mrb[0].mxu0
  %v477 = vadd.f32 0.0, %v476
  %478 = vdwg.mxu0
  %v479 = vadd.f32 %v269, %v404
  %v480 = vadd.f32 %v270, %v406
  %v481 = vadd.f32 %v271, %v475
  %v482 = vadd.f32 %v272, %v477
  %v483 = vxor.u32 %v479, 2147483648
  %v484 = vmul.f32 %v483, 1.442695
  %v485 = vpow.pop %v484
  %v486 = vadd.f32 %v485, 1.0
  %v487 = vrcp.pop %v486
  %v488 = vmul.f32 1.0, %v487
  %v489 = vxor.u32 %v480, 2147483648
  %v490 = vmul.f32 %v489, 1.442695
  %v491 = vpow.pop %v490
  %v492 = vadd.f32 %v491, 1.0
  %v493 = vrcp.pop %v492
  %v494 = vmul.f32 1.0, %v493
  %v495 = vtanh.pop %v481
  %v496 = vxor.u32 %v482, 2147483648
  %v497 = vmul.f32 %v496, 1.442695
  %v498 = vpow.pop %v497
  %v499 = vadd.f32 %v498, 1.0
  %v500 = vrcp.pop %v499
  %v501 = vmul.f32 1.0, %v500
  %v502 = vmul.f32 %v494, %v264
  %v503 = vmul.f32 %v488, %v495
  %v504 = vadd.f32 %v502, %v503
  %v505 = vtanh.pop %v504
  %v506 = vmul.f32 %v501, %v505
  %s507 = scalar_lea.vmem %s4, 8
  %508 = vst [vmem:[%s507] sm:$0xff] %v506
  %s509 = scalar_lea.vmem %s0, 64
  %v510 = vld [vmem:[%s509] sm:$0xff]
  %v511 = vld [vmem:[%s509 + $0x8] sm:$0xff]
  %v512 = vld [vmem:[%s509 + $0x10] sm:$0xff]
  %v513 = vld [vmem:[%s509 + $0x18] sm:$0xff]
  %v514 = vld [vmem:[%s1] sm:$0xff]
  %v515 = vld [vmem:[%s1 + $0x8] sm:$0xff]
  %v516 = vld [vmem:[%s1 + $0x10] sm:$0xff]
  %v517 = vld [vmem:[%s1 + $0x18] sm:$0xff]
  %v518 = vld [vmem:[%s1 + $0x20] sm:$0xff]
  %v519 = vld [vmem:[%s1 + $0x28] sm:$0xff]
  %v520 = vld [vmem:[%s1 + $0x30] sm:$0xff]
  %v521 = vld [vmem:[%s1 + $0x38] sm:$0xff]
  %v522 = vld [vmem:[%s1 + $0x40] sm:$0xff]
  %v523 = vld [vmem:[%s1 + $0x48] sm:$0xff]
  %v524 = vld [vmem:[%s1 + $0x50] sm:$0xff]
  %v525 = vld [vmem:[%s1 + $0x58] sm:$0xff]
  %v526 = vld [vmem:[%s1 + $0x60] sm:$0xff]
  %v527 = vld [vmem:[%s1 + $0x68] sm:$0xff]
  %v528 = vld [vmem:[%s1 + $0x70] sm:$0xff]
  %v529 = vld [vmem:[%s1 + $0x78] sm:$0xff]
  %v530 = vld [vmem:[%s1 + $0x80] sm:$0xff]
  %v531 = vld [vmem:[%s1 + $0x88] sm:$0xff]
  %v532 = vld [vmem:[%s1 + $0x90] sm:$0xff]
  %v533 = vld [vmem:[%s1 + $0x98] sm:$0xff]
  %v534 = vld [vmem:[%s1 + $0xa0] sm:$0xff]
  %v535 = vld [vmem:[%s1 + $0xa8] sm:$0xff]
  %v536 = vld [vmem:[%s1 + $0xb0] sm:$0xff]
  %v537 = vld [vmem:[%s1 + $0xb8] sm:$0xff]
  %v538 = vld [vmem:[%s1 + $0xc0] sm:$0xff]
  %v539 = vld [vmem:[%s1 + $0xc8] sm:$0xff]
  %v540 = vld [vmem:[%s1 + $0xd0] sm:$0xff]
  %v541 = vld [vmem:[%s1 + $0xd8] sm:$0xff]
  %v542 = vld [vmem:[%s1 + $0xe0] sm:$0xff]
  %v543 = vld [vmem:[%s1 + $0xe8] sm:$0xff]
  %v544 = vld [vmem:[%s1 + $0xf0] sm:$0xff]
  %v545 = vld [vmem:[%s1 + $0xf8] sm:$0xff]
  %v546 = vld [vmem:[%s1 + $0x100] sm:$0xff]
  %v547 = vld [vmem:[%s1 + $0x108] sm:$0xff]
  %v548 = vld [vmem:[%s1 + $0x110] sm:$0xff]
  %v549 = vld [vmem:[%s1 + $0x118] sm:$0xff]
  %v550 = vld [vmem:[%s1 + $0x120] sm:$0xff]
  %v551 = vld [vmem:[%s1 + $0x128] sm:$0xff]
  %v552 = vld [vmem:[%s1 + $0x130] sm:$0xff]
  %v553 = vld [vmem:[%s1 + $0x138] sm:$0xff]
  %v554 = vld [vmem:[%s1 + $0x140] sm:$0xff]
  %v555 = vld [vmem:[%s1 + $0x148] sm:$0xff]
  %v556 = vld [vmem:[%s1 + $0x150] sm:$0xff]
  %v557 = vld [vmem:[%s1 + $0x158] sm:$0xff]
  %v558 = vld [vmem:[%s1 + $0x160] sm:$0xff]
  %v559 = vld [vmem:[%s1 + $0x168] sm:$0xff]
  %v560 = vld [vmem:[%s1 + $0x170] sm:$0xff]
  %v561 = vld [vmem:[%s1 + $0x178] sm:$0xff]
  %v562 = vld [vmem:[%s1 + $0x180] sm:$0xff]
  %v563 = vld [vmem:[%s1 + $0x188] sm:$0xff]
  %v564 = vld [vmem:[%s1 + $0x190] sm:$0xff]
  %v565 = vld [vmem:[%s1 + $0x198] sm:$0xff]
  %v566 = vld [vmem:[%s1 + $0x1a0] sm:$0xff]
  %v567 = vld [vmem:[%s1 + $0x1a8] sm:$0xff]
  %v568 = vld [vmem:[%s1 + $0x1b0] sm:$0xff]
  %v569 = vld [vmem:[%s1 + $0x1b8] sm:$0xff]
  %v570 = vld [vmem:[%s1 + $0x1c0] sm:$0xff]
  %v571 = vld [vmem:[%s1 + $0x1c8] sm:$0xff]
  %v572 = vld [vmem:[%s1 + $0x1d0] sm:$0xff]
  %v573 = vld [vmem:[%s1 + $0x1d8] sm:$0xff]
  %v574 = vld [vmem:[%s1 + $0x1e0] sm:$0xff]
  %v575 = vld [vmem:[%s1 + $0x1e8] sm:$0xff]
  %v576 = vld [vmem:[%s1 + $0x1f0] sm:$0xff]
  %v577 = vld [vmem:[%s1 + $0x1f8] sm:$0xff]
  %578 = vmatprep.subr.mxu0 %v515
  %579 = vmatpush1.msra.mxu0 %v514
  %580 = vmatprep.subr.mxu0 %v519
  %581 = vmatpush1.msra.mxu0 %v518
  %582 = vmatprep.subr.mxu0 %v523
  %583 = vmatpush1.msra.mxu0 %v522
  %584 = vmatprep.subr.mxu0 %v527
  %585 = vmatpush1.msra.mxu0 %v526
  %586 = vmatprep.subr.mxu0 %v531
  %587 = vmatpush1.msra.mxu0 %v530
  %588 = vmatprep.subr.mxu0 %v535
  %589 = vmatpush1.msra.mxu0 %v534
  %590 = vmatprep.subr.mxu0 %v539
  %591 = vmatpush1.msra.mxu0 %v538
  %592 = vmatprep.subr.mxu0 %v543
  %593 = vmatpush1.msra.mxu0 %v542
  %594 = vmatprep.subr.mxu0 %v547
  %595 = vmatpush1.msra.mxu0 %v546
  %596 = vmatprep.subr.mxu0 %v551
  %597 = vmatpush1.msra.mxu0 %v550
  %598 = vmatprep.subr.mxu0 %v555
  %599 = vmatpush1.msra.mxu0 %v554
  %600 = vmatprep.subr.mxu0 %v559
  %601 = vmatpush1.msra.mxu0 %v558
  %602 = vmatprep.subr.mxu0 %v563
  %603 = vmatpush1.msra.mxu0 %v562
  %604 = vmatprep.subr.mxu0 %v567
  %605 = vmatpush1.msra.mxu0 %v566
  %606 = vmatprep.subr.mxu0 %v571
  %607 = vmatpush1.msra.mxu0 %v570
  %608 = vmatprep.subr.mxu0 %v575
  %609 = vmatpush1.msra.mxu0 %v574
  %610 = vmatprep.subr.mxu0 0.0
  %611 = vmatpush1.msra.mxu0 0.0
  %612 = vmatprep.subr.mxu0 0.0
  %613 = vmatpush1.msra.mxu0 0.0
  %614 = vmatprep.subr.mxu0 0.0
  %615 = vmatpush1.msra.mxu0 0.0
  %616 = vmatprep.subr.mxu0 0.0
  %617 = vmatpush1.msra.mxu0 0.0
  %618 = vmatprep.subr.mxu0 0.0
  %619 = vmatpush1.msra.mxu0 0.0
  %620 = vmatprep.subr.mxu0 0.0
  %621 = vmatpush1.msra.mxu0 0.0
  %622 = vmatprep.subr.mxu0 0.0
  %623 = vmatpush1.msra.mxu0 0.0
  %624 = vmatprep.subr.mxu0 0.0
  %625 = vmatpush1.msra.mxu0 0.0
  %626 = vmatprep.subr.mxu0 0.0
  %627 = vmatpush1.msra.mxu0 0.0
  %628 = vmatprep.subr.mxu0 0.0
  %629 = vmatpush1.msra.mxu0 0.0
  %630 = vmatprep.subr.mxu0 0.0
  %631 = vmatpush1.msra.mxu0 0.0
  %632 = vmatprep.subr.mxu0 0.0
  %633 = vmatpush1.msra.mxu0 0.0
  %634 = vmatprep.subr.mxu0 0.0
  %635 = vmatpush1.msra.mxu0 0.0
  %636 = vmatprep.subr.mxu0 0.0
  %637 = vmatpush1.msra.mxu0 0.0
  %638 = vmatprep.subr.mxu0 0.0
  %639 = vmatpush1.msra.mxu0 0.0
  %640 = vmatprep.subr.mxu0 0.0
  %641 = vmatpush1.msra.mxu0 0.0
  %642 = vmatprep.mubr.f32.mxu0 0.0
  %643 = vmatmul.mubr.f32.gmra.mrb[0].mxu0 %v506
  %v644 = vpop.f32.mrb[0].mxu0
  %v645 = vadd.f32 0.0, %v644
  %v646 = vpop.f32.mrb[0].mxu0
  %v647 = vadd.f32 0.0, %v646
  %648 = vdwg.mxu0
  %649 = vmatprep.subr.mxu0 %v517
  %650 = vmatpush1.msra.mxu0 %v516
  %651 = vmatprep.subr.mxu0 %v521
  %652 = vmatpush1.msra.mxu0 %v520
  %653 = vmatprep.subr.mxu0 %v525
  %654 = vmatpush1.msra.mxu0 %v524
  %655 = vmatprep.subr.mxu0 %v529
  %656 = vmatpush1.msra.mxu0 %v528
  %657 = vmatprep.subr.mxu0 %v533
  %658 = vmatpush1.msra.mxu0 %v532
  %659 = vmatprep.subr.mxu0 %v537
  %660 = vmatpush1.msra.mxu0 %v536
  %661 = vmatprep.subr.mxu0 %v541
  %662 = vmatpush1.msra.mxu0 %v540
  %663 = vmatprep.subr.mxu0 %v545
  %664 = vmatpush1.msra.mxu0 %v544
  %665 = vmatprep.subr.mxu0 %v549
  %666 = vmatpush1.msra.mxu0 %v548
  %667 = vmatprep.subr.mxu0 %v553
  %668 = vmatpush1.msra.mxu0 %v552
  %669 = vmatprep.subr.mxu0 %v557
  %670 = vmatpush1.msra.mxu0 %v556
  %671 = vmatprep.subr.mxu0 %v561
  %672 = vmatpush1.msra.mxu0 %v560
  %673 = vmatprep.subr.mxu0 %v565
  %674 = vmatpush1.msra.mxu0 %v564
  %675 = vmatprep.subr.mxu0 %v569
  %676 = vmatpush1.msra.mxu0 %v568
  %677 = vmatprep.subr.mxu0 %v573
  %678 = vmatpush1.msra.mxu0 %v572
  %679 = vmatprep.subr.mxu0 %v577
  %680 = vmatpush1.msra.mxu0 %v576
  %681 = vmatprep.subr.mxu0 0.0
  %682 = vmatpush1.msra.mxu0 0.0
  %683 = vmatprep.subr.mxu0 0.0
  %684 = vmatpush1.msra.mxu0 0.0
  %685 = vmatprep.subr.mxu0 0.0
  %686 = vmatpush1.msra.mxu0 0.0
  %687 = vmatprep.subr.mxu0 0.0
  %688 = vmatpush1.msra.mxu0 0.0
  %689 = vmatprep.subr.mxu0 0.0
  %690 = vmatpush1.msra.mxu0 0.0
  %691 = vmatprep.subr.mxu0 0.0
  %692 = vmatpush1.msra.mxu0 0.0
  %693 = vmatprep.subr.mxu0 0.0
  %694 = vmatpush1.msra.mxu0 0.0
  %695 = vmatprep.subr.mxu0 0.0
  %696 = vmatpush1.msra.mxu0 0.0
  %697 = vmatprep.subr.mxu0 0.0
  %698 = vmatpush1.msra.mxu0 0.0
  %699 = vmatprep.subr.mxu0 0.0
  %700 = vmatpush1.msra.mxu0 0.0
  %701 = vmatprep.subr.mxu0 0.0
  %702 = vmatpush1.msra.mxu0 0.0
  %703 = vmatprep.subr.mxu0 0.0
  %704 = vmatpush1.msra.mxu0 0.0
  %705 = vmatprep.subr.mxu0 0.0
  %706 = vmatpush1.msra.mxu0 0.0
  %707 = vmatprep.subr.mxu0 0.0
  %708 = vmatpush1.msra.mxu0 0.0
  %709 = vmatprep.subr.mxu0 0.0
  %710 = vmatpush1.msra.mxu0 0.0
  %711 = vmatprep.subr.mxu0 0.0
  %712 = vmatpush1.msra.mxu0 0.0
  %713 = vmatprep.mubr.f32.mxu0 0.0
  %714 = vmatmul.mubr.f32.gmra.mrb[0].mxu0 %v506
  %v715 = vpop.f32.mrb[0].mxu0
  %v716 = vadd.f32 0.0, %v715
  %v717 = vpop.f32.mrb[0].mxu0
  %v718 = vadd.f32 0.0, %v717
  %719 = vdwg.mxu0
  %v720 = vadd.f32 %v510, %v645
  %v721 = vadd.f32 %v511, %v647
  %v722 = vadd.f32 %v512, %v716
  %v723 = vadd.f32 %v513, %v718
  %v724 = vxor.u32 %v720, 2147483648
  %v725 = vmul.f32 %v724, 1.442695
  %v726 = vpow.pop %v725
  %v727 = vadd.f32 %v726, 1.0
  %v728 = vrcp.pop %v727
  %v729 = vmul.f32 1.0, %v728
  %v730 = vxor.u32 %v721, 2147483648
  %v731 = vmul.f32 %v730, 1.442695
  %v732 = vpow.pop %v731
  %v733 = vadd.f32 %v732, 1.0
  %v734 = vrcp.pop %v733
  %v735 = vmul.f32 1.0, %v734
  %v736 = vtanh.pop %v722
  %v737 = vxor.u32 %v723, 2147483648
  %v738 = vmul.f32 %v737, 1.442695
  %v739 = vpow.pop %v738
  %v740 = vadd.f32 %v739, 1.0
  %v741 = vrcp.pop %v740
  %v742 = vmul.f32 1.0, %v741
  %v743 = vmul.f32 %v735, %v504
  %v744 = vmul.f32 %v729, %v736
  %v745 = vadd.f32 %v743, %v744
  %v746 = vtanh.pop %v745
  %v747 = vmul.f32 %v742, %v746
  %s748 = scalar_lea.vmem %s4, 16
  %749 = vst [vmem:[%s748] sm:$0xff] %v747
  %s750 = scalar_lea.vmem %s0, 96
  %v751 = vld [vmem:[%s750] sm:$0xff]
  %v752 = vld [vmem:[%s750 + $0x8] sm:$0xff]
  %v753 = vld [vmem:[%s750 + $0x10] sm:$0xff]
  %v754 = vld [vmem:[%s750 + $0x18] sm:$0xff]
  %v755 = vld [vmem:[%s1] sm:$0xff]
  %v756 = vld [vmem:[%s1 + $0x8] sm:$0xff]
  %v757 = vld [vmem:[%s1 + $0x10] sm:$0xff]
  %v758 = vld [vmem:[%s1 + $0x18] sm:$0xff]
  %v759 = vld [vmem:[%s1 + $0x20] sm:$0xff]
  %v760 = vld [vmem:[%s1 + $0x28] sm:$0xff]
  %v761 = vld [vmem:[%s1 + $0x30] sm:$0xff]
  %v762 = vld [vmem:[%s1 + $0x38] sm:$0xff]
  %v763 = vld [vmem:[%s1 + $0x40] sm:$0xff]
  %v764 = vld [vmem:[%s1 + $0x48] sm:$0xff]
  %v765 = vld [vmem:[%s1 + $0x50] sm:$0xff]
  %v766 = vld [vmem:[%s1 + $0x58] sm:$0xff]
  %v767 = vld [vmem:[%s1 + $0x60] sm:$0xff]
  %v768 = vld [vmem:[%s1 + $0x68] sm:$0xff]
  %v769 = vld [vmem:[%s1 + $0x70] sm:$0xff]
  %v770 = vld [vmem:[%s1 + $0x78] sm:$0xff]
  %v771 = vld [vmem:[%s1 + $0x80] sm:$0xff]
  %v772 = vld [vmem:[%s1 + $0x88] sm:$0xff]
  %v773 = vld [vmem:[%s1 + $0x90] sm:$0xff]
  %v774 = vld [vmem:[%s1 + $0x98] sm:$0xff]
  %v775 = vld [vmem:[%s1 + $0xa0] sm:$0xff]
  %v776 = vld [vmem:[%s1 + $0xa8] sm:$0xff]
  %v777 = vld [vmem:[%s1 + $0xb0] sm:$0xff]
  %v778 = vld [vmem:[%s1 + $0xb8] sm:$0xff]
  %v779 = vld [vmem:[%s1 + $0xc0] sm:$0xff]
  %v780 = vld [vmem:[%s1 + $0xc8] sm:$0xff]
  %v781 = vld [vmem:[%s1 + $0xd0] sm:$0xff]
  %v782 = vld [vmem:[%s1 + $0xd8] sm:$0xff]
  %v783 = vld [vmem:[%s1 + $0xe0] sm:$0xff]
  %v784 = vld [vmem:[%s1 + $0xe8] sm:$0xff]
  %v785 = vld [vmem:[%s1 + $0xf0] sm:$0xff]
  %v786 = vld [vmem:[%s1 + $0xf8] sm:$0xff]
  %v787 = vld [vmem:[%s1 + $0x100] sm:$0xff]
  %v788 = vld [vmem:[%s1 + $0x108] sm:$0xff]
  %v789 = vld [vmem:[%s1 + $0x110] sm:$0xff]
  %v790 = vld [vmem:[%s1 + $0x118] sm:$0xff]
  %v791 = vld [vmem:[%s1 + $0x120] sm:$0xff]
  %v792 = vld [vmem:[%s1 + $0x128] sm:$0xff]
  %v793 = vld [vmem:[%s1 + $0x130] sm:$0xff]
  %v794 = vld [vmem:[%s1 + $0x138] sm:$0xff]
  %v795 = vld [vmem:[%s1 + $0x140] sm:$0xff]
  %v796 = vld [vmem:[%s1 + $0x148] sm:$0xff]
  %v797 = vld [vmem:[%s1 + $0x150] sm:$0xff]
  %v798 = vld [vmem:[%s1 + $0x158] sm:$0xff]
  %v799 = vld [vmem:[%s1 + $0x160] sm:$0xff]
  %v800 = vld [vmem:[%s1 + $0x168] sm:$0xff]
  %v801 = vld [vmem:[%s1 + $0x170] sm:$0xff]
  %v802 = vld [vmem:[%s1 + $0x178] sm:$0xff]
  %v803 = vld [vmem:[%s1 + $0x180] sm:$0xff]
  %v804 = vld [vmem:[%s1 + $0x188] sm:$0xff]
  %v805 = vld [vmem:[%s1 + $0x190] sm:$0xff]
  %v806 = vld [vmem:[%s1 + $0x198] sm:$0xff]
  %v807 = vld [vmem:[%s1 + $0x1a0] sm:$0xff]
  %v808 = vld [vmem:[%s1 + $0x1a8] sm:$0xff]
  %v809 = vld [vmem:[%s1 + $0x1b0] sm:$0xff]
  %v810 = vld [vmem:[%s1 + $0x1b8] sm:$0xff]
  %v811 = vld [vmem:[%s1 + $0x1c0] sm:$0xff]
  %v812 = vld [vmem:[%s1 + $0x1c8] sm:$0xff]
  %v813 = vld [vmem:[%s1 + $0x1d0] sm:$0xff]
  %v814 = vld [vmem:[%s1 + $0x1d8] sm:$0xff]
  %v815 = vld [vmem:[%s1 + $0x1e0] sm:$0xff]
  %v816 = vld [vmem:[%s1 + $0x1e8] sm:$0xff]
  %v817 = vld [vmem:[%s1 + $0x1f0] sm:$0xff]
  %v818 = vld [vmem:[%s1 + $0x1f8] sm:$0xff]
  %819 = vmatprep.subr.mxu0 %v756
  %820 = vmatpush1.msra.mxu0 %v755
  %821 = vmatprep.subr.mxu0 %v760
  %822 = vmatpush1.msra.mxu0 %v759
  %823 = vmatprep.subr.mxu0 %v764
  %824 = vmatpush1.msra.mxu0 %v763
  %825 = vmatprep.subr.mxu0 %v768
  %826 = vmatpush1.msra.mxu0 %v767
  %827 = vmatprep.subr.mxu0 %v772
  %828 = vmatpush1.msra.mxu0 %v771
  %829 = vmatprep.subr.mxu0 %v776
  %830 = vmatpush1.msra.mxu0 %v775
  %831 = vmatprep.subr.mxu0 %v780
  %832 = vmatpush1.msra.mxu0 %v779
  %833 = vmatprep.subr.mxu0 %v784
  %834 = vmatpush1.msra.mxu0 %v783
  %835 = vmatprep.subr.mxu0 %v788
  %836 = vmatpush1.msra.mxu0 %v787
  %837 = vmatprep.subr.mxu0 %v792
  %838 = vmatpush1.msra.mxu0 %v791
  %839 = vmatprep.subr.mxu0 %v796
  %840 = vmatpush1.msra.mxu0 %v795
  %841 = vmatprep.subr.mxu0 %v800
  %842 = vmatpush1.msra.mxu0 %v799
  %843 = vmatprep.subr.mxu0 %v804
  %844 = vmatpush1.msra.mxu0 %v803
  %845 = vmatprep.subr.mxu0 %v808
  %846 = vmatpush1.msra.mxu0 %v807
  %847 = vmatprep.subr.mxu0 %v812
  %848 = vmatpush1.msra.mxu0 %v811
  %849 = vmatprep.subr.mxu0 %v816
  %850 = vmatpush1.msra.mxu0 %v815
  %851 = vmatprep.subr.mxu0 0.0
  %852 = vmatpush1.msra.mxu0 0.0
  %853 = vmatprep.subr.mxu0 0.0
  %854 = vmatpush1.msra.mxu0 0.0
  %855 = vmatprep.subr.mxu0 0.0
  %856 = vmatpush1.msra.mxu0 0.0
  %857 = vmatprep.subr.mxu0 0.0
  %858 = vmatpush1.msra.mxu0 0.0
  %859 = vmatprep.subr.mxu0 0.0
  %860 = vmatpush1.msra.mxu0 0.0
  %861 = vmatprep.subr.mxu0 0.0
  %862 = vmatpush1.msra.mxu0 0.0
  %863 = vmatprep.subr.mxu0 0.0
  %864 = vmatpush1.msra.mxu0 0.0
  %865 = vmatprep.subr.mxu0 0.0
  %866 = vmatpush1.msra.mxu0 0.0
  %867 = vmatprep.subr.mxu0 0.0
  %868 = vmatpush1.msra.mxu0 0.0
  %869 = vmatprep.subr.mxu0 0.0
  %870 = vmatpush1.msra.mxu0 0.0
  %871 = vmatprep.subr.mxu0 0.0
  %872 = vmatpush1.msra.mxu0 0.0
  %873 = vmatprep.subr.mxu0 0.0
  %874 = vmatpush1.msra.mxu0 0.0
  %875 = vmatprep.subr.mxu0 0.0
  %876 = vmatpush1.msra.mxu0 0.0
  %877 = vmatprep.subr.mxu0 0.0
  %878 = vmatpush1.msra.mxu0 0.0
  %879 = vmatprep.subr.mxu0 0.0
  %880 = vmatpush1.msra.mxu0 0.0
  %881 = vmatprep.subr.mxu0 0.0
  %882 = vmatpush1.msra.mxu0 0.0
  %883 = vmatprep.mubr.f32.mxu0 0.0
  %884 = vmatmul.mubr.f32.gmra.mrb[0].mxu0 %v747
  %v885 = vpop.f32.mrb[0].mxu0
  %v886 = vadd.f32 0.0, %v885
  %v887 = vpop.f32.mrb[0].mxu0
  %v888 = vadd.f32 0.0, %v887
  %889 = vdwg.mxu0
  %890 = vmatprep.subr.mxu0 %v758
  %891 = vmatpush1.msra.mxu0 %v757
  %892 = vmatprep.subr.mxu0 %v762
  %893 = vmatpush1.msra.mxu0 %v761
  %894 = vmatprep.subr.mxu0 %v766
  %895 = vmatpush1.msra.mxu0 %v765
  %896 = vmatprep.subr.mxu0 %v770
  %897 = vmatpush1.msra.mxu0 %v769
  %898 = vmatprep.subr.mxu0 %v774
  %899 = vmatpush1.msra.mxu0 %v773
  %900 = vmatprep.subr.mxu0 %v778
  %901 = vmatpush1.msra.mxu0 %v777
  %902 = vmatprep.subr.mxu0 %v782
  %903 = vmatpush1.msra.mxu0 %v781
  %904 = vmatprep.subr.mxu0 %v786
  %905 = vmatpush1.msra.mxu0 %v785
  %906 = vmatprep.subr.mxu0 %v790
  %907 = vmatpush1.msra.mxu0 %v789
  %908 = vmatprep.subr.mxu0 %v794
  %909 = vmatpush1.msra.mxu0 %v793
  %910 = vmatprep.subr.mxu0 %v798
  %911 = vmatpush1.msra.mxu0 %v797
  %912 = vmatprep.subr.mxu0 %v802
  %913 = vmatpush1.msra.mxu0 %v801
  %914 = vmatprep.subr.mxu0 %v806
  %915 = vmatpush1.msra.mxu0 %v805
  %916 = vmatprep.subr.mxu0 %v810
  %917 = vmatpush1.msra.mxu0 %v809
  %918 = vmatprep.subr.mxu0 %v814
  %919 = vmatpush1.msra.mxu0 %v813
  %920 = vmatprep.subr.mxu0 %v818
  %921 = vmatpush1.msra.mxu0 %v817
  %922 = vmatprep.subr.mxu0 0.0
  %923 = vmatpush1.msra.mxu0 0.0
  %924 = vmatprep.subr.mxu0 0.0
  %925 = vmatpush1.msra.mxu0 0.0
  %926 = vmatprep.subr.mxu0 0.0
  %927 = vmatpush1.msra.mxu0 0.0
  %928 = vmatprep.subr.mxu0 0.0
  %929 = vmatpush1.msra.mxu0 0.0
  %930 = vmatprep.subr.mxu0 0.0
  %931 = vmatpush1.msra.mxu0 0.0
  %932 = vmatprep.subr.mxu0 0.0
  %933 = vmatpush1.msra.mxu0 0.0
  %934 = vmatprep.subr.mxu0 0.0
  %935 = vmatpush1.msra.mxu0 0.0
  %936 = vmatprep.subr.mxu0 0.0
  %937 = vmatpush1.msra.mxu0 0.0
  %938 = vmatprep.subr.mxu0 0.0
  %939 = vmatpush1.msra.mxu0 0.0
  %940 = vmatprep.subr.mxu0 0.0
  %941 = vmatpush1.msra.mxu0 0.0
  %942 = vmatprep.subr.mxu0 0.0
  %943 = vmatpush1.msra.mxu0 0.0
  %944 = vmatprep.subr.mxu0 0.0
  %945 = vmatpush1.msra.mxu0 0.0
  %946 = vmatprep.subr.mxu0 0.0
  %947 = vmatpush1.msra.mxu0 0.0
  %948 = vmatprep.subr.mxu0 0.0
  %949 = vmatpush1.msra.mxu0 0.0
  %950 = vmatprep.subr.mxu0 0.0
  %951 = vmatpush1.msra.mxu0 0.0
  %952 = vmatprep.subr.mxu0 0.0
  %953 = vmatpush1.msra.mxu0 0.0
  %954 = vmatprep.mubr.f32.mxu0 0.0
  %955 = vmatmul.mubr.f32.gmra.mrb[0].mxu0 %v747
  %v956 = vpop.f32.mrb[0].mxu0
  %v957 = vadd.f32 0.0, %v956
  %v958 = vpop.f32.mrb[0].mxu0
  %v959 = vadd.f32 0.0, %v958
  %960 = vdwg.mxu0
  %v961 = vadd.f32 %v751, %v886
  %v962 = vadd.f32 %v752, %v888
  %v963 = vadd.f32 %v753, %v957
  %v964 = vadd.f32 %v754, %v959
  %v965 = vxor.u32 %v961, 2147483648
  %v966 = vmul.f32 %v965, 1.442695
  %v967 = vpow.pop %v966
  %v968 = vadd.f32 %v967, 1.0
  %v969 = vrcp.pop %v968
  %v970 = vmul.f32 1.0, %v969
  %v971 = vxor.u32 %v962, 2147483648
  %v972 = vmul.f32 %v971, 1.442695
  %v973 = vpow.pop %v972
  %v974 = vadd.f32 %v973, 1.0
  %v975 = vrcp.pop %v974
  %v976 = vmul.f32 1.0, %v975
  %v977 = vtanh.pop %v963
  %v978 = vxor.u32 %v964, 2147483648
  %v979 = vmul.f32 %v978, 1.442695
  %v980 = vpow.pop %v979
  %v981 = vadd.f32 %v980, 1.0
  %v982 = vrcp.pop %v981
  %v983 = vmul.f32 1.0, %v982
  %v984 = vmul.f32 %v976, %v745
  %v985 = vmul.f32 %v970, %v977
  %v986 = vadd.f32 %v984, %v985
  %v987 = vtanh.pop %v986
  %v988 = vmul.f32 %v983, %v987
  %s989 = scalar_lea.vmem %s4, 24
  %990 = vst [vmem:[%s989] sm:$0xff] %v988
  %s991 = scalar_lea.vmem %s0, 128
  %v992 = vld [vmem:[%s991] sm:$0xff]
  %v993 = vld [vmem:[%s991 + $0x8] sm:$0xff]
  %v994 = vld [vmem:[%s991 + $0x10] sm:$0xff]
  %v995 = vld [vmem:[%s991 + $0x18] sm:$0xff]
  %v996 = vld [vmem:[%s1] sm:$0xff]
  %v997 = vld [vmem:[%s1 + $0x8] sm:$0xff]
  %v998 = vld [vmem:[%s1 + $0x10] sm:$0xff]
  %v999 = vld [vmem:[%s1 + $0x18] sm:$0xff]
  %v1000 = vld [vmem:[%s1 + $0x20] sm:$0xff]
  %v1001 = vld [vmem:[%s1 + $0x28] sm:$0xff]
  %v1002 = vld [vmem:[%s1 + $0x30] sm:$0xff]
  %v1003 = vld [vmem:[%s1 + $0x38] sm:$0xff]
  %v1004 = vld [vmem:[%s1 + $0x40] sm:$0xff]
  %v1005 = vld [vmem:[%s1 + $0x48] sm:$0xff]
  %v1006 = vld [vmem:[%s1 + $0x50] sm:$0xff]
  %v1007 = vld [vmem:[%s1 + $0x58] sm:$0xff]
  %v1008 = vld [vmem:[%s1 + $0x60] sm:$0xff]
  %v1009 = vld [vmem:[%s1 + $0x68] sm:$0xff]
  %v1010 = vld [vmem:[%s1 + $0x70] sm:$0xff]
  %v1011 = vld [vmem:[%s1 + $0x78] sm:$0xff]
  %v1012 = vld [vmem:[%s1 + $0x80] sm:$0xff]
  %v1013 = vld [vmem:[%s1 + $0x88] sm:$0xff]
  %v1014 = vld [vmem:[%s1 + $0x90] sm:$0xff]
  %v1015 = vld [vmem:[%s1 + $0x98] sm:$0xff]
  %v1016 = vld [vmem:[%s1 + $0xa0] sm:$0xff]
  %v1017 = vld [vmem:[%s1 + $0xa8] sm:$0xff]
  %v1018 = vld [vmem:[%s1 + $0xb0] sm:$0xff]
  %v1019 = vld [vmem:[%s1 + $0xb8] sm:$0xff]
  %v1020 = vld [vmem:[%s1 + $0xc0] sm:$0xff]
  %v1021 = vld [vmem:[%s1 + $0xc8] sm:$0xff]
  %v1022 = vld [vmem:[%s1 + $0xd0] sm:$0xff]
  %v1023 = vld [vmem:[%s1 + $0xd8] sm:$0xff]
  %v1024 = vld [vmem:[%s1 + $0xe0] sm:$0xff]
  %v1025 = vld [vmem:[%s1 + $0xe8] sm:$0xff]
  %v1026 = vld [vmem:[%s1 + $0xf0] sm:$0xff]
  %v1027 = vld [vmem:[%s1 + $0xf8] sm:$0xff]
  %v1028 = vld [vmem:[%s1 + $0x100] sm:$0xff]
  %v1029 = vld [vmem:[%s1 + $0x108] sm:$0xff]
  %v1030 = vld [vmem:[%s1 + $0x110] sm:$0xff]
  %v1031 = vld [vmem:[%s1 + $0x118] sm:$0xff]
  %v1032 = vld [vmem:[%s1 + $0x120] sm:$0xff]
  %v1033 = vld [vmem:[%s1 + $0x128] sm:$0xff]
  %v1034 = vld [vmem:[%s1 + $0x130] sm:$0xff]
  %v1035 = vld [vmem:[%s1 + $0x138] sm:$0xff]
  %v1036 = vld [vmem:[%s1 + $0x140] sm:$0xff]
  %v1037 = vld [vmem:[%s1 + $0x148] sm:$0xff]
  %v1038 = vld [vmem:[%s1 + $0x150] sm:$0xff]
  %v1039 = vld [vmem:[%s1 + $0x158] sm:$0xff]
  %v1040 = vld [vmem:[%s1 + $0x160] sm:$0xff]
  %v1041 = vld [vmem:[%s1 + $0x168] sm:$0xff]
  %v1042 = vld [vmem:[%s1 + $0x170] sm:$0xff]
  %v1043 = vld [vmem:[%s1 + $0x178] sm:$0xff]
  %v1044 = vld [vmem:[%s1 + $0x180] sm:$0xff]
  %v1045 = vld [vmem:[%s1 + $0x188] sm:$0xff]
  %v1046 = vld [vmem:[%s1 + $0x190] sm:$0xff]
  %v1047 = vld [vmem:[%s1 + $0x198] sm:$0xff]
  %v1048 = vld [vmem:[%s1 + $0x1a0] sm:$0xff]
  %v1049 = vld [vmem:[%s1 + $0x1a8] sm:$0xff]
  %v1050 = vld [vmem:[%s1 + $0x1b0] sm:$0xff]
  %v1051 = vld [vmem:[%s1 + $0x1b8] sm:$0xff]
  %v1052 = vld [vmem:[%s1 + $0x1c0] sm:$0xff]
  %v1053 = vld [vmem:[%s1 + $0x1c8] sm:$0xff]
  %v1054 = vld [vmem:[%s1 + $0x1d0] sm:$0xff]
  %v1055 = vld [vmem:[%s1 + $0x1d8] sm:$0xff]
  %v1056 = vld [vmem:[%s1 + $0x1e0] sm:$0xff]
  %v1057 = vld [vmem:[%s1 + $0x1e8] sm:$0xff]
  %v1058 = vld [vmem:[%s1 + $0x1f0] sm:$0xff]
  %v1059 = vld [vmem:[%s1 + $0x1f8] sm:$0xff]
  %1060 = vmatprep.subr.mxu0 %v997
  %1061 = vmatpush1.msra.mxu0 %v996
  %1062 = vmatprep.subr.mxu0 %v1001
  %1063 = vmatpush1.msra.mxu0 %v1000
  %1064 = vmatprep.subr.mxu0 %v1005
  %1065 = vmatpush1.msra.mxu0 %v1004
  %1066 = vmatprep.subr.mxu0 %v1009
  %1067 = vmatpush1.msra.mxu0 %v1008
  %1068 = vmatprep.subr.mxu0 %v1013
  %1069 = vmatpush1.msra.mxu0 %v1012
  %1070 = vmatprep.subr.mxu0 %v1017
  %1071 = vmatpush1.msra.mxu0 %v1016
  %1072 = vmatprep.subr.mxu0 %v1021
  %1073 = vmatpush1.msra.mxu0 %v1020
  %1074 = vmatprep.subr.mxu0 %v1025
  %1075 = vmatpush1.msra.mxu0 %v1024
  %1076 = vmatprep.subr.mxu0 %v1029
  %1077 = vmatpush1.msra.mxu0 %v1028
  %1078 = vmatprep.subr.mxu0 %v1033
  %1079 = vmatpush1.msra.mxu0 %v1032
  %1080 = vmatprep.subr.mxu0 %v1037
  %1081 = vmatpush1.msra.mxu0 %v1036
  %1082 = vmatprep.subr.mxu0 %v1041
  %1083 = vmatpush1.msra.mxu0 %v1040
  %1084 = vmatprep.subr.mxu0 %v1045
  %1085 = vmatpush1.msra.mxu0 %v1044
  %1086 = vmatprep.subr.mxu0 %v1049
  %1087 = vmatpush1.msra.mxu0 %v1048
  %1088 = vmatprep.subr.mxu0 %v1053
  %1089 = vmatpush1.msra.mxu0 %v1052
  %1090 = vmatprep.subr.mxu0 %v1057
  %1091 = vmatpush1.msra.mxu0 %v1056
  %1092 = vmatprep.subr.mxu0 0.0
  %1093 = vmatpush1.msra.mxu0 0.0
  %1094 = vmatprep.subr.mxu0 0.0
  %1095 = vmatpush1.msra.mxu0 0.0
  %1096 = vmatprep.subr.mxu0 0.0
  %1097 = vmatpush1.msra.mxu0 0.0
  %1098 = vmatprep.subr.mxu0 0.0
  %1099 = vmatpush1.msra.mxu0 0.0
  %1100 = vmatprep.subr.mxu0 0.0
  %1101 = vmatpush1.msra.mxu0 0.0
  %1102 = vmatprep.subr.mxu0 0.0
  %1103 = vmatpush1.msra.mxu0 0.0
  %1104 = vmatprep.subr.mxu0 0.0
  %1105 = vmatpush1.msra.mxu0 0.0
  %1106 = vmatprep.subr.mxu0 0.0
  %1107 = vmatpush1.msra.mxu0 0.0
  %1108 = vmatprep.subr.mxu0 0.0
  %1109 = vmatpush1.msra.mxu0 0.0
  %1110 = vmatprep.subr.mxu0 0.0
  %1111 = vmatpush1.msra.mxu0 0.0
  %1112 = vmatprep.subr.mxu0 0.0
  %1113 = vmatpush1.msra.mxu0 0.0
  %1114 = vmatprep.subr.mxu0 0.0
  %1115 = vmatpush1.msra.mxu0 0.0
  %1116 = vmatprep.subr.mxu0 0.0
  %1117 = vmatpush1.msra.mxu0 0.0
  %1118 = vmatprep.subr.mxu0 0.0
  %1119 = vmatpush1.msra.mxu0 0.0
  %1120 = vmatprep.subr.mxu0 0.0
  %1121 = vmatpush1.msra.mxu0 0.0
  %1122 = vmatprep.subr.mxu0 0.0
  %1123 = vmatpush1.msra.mxu0 0.0
  %1124 = vmatprep.mubr.f32.mxu0 0.0
  %1125 = vmatmul.mubr.f32.gmra.mrb[0].mxu0 %v988
  %v1126 = vpop.f32.mrb[0].mxu0
  %v1127 = vadd.f32 0.0, %v1126
  %v1128 = vpop.f32.mrb[0].mxu0
  %v1129 = vadd.f32 0.0, %v1128
  %1130 = vdwg.mxu0
  %1131 = vmatprep.subr.mxu0 %v999
  %1132 = vmatpush1.msra.mxu0 %v998
  %1133 = vmatprep.subr.mxu0 %v1003
  %1134 = vmatpush1.msra.mxu0 %v1002
  %1135 = vmatprep.subr.mxu0 %v1007
  %1136 = vmatpush1.msra.mxu0 %v1006
  %1137 = vmatprep.subr.mxu0 %v1011
  %1138 = vmatpush1.msra.mxu0 %v1010
  %1139 = vmatprep.subr.mxu0 %v1015
  %1140 = vmatpush1.msra.mxu0 %v1014
  %1141 = vmatprep.subr.mxu0 %v1019
  %1142 = vmatpush1.msra.mxu0 %v1018
  %1143 = vmatprep.subr.mxu0 %v1023
  %1144 = vmatpush1.msra.mxu0 %v1022
  %1145 = vmatprep.subr.mxu0 %v1027
  %1146 = vmatpush1.msra.mxu0 %v1026
  %1147 = vmatprep.subr.mxu0 %v1031
  %1148 = vmatpush1.msra.mxu0 %v1030
  %1149 = vmatprep.subr.mxu0 %v1035
  %1150 = vmatpush1.msra.mxu0 %v1034
  %1151 = vmatprep.subr.mxu0 %v1039
  %1152 = vmatpush1.msra.mxu0 %v1038
  %1153 = vmatprep.subr.mxu0 %v1043
  %1154 = vmatpush1.msra.mxu0 %v1042
  %1155 = vmatprep.subr.mxu0 %v1047
  %1156 = vmatpush1.msra.mxu0 %v1046
  %1157 = vmatprep.subr.mxu0 %v1051
  %1158 = vmatpush1.msra.mxu0 %v1050
  %1159 = vmatprep.subr.mxu0 %v1055
  %1160 = vmatpush1.msra.mxu0 %v1054
  %1161 = vmatprep.subr.mxu0 %v1059
  %1162 = vmatpush1.msra.mxu0 %v1058
  %1163 = vmatprep.subr.mxu0 0.0
  %1164 = vmatpush1.msra.mxu0 0.0
  %1165 = vmatprep.subr.mxu0 0.0
  %1166 = vmatpush1.msra.mxu0 0.0
  %1167 = vmatprep.subr.mxu0 0.0
  %1168 = vmatpush1.msra.mxu0 0.0
  %1169 = vmatprep.subr.mxu0 0.0
  %1170 = vmatpush1.msra.mxu0 0.0
  %1171 = vmatprep.subr.mxu0 0.0
  %1172 = vmatpush1.msra.mxu0 0.0
  %1173 = vmatprep.subr.mxu0 0.0
  %1174 = vmatpush1.msra.mxu0 0.0
  %1175 = vmatprep.subr.mxu0 0.0
  %1176 = vmatpush1.msra.mxu0 0.0
  %1177 = vmatprep.subr.mxu0 0.0
  %1178 = vmatpush1.msra.mxu0 0.0
  %1179 = vmatprep.subr.mxu0 0.0
  %1180 = vmatpush1.msra.mxu0 0.0
  %1181 = vmatprep.subr.mxu0 0.0
  %1182 = vmatpush1.msra.mxu0 0.0
  %1183 = vmatprep.subr.mxu0 0.0
  %1184 = vmatpush1.msra.mxu0 0.0
  %1185 = vmatprep.subr.mxu0 0.0
  %1186 = vmatpush1.msra.mxu0 0.0
  %1187 = vmatprep.subr.mxu0 0.0
  %1188 = vmatpush1.msra.mxu0 0.0
  %1189 = vmatprep.subr.mxu0 0.0
  %1190 = vmatpush1.msra.mxu0 0.0
  %1191 = vmatprep.subr.mxu0 0.0
  %1192 = vmatpush1.msra.mxu0 0.0
  %1193 = vmatprep.subr.mxu0 0.0
  %1194 = vmatpush1.msra.mxu0 0.0
  %1195 = vmatprep.mubr.f32.mxu0 0.0
  %1196 = vmatmul.mubr.f32.gmra.mrb[0].mxu0 %v988
  %v1197 = vpop.f32.mrb[0].mxu0
  %v1198 = vadd.f32 0.0, %v1197
  %v1199 = vpop.f32.mrb[0].mxu0
  %v1200 = vadd.f32 0.0, %v1199
  %1201 = vdwg.mxu0
  %v1202 = vadd.f32 %v992, %v1127
  %v1203 = vadd.f32 %v993, %v1129
  %v1204 = vadd.f32 %v994, %v1198
  %v1205 = vadd.f32 %v995, %v1200
  %v1206 = vxor.u32 %v1202, 2147483648
  %v1207 = vmul.f32 %v1206, 1.442695
  %v1208 = vpow.pop %v1207
  %v1209 = vadd.f32 %v1208, 1.0
  %v1210 = vrcp.pop %v1209
  %v1211 = vmul.f32 1.0, %v1210
  %v1212 = vxor.u32 %v1203, 2147483648
  %v1213 = vmul.f32 %v1212, 1.442695
  %v1214 = vpow.pop %v1213
  %v1215 = vadd.f32 %v1214, 1.0
  %v1216 = vrcp.pop %v1215
  %v1217 = vmul.f32 1.0, %v1216
  %v1218 = vtanh.pop %v1204
  %v1219 = vxor.u32 %v1205, 2147483648
  %v1220 = vmul.f32 %v1219, 1.442695
  %v1221 = vpow.pop %v1220
  %v1222 = vadd.f32 %v1221, 1.0
  %v1223 = vrcp.pop %v1222
  %v1224 = vmul.f32 1.0, %v1223
  %v1225 = vmul.f32 %v1217, %v986
  %v1226 = vmul.f32 %v1211, %v1218
  %v1227 = vadd.f32 %v1225, %v1226
  %v1228 = vtanh.pop %v1227
  %v1229 = vmul.f32 %v1224, %v1228
  %s1230 = scalar_lea.vmem %s4, 32
  %1231 = vst [vmem:[%s1230] sm:$0xff] %v1229
  %s1232 = scalar_lea.vmem %s0, 160
  %v1233 = vld [vmem:[%s1232] sm:$0xff]
  %v1234 = vld [vmem:[%s1232 + $0x8] sm:$0xff]
  %v1235 = vld [vmem:[%s1232 + $0x10] sm:$0xff]
  %v1236 = vld [vmem:[%s1232 + $0x18] sm:$0xff]
  %v1237 = vld [vmem:[%s1] sm:$0xff]
  %v1238 = vld [vmem:[%s1 + $0x8] sm:$0xff]
  %v1239 = vld [vmem:[%s1 + $0x10] sm:$0xff]
  %v1240 = vld [vmem:[%s1 + $0x18] sm:$0xff]
  %v1241 = vld [vmem:[%s1 + $0x20] sm:$0xff]
  %v1242 = vld [vmem:[%s1 + $0x28] sm:$0xff]
  %v1243 = vld [vmem:[%s1 + $0x30] sm:$0xff]
  %v1244 = vld [vmem:[%s1 + $0x38] sm:$0xff]
  %v1245 = vld [vmem:[%s1 + $0x40] sm:$0xff]
  %v1246 = vld [vmem:[%s1 + $0x48] sm:$0xff]
  %v1247 = vld [vmem:[%s1 + $0x50] sm:$0xff]
  %v1248 = vld [vmem:[%s1 + $0x58] sm:$0xff]
  %v1249 = vld [vmem:[%s1 + $0x60] sm:$0xff]
  %v1250 = vld [vmem:[%s1 + $0x68] sm:$0xff]
  %v1251 = vld [vmem:[%s1 + $0x70] sm:$0xff]
  %v1252 = vld [vmem:[%s1 + $0x78] sm:$0xff]
  %v1253 = vld [vmem:[%s1 + $0x80] sm:$0xff]
  %v1254 = vld [vmem:[%s1 + $0x88] sm:$0xff]
  %v1255 = vld [vmem:[%s1 + $0x90] sm:$0xff]
  %v1256 = vld [vmem:[%s1 + $0x98] sm:$0xff]
  %v1257 = vld [vmem:[%s1 + $0xa0] sm:$0xff]
  %v1258 = vld [vmem:[%s1 + $0xa8] sm:$0xff]
  %v1259 = vld [vmem:[%s1 + $0xb0] sm:$0xff]
  %v1260 = vld [vmem:[%s1 + $0xb8] sm:$0xff]
  %v1261 = vld [vmem:[%s1 + $0xc0] sm:$0xff]
  %v1262 = vld [vmem:[%s1 + $0xc8] sm:$0xff]
  %v1263 = vld [vmem:[%s1 + $0xd0] sm:$0xff]
  %v1264 = vld [vmem:[%s1 + $0xd8] sm:$0xff]
  %v1265 = vld [vmem:[%s1 + $0xe0] sm:$0xff]
  %v1266 = vld [vmem:[%s1 + $0xe8] sm:$0xff]
  %v1267 = vld [vmem:[%s1 + $0xf0] sm:$0xff]
  %v1268 = vld [vmem:[%s1 + $0xf8] sm:$0xff]
  %v1269 = vld [vmem:[%s1 + $0x100] sm:$0xff]
  %v1270 = vld [vmem:[%s1 + $0x108] sm:$0xff]
  %v1271 = vld [vmem:[%s1 + $0x110] sm:$0xff]
  %v1272 = vld [vmem:[%s1 + $0x118] sm:$0xff]
  %v1273 = vld [vmem:[%s1 + $0x120] sm:$0xff]
  %v1274 = vld [vmem:[%s1 + $0x128] sm:$0xff]
  %v1275 = vld [vmem:[%s1 + $0x130] sm:$0xff]
  %v1276 = vld [vmem:[%s1 + $0x138] sm:$0xff]
  %v1277 = vld [vmem:[%s1 + $0x140] sm:$0xff]
  %v1278 = vld [vmem:[%s1 + $0x148] sm:$0xff]
  %v1279 = vld [vmem:[%s1 + $0x150] sm:$0xff]
  %v1280 = vld [vmem:[%s1 + $0x158] sm:$0xff]
  %v1281 = vld [vmem:[%s1 + $0x160] sm:$0xff]
  %v1282 = vld [vmem:[%s1 + $0x168] sm:$0xff]
  %v1283 = vld [vmem:[%s1 + $0x170] sm:$0xff]
  %v1284 = vld [vmem:[%s1 + $0x178] sm:$0xff]
  %v1285 = vld [vmem:[%s1 + $0x180] sm:$0xff]
  %v1286 = vld [vmem:[%s1 + $0x188] sm:$0xff]
  %v1287 = vld [vmem:[%s1 + $0x190] sm:$0xff]
  %v1288 = vld [vmem:[%s1 + $0x198] sm:$0xff]
  %v1289 = vld [vmem:[%s1 + $0x1a0] sm:$0xff]
  %v1290 = vld [vmem:[%s1 + $0x1a8] sm:$0xff]
  %v1291 = vld [vmem:[%s1 + $0x1b0] sm:$0xff]
  %v1292 = vld [vmem:[%s1 + $0x1b8] sm:$0xff]
  %v1293 = vld [vmem:[%s1 + $0x1c0] sm:$0xff]
  %v1294 = vld [vmem:[%s1 + $0x1c8] sm:$0xff]
  %v1295 = vld [vmem:[%s1 + $0x1d0] sm:$0xff]
  %v1296 = vld [vmem:[%s1 + $0x1d8] sm:$0xff]
  %v1297 = vld [vmem:[%s1 + $0x1e0] sm:$0xff]
  %v1298 = vld [vmem:[%s1 + $0x1e8] sm:$0xff]
  %v1299 = vld [vmem:[%s1 + $0x1f0] sm:$0xff]
  %v1300 = vld [vmem:[%s1 + $0x1f8] sm:$0xff]
  %1301 = vmatprep.subr.mxu0 %v1238
  %1302 = vmatpush1.msra.mxu0 %v1237
  %1303 = vmatprep.subr.mxu0 %v1242
  %1304 = vmatpush1.msra.mxu0 %v1241
  %1305 = vmatprep.subr.mxu0 %v1246
  %1306 = vmatpush1.msra.mxu0 %v1245
  %1307 = vmatprep.subr.mxu0 %v1250
  %1308 = vmatpush1.msra.mxu0 %v1249
  %1309 = vmatprep.subr.mxu0 %v1254
  %1310 = vmatpush1.msra.mxu0 %v1253
  %1311 = vmatprep.subr.mxu0 %v1258
  %1312 = vmatpush1.msra.mxu0 %v1257
  %1313 = vmatprep.subr.mxu0 %v1262
  %1314 = vmatpush1.msra.mxu0 %v1261
  %1315 = vmatprep.subr.mxu0 %v1266
  %1316 = vmatpush1.msra.mxu0 %v1265
  %1317 = vmatprep.subr.mxu0 %v1270
  %1318 = vmatpush1.msra.mxu0 %v1269
  %1319 = vmatprep.subr.mxu0 %v1274
  %1320 = vmatpush1.msra.mxu0 %v1273
  %1321 = vmatprep.subr.mxu0 %v1278
  %1322 = vmatpush1.msra.mxu0 %v1277
  %1323 = vmatprep.subr.mxu0 %v1282
  %1324 = vmatpush1.msra.mxu0 %v1281
  %1325 = vmatprep.subr.mxu0 %v1286
  %1326 = vmatpush1.msra.mxu0 %v1285
  %1327 = vmatprep.subr.mxu0 %v1290
  %1328 = vmatpush1.msra.mxu0 %v1289
  %1329 = vmatprep.subr.mxu0 %v1294
  %1330 = vmatpush1.msra.mxu0 %v1293
  %1331 = vmatprep.subr.mxu0 %v1298
  %1332 = vmatpush1.msra.mxu0 %v1297
  %1333 = vmatprep.subr.mxu0 0.0
  %1334 = vmatpush1.msra.mxu0 0.0
  %1335 = vmatprep.subr.mxu0 0.0
  %1336 = vmatpush1.msra.mxu0 0.0
  %1337 = vmatprep.subr.mxu0 0.0
  %1338 = vmatpush1.msra.mxu0 0.0
  %1339 = vmatprep.subr.mxu0 0.0
  %1340 = vmatpush1.msra.mxu0 0.0
  %1341 = vmatprep.subr.mxu0 0.0
  %1342 = vmatpush1.msra.mxu0 0.0
  %1343 = vmatprep.subr.mxu0 0.0
  %1344 = vmatpush1.msra.mxu0 0.0
  %1345 = vmatprep.subr.mxu0 0.0
  %1346 = vmatpush1.msra.mxu0 0.0
  %1347 = vmatprep.subr.mxu0 0.0
  %1348 = vmatpush1.msra.mxu0 0.0
  %1349 = vmatprep.subr.mxu0 0.0
  %1350 = vmatpush1.msra.mxu0 0.0
  %1351 = vmatprep.subr.mxu0 0.0
  %1352 = vmatpush1.msra.mxu0 0.0
  %1353 = vmatprep.subr.mxu0 0.0
  %1354 = vmatpush1.msra.mxu0 0.0
  %1355 = vmatprep.subr.mxu0 0.0
  %1356 = vmatpush1.msra.mxu0 0.0
  %1357 = vmatprep.subr.mxu0 0.0
  %1358 = vmatpush1.msra.mxu0 0.0
  %1359 = vmatprep.subr.mxu0 0.0
  %1360 = vmatpush1.msra.mxu0 0.0
  %1361 = vmatprep.subr.mxu0 0.0
  %1362 = vmatpush1.msra.mxu0 0.0
  %1363 = vmatprep.subr.mxu0 0.0
  %1364 = vmatpush1.msra.mxu0 0.0
  %1365 = vmatprep.mubr.f32.mxu0 0.0
  %1366 = vmatmul.mubr.f32.gmra.mrb[0].mxu0 %v1229
  %v1367 = vpop.f32.mrb[0].mxu0
  %v1368 = vadd.f32 0.0, %v1367
  %v1369 = vpop.f32.mrb[0].mxu0
  %v1370 = vadd.f32 0.0, %v1369
  %1371 = vdwg.mxu0
  %1372 = vmatprep.subr.mxu0 %v1240
  %1373 = vmatpush1.msra.mxu0 %v1239
  %1374 = vmatprep.subr.mxu0 %v1244
  %1375 = vmatpush1.msra.mxu0 %v1243
  %1376 = vmatprep.subr.mxu0 %v1248
  %1377 = vmatpush1.msra.mxu0 %v1247
  %1378 = vmatprep.subr.mxu0 %v1252
  %1379 = vmatpush1.msra.mxu0 %v1251
  %1380 = vmatprep.subr.mxu0 %v1256
  %1381 = vmatpush1.msra.mxu0 %v1255
  %1382 = vmatprep.subr.mxu0 %v1260
  %1383 = vmatpush1.msra.mxu0 %v1259
  %1384 = vmatprep.subr.mxu0 %v1264
  %1385 = vmatpush1.msra.mxu0 %v1263
  %1386 = vmatprep.subr.mxu0 %v1268
  %1387 = vmatpush1.msra.mxu0 %v1267
  %1388 = vmatprep.subr.mxu0 %v1272
  %1389 = vmatpush1.msra.mxu0 %v1271
  %1390 = vmatprep.subr.mxu0 %v1276
  %1391 = vmatpush1.msra.mxu0 %v1275
  %1392 = vmatprep.subr.mxu0 %v1280
  %1393 = vmatpush1.msra.mxu0 %v1279
  %1394 = vmatprep.subr.mxu0 %v1284
  %1395 = vmatpush1.msra.mxu0 %v1283
  %1396 = vmatprep.subr.mxu0 %v1288
  %1397 = vmatpush1.msra.mxu0 %v1287
  %1398 = vmatprep.subr.mxu0 %v1292
  %1399 = vmatpush1.msra.mxu0 %v1291
  %1400 = vmatprep.subr.mxu0 %v1296
  %1401 = vmatpush1.msra.mxu0 %v1295
  %1402 = vmatprep.subr.mxu0 %v1300
  %1403 = vmatpush1.msra.mxu0 %v1299
  %1404 = vmatprep.subr.mxu0 0.0
  %1405 = vmatpush1.msra.mxu0 0.0
  %1406 = vmatprep.subr.mxu0 0.0
  %1407 = vmatpush1.msra.mxu0 0.0
  %1408 = vmatprep.subr.mxu0 0.0
  %1409 = vmatpush1.msra.mxu0 0.0
  %1410 = vmatprep.subr.mxu0 0.0
  %1411 = vmatpush1.msra.mxu0 0.0
  %1412 = vmatprep.subr.mxu0 0.0
  %1413 = vmatpush1.msra.mxu0 0.0
  %1414 = vmatprep.subr.mxu0 0.0
  %1415 = vmatpush1.msra.mxu0 0.0
  %1416 = vmatprep.subr.mxu0 0.0
  %1417 = vmatpush1.msra.mxu0 0.0
  %1418 = vmatprep.subr.mxu0 0.0
  %1419 = vmatpush1.msra.mxu0 0.0
  %1420 = vmatprep.subr.mxu0 0.0
  %1421 = vmatpush1.msra.mxu0 0.0
  %1422 = vmatprep.subr.mxu0 0.0
  %1423 = vmatpush1.msra.mxu0 0.0
  %1424 = vmatprep.subr.mxu0 0.0
  %1425 = vmatpush1.msra.mxu0 0.0
  %1426 = vmatprep.subr.mxu0 0.0
  %1427 = vmatpush1.msra.mxu0 0.0
  %1428 = vmatprep.subr.mxu0 0.0
  %1429 = vmatpush1.msra.mxu0 0.0
  %1430 = vmatprep.subr.mxu0 0.0
  %1431 = vmatpush1.msra.mxu0 0.0
  %1432 = vmatprep.subr.mxu0 0.0
  %1433 = vmatpush1.msra.mxu0 0.0
  %1434 = vmatprep.subr.mxu0 0.0
  %1435 = vmatpush1.msra.mxu0 0.0
  %1436 = vmatprep.mubr.f32.mxu0 0.0
  %1437 = vmatmul.mubr.f32.gmra.mrb[0].mxu0 %v1229
  %v1438 = vpop.f32.mrb[0].mxu0
  %v1439 = vadd.f32 0.0, %v1438
  %v1440 = vpop.f32.mrb[0].mxu0
  %v1441 = vadd.f32 0.0, %v1440
  %1442 = vdwg.mxu0
  %v1443 = vadd.f32 %v1233, %v1368
  %v1444 = vadd.f32 %v1234, %v1370
  %v1445 = vadd.f32 %v1235, %v1439
  %v1446 = vadd.f32 %v1236, %v1441
  %v1447 = vxor.u32 %v1443, 2147483648
  %v1448 = vmul.f32 %v1447, 1.442695
  %v1449 = vpow.pop %v1448
  %v1450 = vadd.f32 %v1449, 1.0
  %v1451 = vrcp.pop %v1450
  %v1452 = vmul.f32 1.0, %v1451
  %v1453 = vxor.u32 %v1444, 2147483648
  %v1454 = vmul.f32 %v1453, 1.442695
  %v1455 = vpow.pop %v1454
  %v1456 = vadd.f32 %v1455, 1.0
  %v1457 = vrcp.pop %v1456
  %v1458 = vmul.f32 1.0, %v1457
  %v1459 = vtanh.pop %v1445
  %v1460 = vxor.u32 %v1446, 2147483648
  %v1461 = vmul.f32 %v1460, 1.442695
  %v1462 = vpow.pop %v1461
  %v1463 = vadd.f32 %v1462, 1.0
  %v1464 = vrcp.pop %v1463
  %v1465 = vmul.f32 1.0, %v1464
  %v1466 = vmul.f32 %v1458, %v1227
  %v1467 = vmul.f32 %v1452, %v1459
  %v1468 = vadd.f32 %v1466, %v1467
  %v1469 = vtanh.pop %v1468
  %v1470 = vmul.f32 %v1465, %v1469
  %s1471 = scalar_lea.vmem %s4, 40
  %1472 = vst [vmem:[%s1471] sm:$0xff] %v1470
  %s1473 = scalar_lea.vmem %s0, 192
  %v1474 = vld [vmem:[%s1473] sm:$0xff]
  %v1475 = vld [vmem:[%s1473 + $0x8] sm:$0xff]
  %v1476 = vld [vmem:[%s1473 + $0x10] sm:$0xff]
  %v1477 = vld [vmem:[%s1473 + $0x18] sm:$0xff]
  %v1478 = vld [vmem:[%s1] sm:$0xff]
  %v1479 = vld [vmem:[%s1 + $0x8] sm:$0xff]
  %v1480 = vld [vmem:[%s1 + $0x10] sm:$0xff]
  %v1481 = vld [vmem:[%s1 + $0x18] sm:$0xff]
  %v1482 = vld [vmem:[%s1 + $0x20] sm:$0xff]
  %v1483 = vld [vmem:[%s1 + $0x28] sm:$0xff]
  %v1484 = vld [vmem:[%s1 + $0x30] sm:$0xff]
  %v1485 = vld [vmem:[%s1 + $0x38] sm:$0xff]
  %v1486 = vld [vmem:[%s1 + $0x40] sm:$0xff]
  %v1487 = vld [vmem:[%s1 + $0x48] sm:$0xff]
  %v1488 = vld [vmem:[%s1 + $0x50] sm:$0xff]
  %v1489 = vld [vmem:[%s1 + $0x58] sm:$0xff]
  %v1490 = vld [vmem:[%s1 + $0x60] sm:$0xff]
  %v1491 = vld [vmem:[%s1 + $0x68] sm:$0xff]
  %v1492 = vld [vmem:[%s1 + $0x70] sm:$0xff]
  %v1493 = vld [vmem:[%s1 + $0x78] sm:$0xff]
  %v1494 = vld [vmem:[%s1 + $0x80] sm:$0xff]
  %v1495 = vld [vmem:[%s1 + $0x88] sm:$0xff]
  %v1496 = vld [vmem:[%s1 + $0x90] sm:$0xff]
  %v1497 = vld [vmem:[%s1 + $0x98] sm:$0xff]
  %v1498 = vld [vmem:[%s1 + $0xa0] sm:$0xff]
  %v1499 = vld [vmem:[%s1 + $0xa8] sm:$0xff]
  %v1500 = vld [vmem:[%s1 + $0xb0] sm:$0xff]
  %v1501 = vld [vmem:[%s1 + $0xb8] sm:$0xff]
  %v1502 = vld [vmem:[%s1 + $0xc0] sm:$0xff]
  %v1503 = vld [vmem:[%s1 + $0xc8] sm:$0xff]
  %v1504 = vld [vmem:[%s1 + $0xd0] sm:$0xff]
  %v1505 = vld [vmem:[%s1 + $0xd8] sm:$0xff]
  %v1506 = vld [vmem:[%s1 + $0xe0] sm:$0xff]
  %v1507 = vld [vmem:[%s1 + $0xe8] sm:$0xff]
  %v1508 = vld [vmem:[%s1 + $0xf0] sm:$0xff]
  %v1509 = vld [vmem:[%s1 + $0xf8] sm:$0xff]
  %v1510 = vld [vmem:[%s1 + $0x100] sm:$0xff]
  %v1511 = vld [vmem:[%s1 + $0x108] sm:$0xff]
  %v1512 = vld [vmem:[%s1 + $0x110] sm:$0xff]
  %v1513 = vld [vmem:[%s1 + $0x118] sm:$0xff]
  %v1514 = vld [vmem:[%s1 + $0x120] sm:$0xff]
  %v1515 = vld [vmem:[%s1 + $0x128] sm:$0xff]
  %v1516 = vld [vmem:[%s1 + $0x130] sm:$0xff]
  %v1517 = vld [vmem:[%s1 + $0x138] sm:$0xff]
  %v1518 = vld [vmem:[%s1 + $0x140] sm:$0xff]
  %v1519 = vld [vmem:[%s1 + $0x148] sm:$0xff]
  %v1520 = vld [vmem:[%s1 + $0x150] sm:$0xff]
  %v1521 = vld [vmem:[%s1 + $0x158] sm:$0xff]
  %v1522 = vld [vmem:[%s1 + $0x160] sm:$0xff]
  %v1523 = vld [vmem:[%s1 + $0x168] sm:$0xff]
  %v1524 = vld [vmem:[%s1 + $0x170] sm:$0xff]
  %v1525 = vld [vmem:[%s1 + $0x178] sm:$0xff]
  %v1526 = vld [vmem:[%s1 + $0x180] sm:$0xff]
  %v1527 = vld [vmem:[%s1 + $0x188] sm:$0xff]
  %v1528 = vld [vmem:[%s1 + $0x190] sm:$0xff]
  %v1529 = vld [vmem:[%s1 + $0x198] sm:$0xff]
  %v1530 = vld [vmem:[%s1 + $0x1a0] sm:$0xff]
  %v1531 = vld [vmem:[%s1 + $0x1a8] sm:$0xff]
  %v1532 = vld [vmem:[%s1 + $0x1b0] sm:$0xff]
  %v1533 = vld [vmem:[%s1 + $0x1b8] sm:$0xff]
  %v1534 = vld [vmem:[%s1 + $0x1c0] sm:$0xff]
  %v1535 = vld [vmem:[%s1 + $0x1c8] sm:$0xff]
  %v1536 = vld [vmem:[%s1 + $0x1d0] sm:$0xff]
  %v1537 = vld [vmem:[%s1 + $0x1d8] sm:$0xff]
  %v1538 = vld [vmem:[%s1 + $0x1e0] sm:$0xff]
  %v1539 = vld [vmem:[%s1 + $0x1e8] sm:$0xff]
  %v1540 = vld [vmem:[%s1 + $0x1f0] sm:$0xff]
  %v1541 = vld [vmem:[%s1 + $0x1f8] sm:$0xff]
  %1542 = vmatprep.subr.mxu0 %v1479
  %1543 = vmatpush1.msra.mxu0 %v1478
  %1544 = vmatprep.subr.mxu0 %v1483
  %1545 = vmatpush1.msra.mxu0 %v1482
  %1546 = vmatprep.subr.mxu0 %v1487
  %1547 = vmatpush1.msra.mxu0 %v1486
  %1548 = vmatprep.subr.mxu0 %v1491
  %1549 = vmatpush1.msra.mxu0 %v1490
  %1550 = vmatprep.subr.mxu0 %v1495
  %1551 = vmatpush1.msra.mxu0 %v1494
  %1552 = vmatprep.subr.mxu0 %v1499
  %1553 = vmatpush1.msra.mxu0 %v1498
  %1554 = vmatprep.subr.mxu0 %v1503
  %1555 = vmatpush1.msra.mxu0 %v1502
  %1556 = vmatprep.subr.mxu0 %v1507
  %1557 = vmatpush1.msra.mxu0 %v1506
  %1558 = vmatprep.subr.mxu0 %v1511
  %1559 = vmatpush1.msra.mxu0 %v1510
  %1560 = vmatprep.subr.mxu0 %v1515
  %1561 = vmatpush1.msra.mxu0 %v1514
  %1562 = vmatprep.subr.mxu0 %v1519
  %1563 = vmatpush1.msra.mxu0 %v1518
  %1564 = vmatprep.subr.mxu0 %v1523
  %1565 = vmatpush1.msra.mxu0 %v1522
  %1566 = vmatprep.subr.mxu0 %v1527
  %1567 = vmatpush1.msra.mxu0 %v1526
  %1568 = vmatprep.subr.mxu0 %v1531
  %1569 = vmatpush1.msra.mxu0 %v1530
  %1570 = vmatprep.subr.mxu0 %v1535
  %1571 = vmatpush1.msra.mxu0 %v1534
  %1572 = vmatprep.subr.mxu0 %v1539
  %1573 = vmatpush1.msra.mxu0 %v1538
  %1574 = vmatprep.subr.mxu0 0.0
  %1575 = vmatpush1.msra.mxu0 0.0
  %1576 = vmatprep.subr.mxu0 0.0
  %1577 = vmatpush1.msra.mxu0 0.0
  %1578 = vmatprep.subr.mxu0 0.0
  %1579 = vmatpush1.msra.mxu0 0.0
  %1580 = vmatprep.subr.mxu0 0.0
  %1581 = vmatpush1.msra.mxu0 0.0
  %1582 = vmatprep.subr.mxu0 0.0
  %1583 = vmatpush1.msra.mxu0 0.0
  %1584 = vmatprep.subr.mxu0 0.0
  %1585 = vmatpush1.msra.mxu0 0.0
  %1586 = vmatprep.subr.mxu0 0.0
  %1587 = vmatpush1.msra.mxu0 0.0
  %1588 = vmatprep.subr.mxu0 0.0
  %1589 = vmatpush1.msra.mxu0 0.0
  %1590 = vmatprep.subr.mxu0 0.0
  %1591 = vmatpush1.msra.mxu0 0.0
  %1592 = vmatprep.subr.mxu0 0.0
  %1593 = vmatpush1.msra.mxu0 0.0
  %1594 = vmatprep.subr.mxu0 0.0
  %1595 = vmatpush1.msra.mxu0 0.0
  %1596 = vmatprep.subr.mxu0 0.0
  %1597 = vmatpush1.msra.mxu0 0.0
  %1598 = vmatprep.subr.mxu0 0.0
  %1599 = vmatpush1.msra.mxu0 0.0
  %1600 = vmatprep.subr.mxu0 0.0
  %1601 = vmatpush1.msra.mxu0 0.0
  %1602 = vmatprep.subr.mxu0 0.0
  %1603 = vmatpush1.msra.mxu0 0.0
  %1604 = vmatprep.subr.mxu0 0.0
  %1605 = vmatpush1.msra.mxu0 0.0
  %1606 = vmatprep.mubr.f32.mxu0 0.0
  %1607 = vmatmul.mubr.f32.gmra.mrb[0].mxu0 %v1470
  %v1608 = vpop.f32.mrb[0].mxu0
  %v1609 = vadd.f32 0.0, %v1608
  %v1610 = vpop.f32.mrb[0].mxu0
  %v1611 = vadd.f32 0.0, %v1610
  %1612 = vdwg.mxu0
  %1613 = vmatprep.subr.mxu0 %v1481
  %1614 = vmatpush1.msra.mxu0 %v1480
  %1615 = vmatprep.subr.mxu0 %v1485
  %1616 = vmatpush1.msra.mxu0 %v1484
  %1617 = vmatprep.subr.mxu0 %v1489
  %1618 = vmatpush1.msra.mxu0 %v1488
  %1619 = vmatprep.subr.mxu0 %v1493
  %1620 = vmatpush1.msra.mxu0 %v1492
  %1621 = vmatprep.subr.mxu0 %v1497
  %1622 = vmatpush1.msra.mxu0 %v1496
  %1623 = vmatprep.subr.mxu0 %v1501
  %1624 = vmatpush1.msra.mxu0 %v1500
  %1625 = vmatprep.subr.mxu0 %v1505
  %1626 = vmatpush1.msra.mxu0 %v1504
  %1627 = vmatprep.subr.mxu0 %v1509
  %1628 = vmatpush1.msra.mxu0 %v1508
  %1629 = vmatprep.subr.mxu0 %v1513
  %1630 = vmatpush1.msra.mxu0 %v1512
  %1631 = vmatprep.subr.mxu0 %v1517
  %1632 = vmatpush1.msra.mxu0 %v1516
  %1633 = vmatprep.subr.mxu0 %v1521
  %1634 = vmatpush1.msra.mxu0 %v1520
  %1635 = vmatprep.subr.mxu0 %v1525
  %1636 = vmatpush1.msra.mxu0 %v1524
  %1637 = vmatprep.subr.mxu0 %v1529
  %1638 = vmatpush1.msra.mxu0 %v1528
  %1639 = vmatprep.subr.mxu0 %v1533
  %1640 = vmatpush1.msra.mxu0 %v1532
  %1641 = vmatprep.subr.mxu0 %v1537
  %1642 = vmatpush1.msra.mxu0 %v1536
  %1643 = vmatprep.subr.mxu0 %v1541
  %1644 = vmatpush1.msra.mxu0 %v1540
  %1645 = vmatprep.subr.mxu0 0.0
  %1646 = vmatpush1.msra.mxu0 0.0
  %1647 = vmatprep.subr.mxu0 0.0
  %1648 = vmatpush1.msra.mxu0 0.0
  %1649 = vmatprep.subr.mxu0 0.0
  %1650 = vmatpush1.msra.mxu0 0.0
  %1651 = vmatprep.subr.mxu0 0.0
  %1652 = vmatpush1.msra.mxu0 0.0
  %1653 = vmatprep.subr.mxu0 0.0
  %1654 = vmatpush1.msra.mxu0 0.0
  %1655 = vmatprep.subr.mxu0 0.0
  %1656 = vmatpush1.msra.mxu0 0.0
  %1657 = vmatprep.subr.mxu0 0.0
  %1658 = vmatpush1.msra.mxu0 0.0
  %1659 = vmatprep.subr.mxu0 0.0
  %1660 = vmatpush1.msra.mxu0 0.0
  %1661 = vmatprep.subr.mxu0 0.0
  %1662 = vmatpush1.msra.mxu0 0.0
  %1663 = vmatprep.subr.mxu0 0.0
  %1664 = vmatpush1.msra.mxu0 0.0
  %1665 = vmatprep.subr.mxu0 0.0
  %1666 = vmatpush1.msra.mxu0 0.0
  %1667 = vmatprep.subr.mxu0 0.0
  %1668 = vmatpush1.msra.mxu0 0.0
  %1669 = vmatprep.subr.mxu0 0.0
  %1670 = vmatpush1.msra.mxu0 0.0
  %1671 = vmatprep.subr.mxu0 0.0
  %1672 = vmatpush1.msra.mxu0 0.0
  %1673 = vmatprep.subr.mxu0 0.0
  %1674 = vmatpush1.msra.mxu0 0.0
  %1675 = vmatprep.subr.mxu0 0.0
  %1676 = vmatpush1.msra.mxu0 0.0
  %1677 = vmatprep.mubr.f32.mxu0 0.0
  %1678 = vmatmul.mubr.f32.gmra.mrb[0].mxu0 %v1470
  %v1679 = vpop.f32.mrb[0].mxu0
  %v1680 = vadd.f32 0.0, %v1679
  %v1681 = vpop.f32.mrb[0].mxu0
  %v1682 = vadd.f32 0.0, %v1681
  %1683 = vdwg.mxu0
  %v1684 = vadd.f32 %v1474, %v1609
  %v1685 = vadd.f32 %v1475, %v1611
  %v1686 = vadd.f32 %v1476, %v1680
  %v1687 = vadd.f32 %v1477, %v1682
  %v1688 = vxor.u32 %v1684, 2147483648
  %v1689 = vmul.f32 %v1688, 1.442695
  %v1690 = vpow.pop %v1689
  %v1691 = vadd.f32 %v1690, 1.0
  %v1692 = vrcp.pop %v1691
  %v1693 = vmul.f32 1.0, %v1692
  %v1694 = vxor.u32 %v1685, 2147483648
  %v1695 = vmul.f32 %v1694, 1.442695
  %v1696 = vpow.pop %v1695
  %v1697 = vadd.f32 %v1696, 1.0
  %v1698 = vrcp.pop %v1697
  %v1699 = vmul.f32 1.0, %v1698
  %v1700 = vtanh.pop %v1686
  %v1701 = vxor.u32 %v1687, 2147483648
  %v1702 = vmul.f32 %v1701, 1.442695
  %v1703 = vpow.pop %v1702
  %v1704 = vadd.f32 %v1703, 1.0
  %v1705 = vrcp.pop %v1704
  %v1706 = vmul.f32 1.0, %v1705
  %v1707 = vmul.f32 %v1699, %v1468
  %v1708 = vmul.f32 %v1693, %v1700
  %v1709 = vadd.f32 %v1707, %v1708
  %v1710 = vtanh.pop %v1709
  %v1711 = vmul.f32 %v1706, %v1710
  %s1712 = scalar_lea.vmem %s4, 48
  %1713 = vst [vmem:[%s1712] sm:$0xff] %v1711
  %s1714 = scalar_lea.vmem %s0, 224
  %v1715 = vld [vmem:[%s1714] sm:$0xff]
  %v1716 = vld [vmem:[%s1714 + $0x8] sm:$0xff]
  %v1717 = vld [vmem:[%s1714 + $0x10] sm:$0xff]
  %v1718 = vld [vmem:[%s1714 + $0x18] sm:$0xff]
  %v1719 = vld [vmem:[%s1] sm:$0xff]
  %v1720 = vld [vmem:[%s1 + $0x8] sm:$0xff]
  %v1721 = vld [vmem:[%s1 + $0x10] sm:$0xff]
  %v1722 = vld [vmem:[%s1 + $0x18] sm:$0xff]
  %v1723 = vld [vmem:[%s1 + $0x20] sm:$0xff]
  %v1724 = vld [vmem:[%s1 + $0x28] sm:$0xff]
  %v1725 = vld [vmem:[%s1 + $0x30] sm:$0xff]
  %v1726 = vld [vmem:[%s1 + $0x38] sm:$0xff]
  %v1727 = vld [vmem:[%s1 + $0x40] sm:$0xff]
  %v1728 = vld [vmem:[%s1 + $0x48] sm:$0xff]
  %v1729 = vld [vmem:[%s1 + $0x50] sm:$0xff]
  %v1730 = vld [vmem:[%s1 + $0x58] sm:$0xff]
  %v1731 = vld [vmem:[%s1 + $0x60] sm:$0xff]
  %v1732 = vld [vmem:[%s1 + $0x68] sm:$0xff]
  %v1733 = vld [vmem:[%s1 + $0x70] sm:$0xff]
  %v1734 = vld [vmem:[%s1 + $0x78] sm:$0xff]
  %v1735 = vld [vmem:[%s1 + $0x80] sm:$0xff]
  %v1736 = vld [vmem:[%s1 + $0x88] sm:$0xff]
  %v1737 = vld [vmem:[%s1 + $0x90] sm:$0xff]
  %v1738 = vld [vmem:[%s1 + $0x98] sm:$0xff]
  %v1739 = vld [vmem:[%s1 + $0xa0] sm:$0xff]
  %v1740 = vld [vmem:[%s1 + $0xa8] sm:$0xff]
  %v1741 = vld [vmem:[%s1 + $0xb0] sm:$0xff]
  %v1742 = vld [vmem:[%s1 + $0xb8] sm:$0xff]
  %v1743 = vld [vmem:[%s1 + $0xc0] sm:$0xff]
  %v1744 = vld [vmem:[%s1 + $0xc8] sm:$0xff]
  %v1745 = vld [vmem:[%s1 + $0xd0] sm:$0xff]
  %v1746 = vld [vmem:[%s1 + $0xd8] sm:$0xff]
  %v1747 = vld [vmem:[%s1 + $0xe0] sm:$0xff]
  %v1748 = vld [vmem:[%s1 + $0xe8] sm:$0xff]
  %v1749 = vld [vmem:[%s1 + $0xf0] sm:$0xff]
  %v1750 = vld [vmem:[%s1 + $0xf8] sm:$0xff]
  %v1751 = vld [vmem:[%s1 + $0x100] sm:$0xff]
  %v1752 = vld [vmem:[%s1 + $0x108] sm:$0xff]
  %v1753 = vld [vmem:[%s1 + $0x110] sm:$0xff]
  %v1754 = vld [vmem:[%s1 + $0x118] sm:$0xff]
  %v1755 = vld [vmem:[%s1 + $0x120] sm:$0xff]
  %v1756 = vld [vmem:[%s1 + $0x128] sm:$0xff]
  %v1757 = vld [vmem:[%s1 + $0x130] sm:$0xff]
  %v1758 = vld [vmem:[%s1 + $0x138] sm:$0xff]
  %v1759 = vld [vmem:[%s1 + $0x140] sm:$0xff]
  %v1760 = vld [vmem:[%s1 + $0x148] sm:$0xff]
  %v1761 = vld [vmem:[%s1 + $0x150] sm:$0xff]
  %v1762 = vld [vmem:[%s1 + $0x158] sm:$0xff]
  %v1763 = vld [vmem:[%s1 + $0x160] sm:$0xff]
  %v1764 = vld [vmem:[%s1 + $0x168] sm:$0xff]
  %v1765 = vld [vmem:[%s1 + $0x170] sm:$0xff]
  %v1766 = vld [vmem:[%s1 + $0x178] sm:$0xff]
  %v1767 = vld [vmem:[%s1 + $0x180] sm:$0xff]
  %v1768 = vld [vmem:[%s1 + $0x188] sm:$0xff]
  %v1769 = vld [vmem:[%s1 + $0x190] sm:$0xff]
  %v1770 = vld [vmem:[%s1 + $0x198] sm:$0xff]
  %v1771 = vld [vmem:[%s1 + $0x1a0] sm:$0xff]
  %v1772 = vld [vmem:[%s1 + $0x1a8] sm:$0xff]
  %v1773 = vld [vmem:[%s1 + $0x1b0] sm:$0xff]
  %v1774 = vld [vmem:[%s1 + $0x1b8] sm:$0xff]
  %v1775 = vld [vmem:[%s1 + $0x1c0] sm:$0xff]
  %v1776 = vld [vmem:[%s1 + $0x1c8] sm:$0xff]
  %v1777 = vld [vmem:[%s1 + $0x1d0] sm:$0xff]
  %v1778 = vld [vmem:[%s1 + $0x1d8] sm:$0xff]
  %v1779 = vld [vmem:[%s1 + $0x1e0] sm:$0xff]
  %v1780 = vld [vmem:[%s1 + $0x1e8] sm:$0xff]
  %v1781 = vld [vmem:[%s1 + $0x1f0] sm:$0xff]
  %v1782 = vld [vmem:[%s1 + $0x1f8] sm:$0xff]
  %1783 = vmatprep.subr.mxu0 %v1720
  %1784 = vmatpush1.msra.mxu0 %v1719
  %1785 = vmatprep.subr.mxu0 %v1724
  %1786 = vmatpush1.msra.mxu0 %v1723
  %1787 = vmatprep.subr.mxu0 %v1728
  %1788 = vmatpush1.msra.mxu0 %v1727
  %1789 = vmatprep.subr.mxu0 %v1732
  %1790 = vmatpush1.msra.mxu0 %v1731
  %1791 = vmatprep.subr.mxu0 %v1736
  %1792 = vmatpush1.msra.mxu0 %v1735
  %1793 = vmatprep.subr.mxu0 %v1740
  %1794 = vmatpush1.msra.mxu0 %v1739
  %1795 = vmatprep.subr.mxu0 %v1744
  %1796 = vmatpush1.msra.mxu0 %v1743
  %1797 = vmatprep.subr.mxu0 %v1748
  %1798 = vmatpush1.msra.mxu0 %v1747
  %1799 = vmatprep.subr.mxu0 %v1752
  %1800 = vmatpush1.msra.mxu0 %v1751
  %1801 = vmatprep.subr.mxu0 %v1756
  %1802 = vmatpush1.msra.mxu0 %v1755
  %1803 = vmatprep.subr.mxu0 %v1760
  %1804 = vmatpush1.msra.mxu0 %v1759
  %1805 = vmatprep.subr.mxu0 %v1764
  %1806 = vmatpush1.msra.mxu0 %v1763
  %1807 = vmatprep.subr.mxu0 %v1768
  %1808 = vmatpush1.msra.mxu0 %v1767
  %1809 = vmatprep.subr.mxu0 %v1772
  %1810 = vmatpush1.msra.mxu0 %v1771
  %1811 = vmatprep.subr.mxu0 %v1776
  %1812 = vmatpush1.msra.mxu0 %v1775
  %1813 = vmatprep.subr.mxu0 %v1780
  %1814 = vmatpush1.msra.mxu0 %v1779
  %1815 = vmatprep.subr.mxu0 0.0
  %1816 = vmatpush1.msra.mxu0 0.0
  %1817 = vmatprep.subr.mxu0 0.0
  %1818 = vmatpush1.msra.mxu0 0.0
  %1819 = vmatprep.subr.mxu0 0.0
  %1820 = vmatpush1.msra.mxu0 0.0
  %1821 = vmatprep.subr.mxu0 0.0
  %1822 = vmatpush1.msra.mxu0 0.0
  %1823 = vmatprep.subr.mxu0 0.0
  %1824 = vmatpush1.msra.mxu0 0.0
  %1825 = vmatprep.subr.mxu0 0.0
  %1826 = vmatpush1.msra.mxu0 0.0
  %1827 = vmatprep.subr.mxu0 0.0
  %1828 = vmatpush1.msra.mxu0 0.0
  %1829 = vmatprep.subr.mxu0 0.0
  %1830 = vmatpush1.msra.mxu0 0.0
  %1831 = vmatprep.subr.mxu0 0.0
  %1832 = vmatpush1.msra.mxu0 0.0
  %1833 = vmatprep.subr.mxu0 0.0
  %1834 = vmatpush1.msra.mxu0 0.0
  %1835 = vmatprep.subr.mxu0 0.0
  %1836 = vmatpush1.msra.mxu0 0.0
  %1837 = vmatprep.subr.mxu0 0.0
  %1838 = vmatpush1.msra.mxu0 0.0
  %1839 = vmatprep.subr.mxu0 0.0
  %1840 = vmatpush1.msra.mxu0 0.0
  %1841 = vmatprep.subr.mxu0 0.0
  %1842 = vmatpush1.msra.mxu0 0.0
  %1843 = vmatprep.subr.mxu0 0.0
  %1844 = vmatpush1.msra.mxu0 0.0
  %1845 = vmatprep.subr.mxu0 0.0
  %1846 = vmatpush1.msra.mxu0 0.0
  %1847 = vmatprep.mubr.f32.mxu0 0.0
  %1848 = vmatmul.mubr.f32.gmra.mrb[0].mxu0 %v1711
  %v1849 = vpop.f32.mrb[0].mxu0
  %v1850 = vadd.f32 0.0, %v1849
  %v1851 = vpop.f32.mrb[0].mxu0
  %v1852 = vadd.f32 0.0, %v1851
  %1853 = vdwg.mxu0
  %1854 = vmatprep.subr.mxu0 %v1722
  %1855 = vmatpush1.msra.mxu0 %v1721
  %1856 = vmatprep.subr.mxu0 %v1726
  %1857 = vmatpush1.msra.mxu0 %v1725
  %1858 = vmatprep.subr.mxu0 %v1730
  %1859 = vmatpush1.msra.mxu0 %v1729
  %1860 = vmatprep.subr.mxu0 %v1734
  %1861 = vmatpush1.msra.mxu0 %v1733
  %1862 = vmatprep.subr.mxu0 %v1738
  %1863 = vmatpush1.msra.mxu0 %v1737
  %1864 = vmatprep.subr.mxu0 %v1742
  %1865 = vmatpush1.msra.mxu0 %v1741
  %1866 = vmatprep.subr.mxu0 %v1746
  %1867 = vmatpush1.msra.mxu0 %v1745
  %1868 = vmatprep.subr.mxu0 %v1750
  %1869 = vmatpush1.msra.mxu0 %v1749
  %1870 = vmatprep.subr.mxu0 %v1754
  %1871 = vmatpush1.msra.mxu0 %v1753
  %1872 = vmatprep.subr.mxu0 %v1758
  %1873 = vmatpush1.msra.mxu0 %v1757
  %1874 = vmatprep.subr.mxu0 %v1762
  %1875 = vmatpush1.msra.mxu0 %v1761
  %1876 = vmatprep.subr.mxu0 %v1766
  %1877 = vmatpush1.msra.mxu0 %v1765
  %1878 = vmatprep.subr.mxu0 %v1770
  %1879 = vmatpush1.msra.mxu0 %v1769
  %1880 = vmatprep.subr.mxu0 %v1774
  %1881 = vmatpush1.msra.mxu0 %v1773
  %1882 = vmatprep.subr.mxu0 %v1778
  %1883 = vmatpush1.msra.mxu0 %v1777
  %1884 = vmatprep.subr.mxu0 %v1782
  %1885 = vmatpush1.msra.mxu0 %v1781
  %1886 = vmatprep.subr.mxu0 0.0
  %1887 = vmatpush1.msra.mxu0 0.0
  %1888 = vmatprep.subr.mxu0 0.0
  %1889 = vmatpush1.msra.mxu0 0.0
  %1890 = vmatprep.subr.mxu0 0.0
  %1891 = vmatpush1.msra.mxu0 0.0
  %1892 = vmatprep.subr.mxu0 0.0
  %1893 = vmatpush1.msra.mxu0 0.0
  %1894 = vmatprep.subr.mxu0 0.0
  %1895 = vmatpush1.msra.mxu0 0.0
  %1896 = vmatprep.subr.mxu0 0.0
  %1897 = vmatpush1.msra.mxu0 0.0
  %1898 = vmatprep.subr.mxu0 0.0
  %1899 = vmatpush1.msra.mxu0 0.0
  %1900 = vmatprep.subr.mxu0 0.0
  %1901 = vmatpush1.msra.mxu0 0.0
  %1902 = vmatprep.subr.mxu0 0.0
  %1903 = vmatpush1.msra.mxu0 0.0
  %1904 = vmatprep.subr.mxu0 0.0
  %1905 = vmatpush1.msra.mxu0 0.0
  %1906 = vmatprep.subr.mxu0 0.0
  %1907 = vmatpush1.msra.mxu0 0.0
  %1908 = vmatprep.subr.mxu0 0.0
  %1909 = vmatpush1.msra.mxu0 0.0
  %1910 = vmatprep.subr.mxu0 0.0
  %1911 = vmatpush1.msra.mxu0 0.0
  %1912 = vmatprep.subr.mxu0 0.0
  %1913 = vmatpush1.msra.mxu0 0.0
  %1914 = vmatprep.subr.mxu0 0.0
  %1915 = vmatpush1.msra.mxu0 0.0
  %1916 = vmatprep.subr.mxu0 0.0
  %1917 = vmatpush1.msra.mxu0 0.0
  %1918 = vmatprep.mubr.f32.mxu0 0.0
  %1919 = vmatmul.mubr.f32.gmra.mrb[0].mxu0 %v1711
  %v1920 = vpop.f32.mrb[0].mxu0
  %v1921 = vadd.f32 0.0, %v1920
  %v1922 = vpop.f32.mrb[0].mxu0
  %v1923 = vadd.f32 0.0, %v1922
  %1924 = vdwg.mxu0
  %v1925 = vadd.f32 %v1715, %v1850
  %v1926 = vadd.f32 %v1716, %v1852
  %v1927 = vadd.f32 %v1717, %v1921
  %v1928 = vadd.f32 %v1718, %v1923
  %v1929 = vxor.u32 %v1925, 2147483648
  %v1930 = vmul.f32 %v1929, 1.442695
  %v1931 = vpow.pop %v1930
  %v1932 = vadd.f32 %v1931, 1.0
  %v1933 = vrcp.pop %v1932
  %v1934 = vmul.f32 1.0, %v1933
  %v1935 = vxor.u32 %v1926, 2147483648
  %v1936 = vmul.f32 %v1935, 1.442695
  %v1937 = vpow.pop %v1936
  %v1938 = vadd.f32 %v1937, 1.0
  %v1939 = vrcp.pop %v1938
  %v1940 = vmul.f32 1.0, %v1939
  %v1941 = vtanh.pop %v1927
  %v1942 = vxor.u32 %v1928, 2147483648
  %v1943 = vmul.f32 %v1942, 1.442695
  %v1944 = vpow.pop %v1943
  %v1945 = vadd.f32 %v1944, 1.0
  %v1946 = vrcp.pop %v1945
  %v1947 = vmul.f32 1.0, %v1946
  %v1948 = vmul.f32 %v1940, %v1709
  %v1949 = vmul.f32 %v1934, %v1941
  %v1950 = vadd.f32 %v1948, %v1949
  %v1951 = vtanh.pop %v1950
  %v1952 = vmul.f32 %v1947, %v1951
  %s1953 = scalar_lea.vmem %s4, 56
  %1954 = vst [vmem:[%s1953] sm:$0xff] %v1952
  %1955 = vst [vmem:[#allocation2] sm:$0xff] %v1952
  %1956 = vst [vmem:[#allocation3] sm:$0xff] %v1950
  // Predicated region
  $region22: #{lstm_forward.3} parent=0 // pred_check
    %p1957 = pneg %p19
  $region23: #{lstm_forward.3} parent=0 // pred_check_branch
    %1959 = sbr.rel (%p1957) target = $region25
  $region24: #{lstm_forward.3} parent=0 // pred_region
    %1960 = vst [vmem:[%s5] sm:$0xff] %v1950
  $region25: #{lstm_forward.3} parent=0 // pred_fallthru
    _
  // Predicated region
  $region26: #{lstm_forward.3} parent=0 // pred_check
    _
  $region27: #{lstm_forward.3} parent=0 // pred_check_branch
    %1962 = sbr.rel (0) target = $region29
  $region28: #{lstm_forward.3} parent=0 // pred_region
    _
  $region29: #{lstm_forward.3} parent=0 // pred_fallthru
    _
  // Predicated region
  $region30: #{lstm_forward.3} parent=0 // pred_check
    _
  $region31: #{lstm_forward.3} parent=0 // pred_check_branch
    %1964 = sbr.rel (0) target = $region33
  $region32: #{lstm_forward.3} parent=0 // pred_region
    _
  $region33: #{lstm_forward.3} parent=0 // pred_fallthru
    _
  // Predicated region
  $region34: #{lstm_forward.3} parent=0 // pred_check
    _
  $region35: #{lstm_forward.3} parent=0 // pred_check_branch
    %1966 = sbr.rel (0) target = $region37
  $region36: #{lstm_forward.3} parent=0 // pred_region
    _
  $region37: #{lstm_forward.3} parent=0 // pred_fallthru
    _
  // Predicated region
  $region38: #{lstm_forward.3} parent=0 // pred_check
    _
  $region39: #{lstm_forward.3} parent=0 // pred_check_branch
    %1968 = sbr.rel (0) target = $region41
  $region40: #{lstm_forward.3} parent=0 // pred_region
    _
  $region41: #{lstm_forward.3} parent=0 // pred_fallthru
    _

</llo_original>
